<compile_context>
chip_gen: v6e
topology: v6e:2x2x1
jax: 0.10.0
libtpu: 0.0.40
codegen_flags: <defaults>
</compile_context>

<pallas_src>
import math
import functools

import jax
import jax.numpy as jnp
from jax import lax
from jax.experimental import pallas as pl
from jax.experimental.pallas import tpu as pltpu

EPS = 1e-5        # nn.LayerNorm default
NEG_INF = -1e30   # finite "minus infinity" for masking / init


def _ln(x, g, b):
    mean = jnp.mean(x, axis=-1, keepdims=True)
    var = jnp.mean((x - mean) ** 2, axis=-1, keepdims=True)   # biased, like torch
    return (x - mean) * lax.rsqrt(var + EPS) * g + b


# --------------------------- kernel 1: attention ----------------------------

def _attn_kernel(x_ref, topk_ref, ln1g_ref, ln1b_ref,
                 wq_ref, bq_ref, wk_ref, bk_ref, wv_ref, bv_ref,
                 wo_ref, bo_ref,
                 xk_ref, scores_ref, m_out_ref, l_out_ref,
                 kk_sc, acc_sc, m_sc, l_sc,
                 *, heads, d_k, n_actual, tile_n, compute_dtype):
    i = pl.program_id(0)
    n_tiles = pl.num_programs(0)
    cdt = compute_dtype
    scale = 1.0 / math.sqrt(d_k)

    @pl.when(i == 0)
    def _init():
        # K projection of the (raw, un-normed) top-k rows; stays VMEM-resident.
        tk = topk_ref[...].astype(cdt)
        kk_sc[...] = (jnp.dot(tk, wk_ref[...],
                              preferred_element_type=jnp.float32)
                      + bk_ref[...]).astype(kk_sc.dtype)
        acc_sc[...] = jnp.zeros_like(acc_sc)
        m_sc[...] = jnp.full_like(m_sc, NEG_INF)
        l_sc[...] = jnp.zeros_like(l_sc)

    # LayerNorm in f32, projections on the MXU with f32 accumulation.
    xt = x_ref[...].astype(jnp.float32)
    xn = _ln(xt, ln1g_ref[...], ln1b_ref[...]).astype(cdt)
    q = jnp.dot(xn, wq_ref[...], preferred_element_type=jnp.float32) + bq_ref[...]
    v = jnp.dot(xn, wv_ref[...], preferred_element_type=jnp.float32) + bv_ref[...]
    q = (q * scale).astype(cdt)       # fold 1/sqrt(d_k) into Q once
    v = v.astype(cdt)

    if n_actual % tile_n != 0:        # static: only the padded case pays for a mask
        col = i * tile_n + lax.broadcasted_iota(jnp.int32, (1, tile_n), 1)
        col_valid = col < n_actual
    else:
        col_valid = None

    kk = kk_sc[...]
    for h in range(heads):            # static unrolled loop, heads is small
        sl = slice(h * d_k, (h + 1) * d_k)
        kh = kk[:, sl]                                     # (k_top, d_k)
        qh = q[:, sl]                                      # (tile_n, d_k)
        vh = v[:, sl]                                      # (tile_n, d_k)
        # scores = K Q^T (contract d_k) -> (k_top, tile_n), lane-dense in N.
        s = lax.dot_general(kh, qh, (((1,), (1,)), ((), ())),
                            preferred_element_type=jnp.float32)
        if col_valid is not None:
            s = jnp.where(col_valid, s, NEG_INF)
        scores_ref[h] = s             # raw scaled scores; normalized in kernel 2

        # online softmax over the tiled N axis
        m_prev = m_sc[h]                                   # (k_top, 1)
        m_new = jnp.maximum(m_prev, jnp.max(s, axis=-1, keepdims=True))
        alpha = jnp.exp(m_prev - m_new)
        p = jnp.exp(s - m_new)
        l_sc[h] = alpha * l_sc[h] + jnp.sum(p, axis=-1, keepdims=True)
        m_sc[h] = m_new
        acc_sc[h] = alpha * acc_sc[h] + jnp.dot(           # (k_top, tile_n)@(tile_n, d_k)
            p.astype(cdt), vh, preferred_element_type=jnp.float32)

    @pl.when(i == n_tiles - 1)
    def _finalize():
        k_top, D = xk_ref.shape
        proj = jnp.zeros((k_top, D), jnp.float32)
        for h in range(heads):
            sl = slice(h * d_k, (h + 1) * d_k)
            ctx_h = acc_sc[h] * pl.reciprocal(l_sc[h])     # normalized per-head ctx
            proj = proj + jnp.dot(ctx_h.astype(cdt), wo_ref[sl, :],
                                  preferred_element_type=jnp.float32)
        xk_ref[...] = (topk_ref[...].astype(jnp.float32)
                       + proj + bo_ref[...]).astype(xk_ref.dtype)
        m_out_ref[...] = m_sc[...]
        l_out_ref[...] = l_sc[...]


# ------------------- kernel 2: scatter + FFN + p-normalize -------------------

def _ffn_kernel(x_ref, idx_ref, xk_ref, ln2g_ref, ln2b_ref,
                w1_ref, b1_ref, w2_ref, b2_ref,
                scores_ref, m_ref, l_ref,
                out_ref, p_ref, *, tile_n, compute_dtype):
    i = pl.program_id(0)
    cdt = compute_dtype

    # Fused scatter y = x ; y[top_idx] = x_k, done with a one-hot gather matmul
    # (single small MXU dot, O(k_top)-independent VPU cost).  Indices are
    # unique, so the row-hit indicator `sel` is exactly 0 or 1.
    x = x_ref[...].astype(jnp.float32)
    xk = xk_ref[...].astype(jnp.float32)
    rows = i * tile_n + lax.broadcasted_iota(jnp.int32, (tile_n, 1), 0)
    onehot = (rows == idx_ref[...]).astype(jnp.float32)        # (tile_n, k_top)
    gathered = jnp.dot(onehot, xk, preferred_element_type=jnp.float32)
    sel = jnp.sum(onehot, axis=-1, keepdims=True)              # (tile_n, 1) in {0,1}
    y = x * (1.0 - sel) + gathered

    # LN2 + FFN + residual (elementwise math in f32, dots in compute_dtype).
    yn = _ln(y, ln2g_ref[...], ln2b_ref[...]).astype(cdt)
    h1 = jnp.dot(yn, w1_ref[...], preferred_element_type=jnp.float32) + b1_ref[...]
    h1 = jnp.maximum(h1, 0.0)
    ff = jnp.dot(h1.astype(cdt), w2_ref[...],
                 preferred_element_type=jnp.float32) + b2_ref[...]
    out_ref[...] = (y + ff).astype(out_ref.dtype)

    # Cheap second pass: normalize attention probabilities for this N-tile.
    s = scores_ref[...]                                        # (heads, k_top, tile_n)
    p = jnp.exp(s - m_ref[...]) * pl.reciprocal(l_ref[...])
    p_ref[...] = p.astype(p_ref.dtype)


# ----------------------------- EncoderLayer forward --------------------------

def encoder_layer_forward(params, x, c, *, k, heads, random_patch_share=0.0,
                          block_n=256, compute_dtype=jnp.float32):
    """x: (1, N, D)  c: (1, N, 1)  -> (out (1,N,D), attn (1,heads,k_top,N))."""
    B, N, D = x.shape
    assert B == 1, "snuffy EncoderLayer indexing assumes batch size 1"
    assert D % heads == 0
    d_k = D // heads
    k_top = math.ceil(k * (1.0 - random_patch_share))
    # TODO(synk): random_patch_share > 0 uses host-side np.random.choice; only 0 supported.

    # top-k selection: O(N log N) sort + O(k_top*D) gather (cheap); the expensive
    # O(N*D) scatter is fused into kernel 2 instead.
    order = jnp.argsort(-c[0, :, 0])
    top_idx = order[:k_top].astype(jnp.int32)
    x2d = x[0]
    top_k = x2d[top_idx]                                   # (k_top, D)
    idx_row = top_idx.reshape(1, k_top)                    # lane-dense index vector

    # N tiling: full block when it fits, else 128-aligned tiles (pad + mask).
    if N <= block_n:
        tile_n, n_pad = N, N
    else:
        assert block_n % 128 == 0, "block_n must be a multiple of 128"
        tile_n = block_n
        n_pad = ((N + tile_n - 1) // tile_n) * tile_n
    n_tiles = n_pad // tile_n
    x_pad = x2d if n_pad == N else jnp.pad(x2d, ((0, n_pad - N), (0, 0)))

    f32 = jnp.float32
    cdt = compute_dtype
    dff = params['w1'].shape[1]
    rowp = lambda a: a.reshape(1, -1).astype(f32)          # biases / LN params as f32 rows
    wmat = lambda a: a.astype(cdt)                         # matmul weights in compute dtype

    # ---- kernel 1: LN1 + Q/K/V projections + online-softmax attention + out-proj
    whole2 = lambda shp: pl.BlockSpec(shp, lambda i: (0, 0))
    attn_kern = functools.partial(_attn_kernel, heads=heads, d_k=d_k,
                                  n_actual=N, tile_n=tile_n, compute_dtype=cdt)
    x_k, scores, m, l = pl.pallas_call(
        attn_kern,
        out_shape=(jax.ShapeDtypeStruct((k_top, D), f32),
                   jax.ShapeDtypeStruct((heads, k_top, n_pad), f32),
                   jax.ShapeDtypeStruct((heads, k_top, 1), f32),
                   jax.ShapeDtypeStruct((heads, k_top, 1), f32)),
        grid_spec=pltpu.PrefetchScalarGridSpec(
            num_scalar_prefetch=0,
            grid=(n_tiles,),
            in_specs=[
                pl.BlockSpec((tile_n, D), lambda i: (i, 0)),   # x tile
                whole2((k_top, D)),                            # top_k (VMEM-resident)
                whole2((1, D)), whole2((1, D)),                # ln1 gamma / beta
                whole2((D, D)), whole2((1, D)),                # wq, bq
                whole2((D, D)), whole2((1, D)),                # wk, bk
                whole2((D, D)), whole2((1, D)),                # wv, bv
                whole2((D, D)), whole2((1, D)),                # wo, bo
            ],
            out_specs=[
                pl.BlockSpec((k_top, D), lambda i: (0, 0)),                  # x_k
                pl.BlockSpec((heads, k_top, tile_n), lambda i: (0, 0, i)),   # raw scores
                pl.BlockSpec((heads, k_top, 1), lambda i: (0, 0, 0)),        # running max
                pl.BlockSpec((heads, k_top, 1), lambda i: (0, 0, 0)),        # running sum
            ],
            scratch_shapes=[
                pltpu.VMEM((k_top, D), cdt),            # K projection
                pltpu.VMEM((heads, k_top, d_k), f32),   # ctx accumulator
                pltpu.VMEM((heads, k_top, 1), f32),     # m
                pltpu.VMEM((heads, k_top, 1), f32),     # l
            ]),
        compiler_params=pltpu.CompilerParams(
            dimension_semantics=("arbitrary",)),   # softmax/ctx reduce over N tiles
    )(x_pad, top_k,
      rowp(params['ln1_g']), rowp(params['ln1_b']),
      wmat(params['wq']), rowp(params['bq']),
      wmat(params['wk']), rowp(params['bk']),
      wmat(params['wv']), rowp(params['bv']),
      wmat(params['wo']), rowp(params['bo']))

    # ---- kernel 2: scatter(x_k) + LN2 + FFN + residual + softmax normalize ----
    ffn_kern = functools.partial(_ffn_kernel, tile_n=tile_n, compute_dtype=cdt)
    out_pad, p_pad = pl.pallas_call(
        ffn_kern,
        out_shape=(jax.ShapeDtypeStruct((n_pad, D), x.dtype),
                   jax.ShapeDtypeStruct((heads, k_top, n_pad), f32)),
        grid_spec=pltpu.PrefetchScalarGridSpec(
            num_scalar_prefetch=0,
            grid=(n_tiles,),
            in_specs=[
                pl.BlockSpec((tile_n, D), lambda i: (i, 0)),                 # x tile
                whole2((1, k_top)),                                          # top_idx row
                whole2((k_top, D)),                                          # x_k
                whole2((1, D)), whole2((1, D)),                              # ln2 g/b
                whole2((D, dff)), whole2((1, dff)),                          # w1, b1
                whole2((dff, D)), whole2((1, D)),                            # w2, b2
                pl.BlockSpec((heads, k_top, tile_n), lambda i: (0, 0, i)),   # raw scores
                pl.BlockSpec((heads, k_top, 1), lambda i: (0, 0, 0)),        # m
                pl.BlockSpec((heads, k_top, 1), lambda i: (0, 0, 0)),        # l
            ],
            out_specs=[
                pl.BlockSpec((tile_n, D), lambda i: (i, 0)),
                pl.BlockSpec((heads, k_top, tile_n), lambda i: (0, 0, i)),
            ]),
        compiler_params=pltpu.CompilerParams(
            dimension_semantics=("parallel",)),    # rows independent -> megacore
    )(x_pad, idx_row, x_k,
      rowp(params['ln2_g']), rowp(params['ln2_b']),
      wmat(params['w1']), rowp(params['b1']),
      wmat(params['w2']), rowp(params['b2']),
      scores, m, l)

    out = out_pad[:N]
    p = p_pad[:, :, :N]
    return out[None], p[None]


# ----------------------------- pure-JAX reference ----------------------------

def reference_forward(params, x, c, *, k, heads):
    B, N, D = x.shape
    d_k = D // heads
    k_top = math.ceil(k)
    order = jnp.argsort(-c[0, :, 0])
    top_idx = order[:k_top]
    x2d = x[0]
    top_k = x2d[top_idx]

    def ln(z, g, b):
        m = jnp.mean(z, -1, keepdims=True)
        v = jnp.mean((z - m) ** 2, -1, keepdims=True)
        return (z - m) / jnp.sqrt(v + EPS) * g + b

    xn = ln(x2d, params['ln1_g'], params['ln1_b'])
    q = xn @ params['wq'] + params['bq']
    kk = top_k @ params['wk'] + params['bk']
    v = xn @ params['wv'] + params['bv']
    qh = q.reshape(N, heads, d_k).transpose(1, 0, 2)
    kh = kk.reshape(k_top, heads, d_k).transpose(1, 0, 2)
    vh = v.reshape(N, heads, d_k).transpose(1, 0, 2)
    scores = jnp.einsum('hkd,hnd->hkn', kh, qh) / math.sqrt(d_k)
    p = jax.nn.softmax(scores, axis=-1)
    ctx = jnp.einsum('hkn,hnd->hkd', p, vh).transpose(1, 0, 2).reshape(k_top, D)
    x_k = top_k + ctx @ params['wo'] + params['bo']
    y = x2d.at[top_idx].set(x_k)
    yn = ln(y, params['ln2_g'], params['ln2_b'])
    out = y + jnp.maximum(yn @ params['w1'] + params['b1'], 0.0) @ params['w2'] + params['b2']
    return out[None], p[None]


# ----------------------------------- main ------------------------------------

if __name__ == "__main__":
    # Small but multi-tile shapes: N=250 -> padded to 256, two 128-row tiles,
    # exercising the online softmax, padding mask, and fused one-hot scatter.
    N, D, H, DFF, K = 250, 32, 4, 64, 5

    key = jax.random.PRNGKey(0)
    ks = jax.random.split(key, 12)

    def w(kk_, shape):
        return (0.02 * jax.random.normal(kk_, shape)).astype(jnp.float32)

    params = dict(
        ln1_g=jnp.ones((D,), jnp.float32), ln1_b=jnp.zeros((D,), jnp.float32),
        ln2_g=jnp.ones((D,), jnp.float32), ln2_b=jnp.zeros((D,), jnp.float32),
        wq=w(ks[0], (D, D)), bq=jnp.zeros((D,), jnp.float32),
        wk=w(ks[1], (D, D)), bk=jnp.zeros((D,), jnp.float32),
        wv=w(ks[2], (D, D)), bv=jnp.zeros((D,), jnp.float32),
        wo=w(ks[3], (D, D)), bo=jnp.zeros((D,), jnp.float32),
        w1=w(ks[4], (D, DFF)), b1=jnp.zeros((DFF,), jnp.float32),
        w2=w(ks[5], (DFF, D)), b2=jnp.zeros((D,), jnp.float32),
    )

    x = jax.random.normal(ks[6], (1, N, D), jnp.float32)
    c = jax.random.normal(ks[7], (1, N, 1), jnp.float32)

    ref_out, ref_attn = reference_forward(params, x, c, k=K, heads=H)

    # f32 path (tight numerical check against the pure-JAX reference).
    fwd = jax.jit(functools.partial(encoder_layer_forward, k=K, heads=H,
                                    random_patch_share=0.0, block_n=128,
                                    compute_dtype=jnp.float32))
    out, attn = fwd(params, x, c)
    out = jax.block_until_ready(out)
    attn = jax.block_until_ready(attn)

    assert out.shape == (1, N, D) and attn.shape == (1, H, K, N)
    assert jnp.allclose(out, ref_out, atol=5e-4, rtol=5e-4), \
        float(jnp.max(jnp.abs(out - ref_out)))
    assert jnp.allclose(attn, ref_attn, atol=5e-4, rtol=5e-4), \
        float(jnp.max(jnp.abs(attn - ref_attn)))

    # bf16 MXU operands with f32 accumulation (perf mode); looser tolerance.
    fwd_bf16 = jax.jit(functools.partial(encoder_layer_forward, k=K, heads=H,
                                         random_patch_share=0.0, block_n=128,
                                         compute_dtype=jnp.bfloat16))
    out_bf, attn_bf = fwd_bf16(params, x, c)
    out_bf = jax.block_until_ready(out_bf)
    attn_bf = jax.block_until_ready(attn_bf)
    assert jnp.allclose(out_bf, ref_out, atol=5e-2, rtol=5e-2)
    assert jnp.allclose(attn_bf, ref_attn, atol=5e-2, rtol=5e-2)

    print("KERNEL_OK")
</pallas_src>

<mosaic_0001>
module attributes {stable_mosaic.version = 11 : i64} {
  func.func @_attn_kernel(%arg0: i32, %arg1: memref<128x32xf32, #tpu.memory_space<vmem>>, %arg2: memref<5x32xf32, #tpu.memory_space<vmem>>, %arg3: memref<1x32xf32, #tpu.memory_space<vmem>>, %arg4: memref<1x32xf32, #tpu.memory_space<vmem>>, %arg5: memref<32x32xf32, #tpu.memory_space<vmem>>, %arg6: memref<1x32xf32, #tpu.memory_space<vmem>>, %arg7: memref<32x32xf32, #tpu.memory_space<vmem>>, %arg8: memref<1x32xf32, #tpu.memory_space<vmem>>, %arg9: memref<32x32xf32, #tpu.memory_space<vmem>>, %arg10: memref<1x32xf32, #tpu.memory_space<vmem>>, %arg11: memref<32x32xf32, #tpu.memory_space<vmem>>, %arg12: memref<1x32xf32, #tpu.memory_space<vmem>>, %arg13: memref<5x32xf32, #tpu.memory_space<vmem>>, %arg14: memref<4x5x128xf32, #tpu.memory_space<vmem>>, %arg15: memref<4x5x1xf32, #tpu.memory_space<vmem>>, %arg16: memref<4x5x1xf32, #tpu.memory_space<vmem>>, %arg17: memref<5x32xf32, #tpu.memory_space<vmem>>, %arg18: memref<4x5x8xf32, #tpu.memory_space<vmem>>, %arg19: memref<4x5x1xf32, #tpu.memory_space<vmem>>, %arg20: memref<4x5x1xf32, #tpu.memory_space<vmem>>) attributes {dimension_semantics = [#tpu.dimension_semantics<arbitrary>], iteration_bounds = array<i64: 2>, scalar_prefetch = 0 : i64, scratch_operands = 4 : i64, tpu.core_type = #tpu.core_type<tc>, window_params = [{transform_indices = @transform_0, window_bounds = array<i64: 128, 32>}, {pipeline_mode = #tpu.pipeline_mode<synchronous>, transform_indices = @transform_1, window_bounds = array<i64: 5, 32>}, {pipeline_mode = #tpu.pipeline_mode<synchronous>, transform_indices = @transform_2, window_bounds = array<i64: 1, 32>}, {pipeline_mode = #tpu.pipeline_mode<synchronous>, transform_indices = @transform_3, window_bounds = array<i64: 1, 32>}, {pipeline_mode = #tpu.pipeline_mode<synchronous>, transform_indices = @transform_4, window_bounds = array<i64: 32, 32>}, {pipeline_mode = #tpu.pipeline_mode<synchronous>, transform_indices = @transform_5, window_bounds = array<i64: 1, 32>}, {pipeline_mode = #tpu.pipeline_mode<synchronous>, transform_indices = @transform_6, window_bounds = array<i64: 32, 32>}, {pipeline_mode = #tpu.pipeline_mode<synchronous>, transform_indices = @transform_7, window_bounds = array<i64: 1, 32>}, {pipeline_mode = #tpu.pipeline_mode<synchronous>, transform_indices = @transform_8, window_bounds = array<i64: 32, 32>}, {pipeline_mode = #tpu.pipeline_mode<synchronous>, transform_indices = @transform_9, window_bounds = array<i64: 1, 32>}, {pipeline_mode = #tpu.pipeline_mode<synchronous>, transform_indices = @transform_10, window_bounds = array<i64: 32, 32>}, {pipeline_mode = #tpu.pipeline_mode<synchronous>, transform_indices = @transform_11, window_bounds = array<i64: 1, 32>}, {pipeline_mode = #tpu.pipeline_mode<synchronous>, transform_indices = @transform_12, window_bounds = array<i64: 5, 32>}, {transform_indices = @transform_13, window_bounds = array<i64: 4, 5, 128>}, {pipeline_mode = #tpu.pipeline_mode<synchronous>, transform_indices = @transform_14, window_bounds = array<i64: 4, 5, 1>}, {pipeline_mode = #tpu.pipeline_mode<synchronous>, transform_indices = @transform_15, window_bounds = array<i64: 4, 5, 1>}]} {
    %c0_i32 = arith.constant 0 : i32
    %0 = arith.cmpi eq, %arg0, %c0_i32 : i32
    %1 = arith.extui %0 : i1 to i32
    %c0_i32_0 = arith.constant 0 : i32
    %2 = arith.cmpi ne, %1, %c0_i32_0 : i32
    scf.if %2 {
      %c0_125 = arith.constant 0 : index
      %c0_126 = arith.constant 0 : index
      %218 = vector.load %arg2[%c0_125, %c0_126] : memref<5x32xf32, #tpu.memory_space<vmem>>, vector<5x32xf32>
      %c0_127 = arith.constant 0 : index
      %c0_128 = arith.constant 0 : index
      %219 = vector.load %arg7[%c0_127, %c0_128] : memref<32x32xf32, #tpu.memory_space<vmem>>, vector<32x32xf32>
      %cst_129 = arith.constant dense<0.000000e+00> : vector<5x32xf32>
      %220 = tpu.matmul %218, %219, %cst_129 {dimension_numbers = #tpu.dot_dimension_numbers<[1], [0], [0], [1], [0, 0, 1, 1], [], []>} : vector<5x32xf32>, vector<32x32xf32>, vector<5x32xf32> -> vector<5x32xf32>
      %c0_130 = arith.constant 0 : index
      %c0_131 = arith.constant 0 : index
      %221 = vector.load %arg8[%c0_130, %c0_131] : memref<1x32xf32, #tpu.memory_space<vmem>>, vector<1x32xf32>
      %222 = vector.broadcast %221 : vector<1x32xf32> to vector<5x32xf32>
      %223 = arith.addf %220, %222 : vector<5x32xf32>
      %c0_132 = arith.constant 0 : index
      %c0_133 = arith.constant 0 : index
      %224 = vector.load %arg17[%c0_132, %c0_133] : memref<5x32xf32, #tpu.memory_space<vmem>>, vector<5x32xf32>
      tpu.vector_store %arg17[%c0_132, %c0_133], %223 {strides = array<i32>} : memref<5x32xf32, #tpu.memory_space<vmem>>, vector<5x32xf32>,
      %cst_134 = arith.constant 0.000000e+00 : f32
      %225 = vector.broadcast %cst_134 : f32 to vector<4x5x8xf32>
      %c0_135 = arith.constant 0 : index
      %c0_136 = arith.constant 0 : index
      %c0_137 = arith.constant 0 : index
      %226 = vector.load %arg18[%c0_135, %c0_136, %c0_137] : memref<4x5x8xf32, #tpu.memory_space<vmem>>, vector<4x5x8xf32>
      tpu.vector_store %arg18[%c0_135, %c0_136, %c0_137], %225 {strides = array<i32>} : memref<4x5x8xf32, #tpu.memory_space<vmem>>, vector<4x5x8xf32>,
      %cst_138 = arith.constant -1.000000e+30 : f32
      %227 = vector.broadcast %cst_138 : f32 to vector<4x5x1xf32>
      %c0_139 = arith.constant 0 : index
      %c0_140 = arith.constant 0 : index
      %c0_141 = arith.constant 0 : index
      %228 = vector.load %arg19[%c0_139, %c0_140, %c0_141] : memref<4x5x1xf32, #tpu.memory_space<vmem>>, vector<4x5x1xf32>
      tpu.vector_store %arg19[%c0_139, %c0_140, %c0_141], %227 {strides = array<i32>} : memref<4x5x1xf32, #tpu.memory_space<vmem>>, vector<4x5x1xf32>,
      %cst_142 = arith.constant 0.000000e+00 : f32
      %229 = vector.broadcast %cst_142 : f32 to vector<4x5x1xf32>
      %c0_143 = arith.constant 0 : index
      %c0_144 = arith.constant 0 : index
      %c0_145 = arith.constant 0 : index
      %230 = vector.load %arg20[%c0_143, %c0_144, %c0_145] : memref<4x5x1xf32, #tpu.memory_space<vmem>>, vector<4x5x1xf32>
      tpu.vector_store %arg20[%c0_143, %c0_144, %c0_145], %229 {strides = array<i32>} : memref<4x5x1xf32, #tpu.memory_space<vmem>>, vector<4x5x1xf32>,
    } else {
    }
    %c0 = arith.constant 0 : index
    %c0_1 = arith.constant 0 : index
    %3 = vector.load %arg1[%c0, %c0_1] : memref<128x32xf32, #tpu.memory_space<vmem>>, vector<128x32xf32>
    %c0_2 = arith.constant 0 : index
    %c0_3 = arith.constant 0 : index
    %4 = vector.load %arg3[%c0_2, %c0_3] : memref<1x32xf32, #tpu.memory_space<vmem>>, vector<1x32xf32>
    %c0_4 = arith.constant 0 : index
    %c0_5 = arith.constant 0 : index
    %5 = vector.load %arg4[%c0_4, %c0_5] : memref<1x32xf32, #tpu.memory_space<vmem>>, vector<1x32xf32>
    %cst = arith.constant dense<0.000000e+00> : vector<128xf32>
    %6 = vector.multi_reduction <add>, %3, %cst [1] : vector<128x32xf32> to vector<128xf32>
    %7 = vector.shape_cast %6 : vector<128xf32> to vector<128x1xf32>
    %cst_6 = arith.constant 3.200000e+01 : f32
    %8 = vector.broadcast %cst_6 : f32 to vector<128x1xf32>
    %9 = arith.divf %7, %8 : vector<128x1xf32>
    %10 = vector.broadcast %9 : vector<128x1xf32> to vector<128x32xf32>
    %11 = arith.subf %3, %10 : vector<128x32xf32>
    %12 = arith.mulf %11, %11 : vector<128x32xf32>
    %cst_7 = arith.constant dense<0.000000e+00> : vector<128xf32>
    %13 = vector.multi_reduction <add>, %12, %cst_7 [1] : vector<128x32xf32> to vector<128xf32>
    %14 = vector.shape_cast %13 : vector<128xf32> to vector<128x1xf32>
    %cst_8 = arith.constant 3.200000e+01 : f32
    %15 = vector.broadcast %cst_8 : f32 to vector<128x1xf32>
    %16 = arith.divf %14, %15 : vector<128x1xf32>
    %17 = vector.broadcast %9 : vector<128x1xf32> to vector<128x32xf32>
    %18 = arith.subf %3, %17 : vector<128x32xf32>
    %cst_9 = arith.constant 9.99999974E-6 : f32
    %19 = vector.broadcast %cst_9 : f32 to vector<128x1xf32>
    %20 = arith.addf %16, %19 : vector<128x1xf32>
    %21 = math.rsqrt %20 : vector<128x1xf32>
    %22 = vector.broadcast %21 : vector<128x1xf32> to vector<128x32xf32>
    %23 = arith.mulf %18, %22 : vector<128x32xf32>
    %24 = vector.broadcast %4 : vector<1x32xf32> to vector<128x32xf32>
    %25 = arith.mulf %23, %24 : vector<128x32xf32>
    %26 = vector.broadcast %5 : vector<1x32xf32> to vector<128x32xf32>
    %27 = arith.addf %25, %26 : vector<128x32xf32>
    %c0_10 = arith.constant 0 : index
    %c0_11 = arith.constant 0 : index
    %28 = vector.load %arg5[%c0_10, %c0_11] : memref<32x32xf32, #tpu.memory_space<vmem>>, vector<32x32xf32>
    %cst_12 = arith.constant dense<0.000000e+00> : vector<128x32xf32>
    %29 = tpu.matmul %27, %28, %cst_12 {dimension_numbers = #tpu.dot_dimension_numbers<[1], [0], [0], [1], [0, 0, 1, 1], [], []>} : vector<128x32xf32>, vector<32x32xf32>, vector<128x32xf32> -> vector<128x32xf32>
    %c0_13 = arith.constant 0 : index
    %c0_14 = arith.constant 0 : index
    %30 = vector.load %arg6[%c0_13, %c0_14] : memref<1x32xf32, #tpu.memory_space<vmem>>, vector<1x32xf32>
    %31 = vector.broadcast %30 : vector<1x32xf32> to vector<128x32xf32>
    %32 = arith.addf %29, %31 : vector<128x32xf32>
    %c0_15 = arith.constant 0 : index
    %c0_16 = arith.constant 0 : index
    %33 = vector.load %arg9[%c0_15, %c0_16] : memref<32x32xf32, #tpu.memory_space<vmem>>, vector<32x32xf32>
    %cst_17 = arith.constant dense<0.000000e+00> : vector<128x32xf32>
    %34 = tpu.matmul %27, %33, %cst_17 {dimension_numbers = #tpu.dot_dimension_numbers<[1], [0], [0], [1], [0, 0, 1, 1], [], []>} : vector<128x32xf32>, vector<32x32xf32>, vector<128x32xf32> -> vector<128x32xf32>
    %c0_18 = arith.constant 0 : index
    %c0_19 = arith.constant 0 : index
    %35 = vector.load %arg10[%c0_18, %c0_19] : memref<1x32xf32, #tpu.memory_space<vmem>>, vector<1x32xf32>
    %36 = vector.broadcast %35 : vector<1x32xf32> to vector<128x32xf32>
    %37 = arith.addf %34, %36 : vector<128x32xf32>
    %cst_20 = arith.constant 0.353553385 : f32
    %38 = vector.broadcast %cst_20 : f32 to vector<128x32xf32>
    %39 = arith.mulf %32, %38 : vector<128x32xf32>
    %c128_i32 = arith.constant 128 : i32
    %40 = arith.muli %arg0, %c128_i32 : i32
    %41 = tpu.iota {dimensions = array<i32: 1>} : vector<1x128xi32>
    %42 = vector.broadcast %40 : i32 to vector<1x128xi32>
    %43 = arith.addi %42, %41 : vector<1x128xi32>
    %c250_i32 = arith.constant 250 : i32
    %44 = vector.broadcast %c250_i32 : i32 to vector<1x128xi32>
    %45 = arith.cmpi slt, %43, %44 : vector<1x128xi32>
    %c0_21 = arith.constant 0 : index
    %c0_22 = arith.constant 0 : index
    %46 = vector.load %arg17[%c0_21, %c0_22] : memref<5x32xf32, #tpu.memory_space<vmem>>, vector<5x32xf32>
    %47 = vector.extract_strided_slice %46 {offsets = [0, 0], sizes = [5, 8], strides = [1, 1]} : vector<5x32xf32> to vector<5x8xf32>
    %48 = vector.extract_strided_slice %39 {offsets = [0, 0], sizes = [128, 8], strides = [1, 1]} : vector<128x32xf32> to vector<128x8xf32>
    %49 = vector.extract_strided_slice %37 {offsets = [0, 0], sizes = [128, 8], strides = [1, 1]} : vector<128x32xf32> to vector<128x8xf32>
    %cst_23 = arith.constant dense<0.000000e+00> : vector<5x128xf32>
    %50 = tpu.matmul %47, %48, %cst_23 {dimension_numbers = #tpu.dot_dimension_numbers<[1], [1], [0], [0], [0, 0, 1, 0], [], []>} : vector<5x8xf32>, vector<128x8xf32>, vector<5x128xf32> -> vector<5x128xf32>
    %cst_24 = arith.constant -1.000000e+30 : f32
    %51 = vector.shape_cast %45 : vector<1x128xi1> to vector<1x128xi1>
    %52 = vector.broadcast %51 : vector<1x128xi1> to vector<5x128xi1>
    %53 = vector.broadcast %cst_24 : f32 to vector<5x128xf32>
    %54 = arith.select %52, %50, %53 : vector<5x128xi1>, vector<5x128xf32>
    %c0_25 = arith.constant 0 : index
    %c0_26 = arith.constant 0 : index
    %c0_27 = arith.constant 0 : index
    %55 = vector.load %arg14[%c0_25, %c0_26, %c0_27] : memref<4x5x128xf32, #tpu.memory_space<vmem>>, vector<1x5x128xf32>
    %56 = vector.shape_cast %55 : vector<1x5x128xf32> to vector<5x128xf32>
    %57 = vector.shape_cast %54 : vector<5x128xf32> to vector<1x5x128xf32>
    tpu.vector_store %arg14[%c0_25, %c0_26, %c0_27], %57 {strides = array<i32>} : memref<4x5x128xf32, #tpu.memory_space<vmem>>, vector<1x5x128xf32>,
    %c0_28 = arith.constant 0 : index
    %c0_29 = arith.constant 0 : index
    %c0_30 = arith.constant 0 : index
    %58 = vector.load %arg19[%c0_28, %c0_29, %c0_30] : memref<4x5x1xf32, #tpu.memory_space<vmem>>, vector<1x5x1xf32>
    %59 = vector.shape_cast %58 : vector<1x5x1xf32> to vector<5x1xf32>
    %cst_31 = arith.constant dense<0xFF800000> : vector<5xf32>
    %60 = vector.multi_reduction <maximumf>, %54, %cst_31 [1] : vector<5x128xf32> to vector<5xf32>
    %61 = vector.shape_cast %60 : vector<5xf32> to vector<5x1xf32>
    %62 = arith.maximumf %59, %61 : vector<5x1xf32>
    %63 = arith.subf %59, %62 : vector<5x1xf32>
    %64 = math.exp %63 : vector<5x1xf32>
    %65 = vector.broadcast %62 : vector<5x1xf32> to vector<5x128xf32>
    %66 = arith.subf %54, %65 : vector<5x128xf32>
    %67 = math.exp %66 : vector<5x128xf32>
    %c0_32 = arith.constant 0 : index
    %c0_33 = arith.constant 0 : index
    %c0_34 = arith.constant 0 : index
    %68 = vector.load %arg20[%c0_32, %c0_33, %c0_34] : memref<4x5x1xf32, #tpu.memory_space<vmem>>, vector<1x5x1xf32>
    %69 = vector.shape_cast %68 : vector<1x5x1xf32> to vector<5x1xf32>
    %70 = arith.mulf %64, %69 : vector<5x1xf32>
    %cst_35 = arith.constant dense<0.000000e+00> : vector<5xf32>
    %71 = vector.multi_reduction <add>, %67, %cst_35 [1] : vector<5x128xf32> to vector<5xf32>
    %72 = vector.shape_cast %71 : vector<5xf32> to vector<5x1xf32>
    %73 = arith.addf %70, %72 : vector<5x1xf32>
    %c0_36 = arith.constant 0 : index
    %c0_37 = arith.constant 0 : index
    %c0_38 = arith.constant 0 : index
    %74 = vector.load %arg20[%c0_36, %c0_37, %c0_38] : memref<4x5x1xf32, #tpu.memory_space<vmem>>, vector<1x5x1xf32>
    %75 = vector.shape_cast %74 : vector<1x5x1xf32> to vector<5x1xf32>
    %76 = vector.shape_cast %73 : vector<5x1xf32> to vector<1x5x1xf32>
    tpu.vector_store %arg20[%c0_36, %c0_37, %c0_38], %76 {strides = array<i32>} : memref<4x5x1xf32, #tpu.memory_space<vmem>>, vector<1x5x1xf32>,
    %c0_39 = arith.constant 0 : index
    %c0_40 = arith.constant 0 : index
    %c0_41 = arith.constant 0 : index
    %77 = vector.load %arg19[%c0_39, %c0_40, %c0_41] : memref<4x5x1xf32, #tpu.memory_space<vmem>>, vector<1x5x1xf32>
    %78 = vector.shape_cast %77 : vector<1x5x1xf32> to vector<5x1xf32>
    %79 = vector.shape_cast %62 : vector<5x1xf32> to vector<1x5x1xf32>
    tpu.vector_store %arg19[%c0_39, %c0_40, %c0_41], %79 {strides = array<i32>} : memref<4x5x1xf32, #tpu.memory_space<vmem>>, vector<1x5x1xf32>,
    %c0_42 = arith.constant 0 : index
    %c0_43 = arith.constant 0 : index
    %c0_44 = arith.constant 0 : index
    %80 = vector.load %arg18[%c0_42, %c0_43, %c0_44] : memref<4x5x8xf32, #tpu.memory_space<vmem>>, vector<1x5x8xf32>
    %81 = vector.shape_cast %80 : vector<1x5x8xf32> to vector<5x8xf32>
    %82 = vector.broadcast %64 : vector<5x1xf32> to vector<5x8xf32>
    %83 = arith.mulf %82, %81 : vector<5x8xf32>
    %cst_45 = arith.constant dense<0.000000e+00> : vector<5x8xf32>
    %84 = tpu.matmul %67, %49, %cst_45 {dimension_numbers = #tpu.dot_dimension_numbers<[1], [0], [0], [1], [0, 0, 1, 1], [], []>} : vector<5x128xf32>, vector<128x8xf32>, vector<5x8xf32> -> vector<5x8xf32>
    %85 = arith.addf %83, %84 : vector<5x8xf32>
    %c0_46 = arith.constant 0 : index
    %c0_47 = arith.constant 0 : index
    %c0_48 = arith.constant 0 : index
    %86 = vector.load %arg18[%c0_46, %c0_47, %c0_48] : memref<4x5x8xf32, #tpu.memory_space<vmem>>, vector<1x5x8xf32>
    %87 = vector.shape_cast %86 : vector<1x5x8xf32> to vector<5x8xf32>
    %88 = vector.shape_cast %85 : vector<5x8xf32> to vector<1x5x8xf32>
    tpu.vector_store %arg18[%c0_46, %c0_47, %c0_48], %88 {strides = array<i32>} : memref<4x5x8xf32, #tpu.memory_space<vmem>>, vector<1x5x8xf32>,
    %89 = vector.extract_strided_slice %46 {offsets = [0, 8], sizes = [5, 8], strides = [1, 1]} : vector<5x32xf32> to vector<5x8xf32>
    %90 = vector.extract_strided_slice %39 {offsets = [0, 8], sizes = [128, 8], strides = [1, 1]} : vector<128x32xf32> to vector<128x8xf32>
    %91 = vector.extract_strided_slice %37 {offsets = [0, 8], sizes = [128, 8], strides = [1, 1]} : vector<128x32xf32> to vector<128x8xf32>
    %cst_49 = arith.constant dense<0.000000e+00> : vector<5x128xf32>
    %92 = tpu.matmul %89, %90, %cst_49 {dimension_numbers = #tpu.dot_dimension_numbers<[1], [1], [0], [0], [0, 0, 1, 0], [], []>} : vector<5x8xf32>, vector<128x8xf32>, vector<5x128xf32> -> vector<5x128xf32>
    %cst_50 = arith.constant -1.000000e+30 : f32
    %93 = vector.shape_cast %45 : vector<1x128xi1> to vector<1x128xi1>
    %94 = vector.broadcast %93 : vector<1x128xi1> to vector<5x128xi1>
    %95 = vector.broadcast %cst_50 : f32 to vector<5x128xf32>
    %96 = arith.select %94, %92, %95 : vector<5x128xi1>, vector<5x128xf32>
    %c1 = arith.constant 1 : index
    %c0_51 = arith.constant 0 : index
    %c0_52 = arith.constant 0 : index
    %97 = vector.load %arg14[%c1, %c0_51, %c0_52] : memref<4x5x128xf32, #tpu.memory_space<vmem>>, vector<1x5x128xf32>
    %98 = vector.shape_cast %97 : vector<1x5x128xf32> to vector<5x128xf32>
    %99 = vector.shape_cast %96 : vector<5x128xf32> to vector<1x5x128xf32>
    tpu.vector_store %arg14[%c1, %c0_51, %c0_52], %99 {strides = array<i32>} : memref<4x5x128xf32, #tpu.memory_space<vmem>>, vector<1x5x128xf32>,
    %c1_53 = arith.constant 1 : index
    %c0_54 = arith.constant 0 : index
    %c0_55 = arith.constant 0 : index
    %100 = vector.load %arg19[%c1_53, %c0_54, %c0_55] : memref<4x5x1xf32, #tpu.memory_space<vmem>>, vector<1x5x1xf32>
    %101 = vector.shape_cast %100 : vector<1x5x1xf32> to vector<5x1xf32>
    %cst_56 = arith.constant dense<0xFF800000> : vector<5xf32>
    %102 = vector.multi_reduction <maximumf>, %96, %cst_56 [1] : vector<5x128xf32> to vector<5xf32>
    %103 = vector.shape_cast %102 : vector<5xf32> to vector<5x1xf32>
    %104 = arith.maximumf %101, %103 : vector<5x1xf32>
    %105 = arith.subf %101, %104 : vector<5x1xf32>
    %106 = math.exp %105 : vector<5x1xf32>
    %107 = vector.broadcast %104 : vector<5x1xf32> to vector<5x128xf32>
    %108 = arith.subf %96, %107 : vector<5x128xf32>
    %109 = math.exp %108 : vector<5x128xf32>
    %c1_57 = arith.constant 1 : index
    %c0_58 = arith.constant 0 : index
    %c0_59 = arith.constant 0 : index
    %110 = vector.load %arg20[%c1_57, %c0_58, %c0_59] : memref<4x5x1xf32, #tpu.memory_space<vmem>>, vector<1x5x1xf32>
    %111 = vector.shape_cast %110 : vector<1x5x1xf32> to vector<5x1xf32>
    %112 = arith.mulf %106, %111 : vector<5x1xf32>
    %cst_60 = arith.constant dense<0.000000e+00> : vector<5xf32>
    %113 = vector.multi_reduction <add>, %109, %cst_60 [1] : vector<5x128xf32> to vector<5xf32>
    %114 = vector.shape_cast %113 : vector<5xf32> to vector<5x1xf32>
    %115 = arith.addf %112, %114 : vector<5x1xf32>
    %c1_61 = arith.constant 1 : index
    %c0_62 = arith.constant 0 : index
    %c0_63 = arith.constant 0 : index
    %116 = vector.load %arg20[%c1_61, %c0_62, %c0_63] : memref<4x5x1xf32, #tpu.memory_space<vmem>>, vector<1x5x1xf32>
    %117 = vector.shape_cast %116 : vector<1x5x1xf32> to vector<5x1xf32>
    %118 = vector.shape_cast %115 : vector<5x1xf32> to vector<1x5x1xf32>
    tpu.vector_store %arg20[%c1_61, %c0_62, %c0_63], %118 {strides = array<i32>} : memref<4x5x1xf32, #tpu.memory_space<vmem>>, vector<1x5x1xf32>,
    %c1_64 = arith.constant 1 : index
    %c0_65 = arith.constant 0 : index
    %c0_66 = arith.constant 0 : index
    %119 = vector.load %arg19[%c1_64, %c0_65, %c0_66] : memref<4x5x1xf32, #tpu.memory_space<vmem>>, vector<1x5x1xf32>
    %120 = vector.shape_cast %119 : vector<1x5x1xf32> to vector<5x1xf32>
    %121 = vector.shape_cast %104 : vector<5x1xf32> to vector<1x5x1xf32>
    tpu.vector_store %arg19[%c1_64, %c0_65, %c0_66], %121 {strides = array<i32>} : memref<4x5x1xf32, #tpu.memory_space<vmem>>, vector<1x5x1xf32>,
    %c1_67 = arith.constant 1 : index
    %c0_68 = arith.constant 0 : index
    %c0_69 = arith.constant 0 : index
    %122 = vector.load %arg18[%c1_67, %c0_68, %c0_69] : memref<4x5x8xf32, #tpu.memory_space<vmem>>, vector<1x5x8xf32>
    %123 = vector.shape_cast %122 : vector<1x5x8xf32> to vector<5x8xf32>
    %124 = vector.broadcast %106 : vector<5x1xf32> to vector<5x8xf32>
    %125 = arith.mulf %124, %123 : vector<5x8xf32>
    %cst_70 = arith.constant dense<0.000000e+00> : vector<5x8xf32>
    %126 = tpu.matmul %109, %91, %cst_70 {dimension_numbers = #tpu.dot_dimension_numbers<[1], [0], [0], [1], [0, 0, 1, 1], [], []>} : vector<5x128xf32>, vector<128x8xf32>, vector<5x8xf32> -> vector<5x8xf32>
    %127 = arith.addf %125, %126 : vector<5x8xf32>
    %c1_71 = arith.constant 1 : index
    %c0_72 = arith.constant 0 : index
    %c0_73 = arith.constant 0 : index
    %128 = vector.load %arg18[%c1_71, %c0_72, %c0_73] : memref<4x5x8xf32, #tpu.memory_space<vmem>>, vector<1x5x8xf32>
    %129 = vector.shape_cast %128 : vector<1x5x8xf32> to vector<5x8xf32>
    %130 = vector.shape_cast %127 : vector<5x8xf32> to vector<1x5x8xf32>
    tpu.vector_store %arg18[%c1_71, %c0_72, %c0_73], %130 {strides = array<i32>} : memref<4x5x8xf32, #tpu.memory_space<vmem>>, vector<1x5x8xf32>,
    %131 = vector.extract_strided_slice %46 {offsets = [0, 16], sizes = [5, 8], strides = [1, 1]} : vector<5x32xf32> to vector<5x8xf32>
    %132 = vector.extract_strided_slice %39 {offsets = [0, 16], sizes = [128, 8], strides = [1, 1]} : vector<128x32xf32> to vector<128x8xf32>
    %133 = vector.extract_strided_slice %37 {offsets = [0, 16], sizes = [128, 8], strides = [1, 1]} : vector<128x32xf32> to vector<128x8xf32>
    %cst_74 = arith.constant dense<0.000000e+00> : vector<5x128xf32>
    %134 = tpu.matmul %131, %132, %cst_74 {dimension_numbers = #tpu.dot_dimension_numbers<[1], [1], [0], [0], [0, 0, 1, 0], [], []>} : vector<5x8xf32>, vector<128x8xf32>, vector<5x128xf32> -> vector<5x128xf32>
    %cst_75 = arith.constant -1.000000e+30 : f32
    %135 = vector.shape_cast %45 : vector<1x128xi1> to vector<1x128xi1>
    %136 = vector.broadcast %135 : vector<1x128xi1> to vector<5x128xi1>
    %137 = vector.broadcast %cst_75 : f32 to vector<5x128xf32>
    %138 = arith.select %136, %134, %137 : vector<5x128xi1>, vector<5x128xf32>
    %c2 = arith.constant 2 : index
    %c0_76 = arith.constant 0 : index
    %c0_77 = arith.constant 0 : index
    %139 = vector.load %arg14[%c2, %c0_76, %c0_77] : memref<4x5x128xf32, #tpu.memory_space<vmem>>, vector<1x5x128xf32>
    %140 = vector.shape_cast %139 : vector<1x5x128xf32> to vector<5x128xf32>
    %141 = vector.shape_cast %138 : vector<5x128xf32> to vector<1x5x128xf32>
    tpu.vector_store %arg14[%c2, %c0_76, %c0_77], %141 {strides = array<i32>} : memref<4x5x128xf32, #tpu.memory_space<vmem>>, vector<1x5x128xf32>,
    %c2_78 = arith.constant 2 : index
    %c0_79 = arith.constant 0 : index
    %c0_80 = arith.constant 0 : index
    %142 = vector.load %arg19[%c2_78, %c0_79, %c0_80] : memref<4x5x1xf32, #tpu.memory_space<vmem>>, vector<1x5x1xf32>
    %143 = vector.shape_cast %142 : vector<1x5x1xf32> to vector<5x1xf32>
    %cst_81 = arith.constant dense<0xFF800000> : vector<5xf32>
    %144 = vector.multi_reduction <maximumf>, %138, %cst_81 [1] : vector<5x128xf32> to vector<5xf32>
    %145 = vector.shape_cast %144 : vector<5xf32> to vector<5x1xf32>
    %146 = arith.maximumf %143, %145 : vector<5x1xf32>
    %147 = arith.subf %143, %146 : vector<5x1xf32>
    %148 = math.exp %147 : vector<5x1xf32>
    %149 = vector.broadcast %146 : vector<5x1xf32> to vector<5x128xf32>
    %150 = arith.subf %138, %149 : vector<5x128xf32>
    %151 = math.exp %150 : vector<5x128xf32>
    %c2_82 = arith.constant 2 : index
    %c0_83 = arith.constant 0 : index
    %c0_84 = arith.constant 0 : index
    %152 = vector.load %arg20[%c2_82, %c0_83, %c0_84] : memref<4x5x1xf32, #tpu.memory_space<vmem>>, vector<1x5x1xf32>
    %153 = vector.shape_cast %152 : vector<1x5x1xf32> to vector<5x1xf32>
    %154 = arith.mulf %148, %153 : vector<5x1xf32>
    %cst_85 = arith.constant dense<0.000000e+00> : vector<5xf32>
    %155 = vector.multi_reduction <add>, %151, %cst_85 [1] : vector<5x128xf32> to vector<5xf32>
    %156 = vector.shape_cast %155 : vector<5xf32> to vector<5x1xf32>
    %157 = arith.addf %154, %156 : vector<5x1xf32>
    %c2_86 = arith.constant 2 : index
    %c0_87 = arith.constant 0 : index
    %c0_88 = arith.constant 0 : index
    %158 = vector.load %arg20[%c2_86, %c0_87, %c0_88] : memref<4x5x1xf32, #tpu.memory_space<vmem>>, vector<1x5x1xf32>
    %159 = vector.shape_cast %158 : vector<1x5x1xf32> to vector<5x1xf32>
    %160 = vector.shape_cast %157 : vector<5x1xf32> to vector<1x5x1xf32>
    tpu.vector_store %arg20[%c2_86, %c0_87, %c0_88], %160 {strides = array<i32>} : memref<4x5x1xf32, #tpu.memory_space<vmem>>, vector<1x5x1xf32>,
    %c2_89 = arith.constant 2 : index
    %c0_90 = arith.constant 0 : index
    %c0_91 = arith.constant 0 : index
    %161 = vector.load %arg19[%c2_89, %c0_90, %c0_91] : memref<4x5x1xf32, #tpu.memory_space<vmem>>, vector<1x5x1xf32>
    %162 = vector.shape_cast %161 : vector<1x5x1xf32> to vector<5x1xf32>
    %163 = vector.shape_cast %146 : vector<5x1xf32> to vector<1x5x1xf32>
    tpu.vector_store %arg19[%c2_89, %c0_90, %c0_91], %163 {strides = array<i32>} : memref<4x5x1xf32, #tpu.memory_space<vmem>>, vector<1x5x1xf32>,
    %c2_92 = arith.constant 2 : index
    %c0_93 = arith.constant 0 : index
    %c0_94 = arith.constant 0 : index
    %164 = vector.load %arg18[%c2_92, %c0_93, %c0_94] : memref<4x5x8xf32, #tpu.memory_space<vmem>>, vector<1x5x8xf32>
    %165 = vector.shape_cast %164 : vector<1x5x8xf32> to vector<5x8xf32>
    %166 = vector.broadcast %148 : vector<5x1xf32> to vector<5x8xf32>
    %167 = arith.mulf %166, %165 : vector<5x8xf32>
    %cst_95 = arith.constant dense<0.000000e+00> : vector<5x8xf32>
    %168 = tpu.matmul %151, %133, %cst_95 {dimension_numbers = #tpu.dot_dimension_numbers<[1], [0], [0], [1], [0, 0, 1, 1], [], []>} : vector<5x128xf32>, vector<128x8xf32>, vector<5x8xf32> -> vector<5x8xf32>
    %169 = arith.addf %167, %168 : vector<5x8xf32>
    %c2_96 = arith.constant 2 : index
    %c0_97 = arith.constant 0 : index
    %c0_98 = arith.constant 0 : index
    %170 = vector.load %arg18[%c2_96, %c0_97, %c0_98] : memref<4x5x8xf32, #tpu.memory_space<vmem>>, vector<1x5x8xf32>
    %171 = vector.shape_cast %170 : vector<1x5x8xf32> to vector<5x8xf32>
    %172 = vector.shape_cast %169 : vector<5x8xf32> to vector<1x5x8xf32>
    tpu.vector_store %arg18[%c2_96, %c0_97, %c0_98], %172 {strides = array<i32>} : memref<4x5x8xf32, #tpu.memory_space<vmem>>, vector<1x5x8xf32>,
    %173 = vector.extract_strided_slice %46 {offsets = [0, 24], sizes = [5, 8], strides = [1, 1]} : vector<5x32xf32> to vector<5x8xf32>
    %174 = vector.extract_strided_slice %39 {offsets = [0, 24], sizes = [128, 8], strides = [1, 1]} : vector<128x32xf32> to vector<128x8xf32>
    %175 = vector.extract_strided_slice %37 {offsets = [0, 24], sizes = [128, 8], strides = [1, 1]} : vector<128x32xf32> to vector<128x8xf32>
    %cst_99 = arith.constant dense<0.000000e+00> : vector<5x128xf32>
    %176 = tpu.matmul %173, %174, %cst_99 {dimension_numbers = #tpu.dot_dimension_numbers<[1], [1], [0], [0], [0, 0, 1, 0], [], []>} : vector<5x8xf32>, vector<128x8xf32>, vector<5x128xf32> -> vector<5x128xf32>
    %cst_100 = arith.constant -1.000000e+30 : f32
    %177 = vector.shape_cast %45 : vector<1x128xi1> to vector<1x128xi1>
    %178 = vector.broadcast %177 : vector<1x128xi1> to vector<5x128xi1>
    %179 = vector.broadcast %cst_100 : f32 to vector<5x128xf32>
    %180 = arith.select %178, %176, %179 : vector<5x128xi1>, vector<5x128xf32>
    %c3 = arith.constant 3 : index
    %c0_101 = arith.constant 0 : index
    %c0_102 = arith.constant 0 : index
    %181 = vector.load %arg14[%c3, %c0_101, %c0_102] : memref<4x5x128xf32, #tpu.memory_space<vmem>>, vector<1x5x128xf32>
    %182 = vector.shape_cast %181 : vector<1x5x128xf32> to vector<5x128xf32>
    %183 = vector.shape_cast %180 : vector<5x128xf32> to vector<1x5x128xf32>
    tpu.vector_store %arg14[%c3, %c0_101, %c0_102], %183 {strides = array<i32>} : memref<4x5x128xf32, #tpu.memory_space<vmem>>, vector<1x5x128xf32>,
    %c3_103 = arith.constant 3 : index
    %c0_104 = arith.constant 0 : index
    %c0_105 = arith.constant 0 : index
    %184 = vector.load %arg19[%c3_103, %c0_104, %c0_105] : memref<4x5x1xf32, #tpu.memory_space<vmem>>, vector<1x5x1xf32>
    %185 = vector.shape_cast %184 : vector<1x5x1xf32> to vector<5x1xf32>
    %cst_106 = arith.constant dense<0xFF800000> : vector<5xf32>
    %186 = vector.multi_reduction <maximumf>, %180, %cst_106 [1] : vector<5x128xf32> to vector<5xf32>
    %187 = vector.shape_cast %186 : vector<5xf32> to vector<5x1xf32>
    %188 = arith.maximumf %185, %187 : vector<5x1xf32>
    %189 = arith.subf %185, %188 : vector<5x1xf32>
    %190 = math.exp %189 : vector<5x1xf32>
    %191 = vector.broadcast %188 : vector<5x1xf32> to vector<5x128xf32>
    %192 = arith.subf %180, %191 : vector<5x128xf32>
    %193 = math.exp %192 : vector<5x128xf32>
    %c3_107 = arith.constant 3 : index
    %c0_108 = arith.constant 0 : index
    %c0_109 = arith.constant 0 : index
    %194 = vector.load %arg20[%c3_107, %c0_108, %c0_109] : memref<4x5x1xf32, #tpu.memory_space<vmem>>, vector<1x5x1xf32>
    %195 = vector.shape_cast %194 : vector<1x5x1xf32> to vector<5x1xf32>
    %196 = arith.mulf %190, %195 : vector<5x1xf32>
    %cst_110 = arith.constant dense<0.000000e+00> : vector<5xf32>
    %197 = vector.multi_reduction <add>, %193, %cst_110 [1] : vector<5x128xf32> to vector<5xf32>
    %198 = vector.shape_cast %197 : vector<5xf32> to vector<5x1xf32>
    %199 = arith.addf %196, %198 : vector<5x1xf32>
    %c3_111 = arith.constant 3 : index
    %c0_112 = arith.constant 0 : index
    %c0_113 = arith.constant 0 : index
    %200 = vector.load %arg20[%c3_111, %c0_112, %c0_113] : memref<4x5x1xf32, #tpu.memory_space<vmem>>, vector<1x5x1xf32>
    %201 = vector.shape_cast %200 : vector<1x5x1xf32> to vector<5x1xf32>
    %202 = vector.shape_cast %199 : vector<5x1xf32> to vector<1x5x1xf32>
    tpu.vector_store %arg20[%c3_111, %c0_112, %c0_113], %202 {strides = array<i32>} : memref<4x5x1xf32, #tpu.memory_space<vmem>>, vector<1x5x1xf32>,
    %c3_114 = arith.constant 3 : index
    %c0_115 = arith.constant 0 : index
    %c0_116 = arith.constant 0 : index
    %203 = vector.load %arg19[%c3_114, %c0_115, %c0_116] : memref<4x5x1xf32, #tpu.memory_space<vmem>>, vector<1x5x1xf32>
    %204 = vector.shape_cast %203 : vector<1x5x1xf32> to vector<5x1xf32>
    %205 = vector.shape_cast %188 : vector<5x1xf32> to vector<1x5x1xf32>
    tpu.vector_store %arg19[%c3_114, %c0_115, %c0_116], %205 {strides = array<i32>} : memref<4x5x1xf32, #tpu.memory_space<vmem>>, vector<1x5x1xf32>,
    %c3_117 = arith.constant 3 : index
    %c0_118 = arith.constant 0 : index
    %c0_119 = arith.constant 0 : index
    %206 = vector.load %arg18[%c3_117, %c0_118, %c0_119] : memref<4x5x8xf32, #tpu.memory_space<vmem>>, vector<1x5x8xf32>
    %207 = vector.shape_cast %206 : vector<1x5x8xf32> to vector<5x8xf32>
    %208 = vector.broadcast %190 : vector<5x1xf32> to vector<5x8xf32>
    %209 = arith.mulf %208, %207 : vector<5x8xf32>
    %cst_120 = arith.constant dense<0.000000e+00> : vector<5x8xf32>
    %210 = tpu.matmul %193, %175, %cst_120 {dimension_numbers = #tpu.dot_dimension_numbers<[1], [0], [0], [1], [0, 0, 1, 1], [], []>} : vector<5x128xf32>, vector<128x8xf32>, vector<5x8xf32> -> vector<5x8xf32>
    %211 = arith.addf %209, %210 : vector<5x8xf32>
    %c3_121 = arith.constant 3 : index
    %c0_122 = arith.constant 0 : index
    %c0_123 = arith.constant 0 : index
    %212 = vector.load %arg18[%c3_121, %c0_122, %c0_123] : memref<4x5x8xf32, #tpu.memory_space<vmem>>, vector<1x5x8xf32>
    %213 = vector.shape_cast %212 : vector<1x5x8xf32> to vector<5x8xf32>
    %214 = vector.shape_cast %211 : vector<5x8xf32> to vector<1x5x8xf32>
    tpu.vector_store %arg18[%c3_121, %c0_122, %c0_123], %214 {strides = array<i32>} : memref<4x5x8xf32, #tpu.memory_space<vmem>>, vector<1x5x8xf32>,
    %c1_i32 = arith.constant 1 : i32
    %215 = arith.cmpi eq, %arg0, %c1_i32 : i32
    %216 = arith.extui %215 : i1 to i32
    %c0_i32_124 = arith.constant 0 : i32
    %217 = arith.cmpi ne, %216, %c0_i32_124 : i32
    scf.if %217 {
      %cst_125 = arith.constant 0.000000e+00 : f32
      %218 = vector.broadcast %cst_125 : f32 to vector<5x32xf32>
      %c0_126 = arith.constant 0 : index
      %c0_127 = arith.constant 0 : index
      %c0_128 = arith.constant 0 : index
      %219 = vector.load %arg18[%c0_126, %c0_127, %c0_128] : memref<4x5x8xf32, #tpu.memory_space<vmem>>, vector<1x5x8xf32>
      %220 = vector.shape_cast %219 : vector<1x5x8xf32> to vector<5x8xf32>
      %c0_129 = arith.constant 0 : index
      %c0_130 = arith.constant 0 : index
      %c0_131 = arith.constant 0 : index
      %221 = vector.load %arg20[%c0_129, %c0_130, %c0_131] : memref<4x5x1xf32, #tpu.memory_space<vmem>>, vector<1x5x1xf32>
      %222 = vector.shape_cast %221 : vector<1x5x1xf32> to vector<5x1xf32>
      %223 = tpu.reciprocal %222 : vector<5x1xf32> -> vector<5x1xf32>
      %224 = vector.broadcast %223 : vector<5x1xf32> to vector<5x8xf32>
      %225 = arith.mulf %220, %224 : vector<5x8xf32>
      %c0_132 = arith.constant 0 : index
      %c0_133 = arith.constant 0 : index
      %226 = vector.load %arg11[%c0_132, %c0_133] : memref<32x32xf32, #tpu.memory_space<vmem>>, vector<8x32xf32>
      %cst_134 = arith.constant dense<0.000000e+00> : vector<5x32xf32>
      %227 = tpu.matmul %225, %226, %cst_134 {dimension_numbers = #tpu.dot_dimension_numbers<[1], [0], [0], [1], [0, 0, 1, 1], [], []>} : vector<5x8xf32>, vector<8x32xf32>, vector<5x32xf32> -> vector<5x32xf32>
      %228 = arith.addf %218, %227 : vector<5x32xf32>
      %c1_135 = arith.constant 1 : index
      %c0_136 = arith.constant 0 : index
      %c0_137 = arith.constant 0 : index
      %229 = vector.load %arg18[%c1_135, %c0_136, %c0_137] : memref<4x5x8xf32, #tpu.memory_space<vmem>>, vector<1x5x8xf32>
      %230 = vector.shape_cast %229 : vector<1x5x8xf32> to vector<5x8xf32>
      %c1_138 = arith.constant 1 : index
      %c0_139 = arith.constant 0 : index
      %c0_140 = arith.constant 0 : index
      %231 = vector.load %arg20[%c1_138, %c0_139, %c0_140] : memref<4x5x1xf32, #tpu.memory_space<vmem>>, vector<1x5x1xf32>
      %232 = vector.shape_cast %231 : vector<1x5x1xf32> to vector<5x1xf32>
      %233 = tpu.reciprocal %232 : vector<5x1xf32> -> vector<5x1xf32>
      %234 = vector.broadcast %233 : vector<5x1xf32> to vector<5x8xf32>
      %235 = arith.mulf %230, %234 : vector<5x8xf32>
      %c8 = arith.constant 8 : index
      %c0_141 = arith.constant 0 : index
      %236 = vector.load %arg11[%c8, %c0_141] : memref<32x32xf32, #tpu.memory_space<vmem>>, vector<8x32xf32>
      %cst_142 = arith.constant dense<0.000000e+00> : vector<5x32xf32>
      %237 = tpu.matmul %235, %236, %cst_142 {dimension_numbers = #tpu.dot_dimension_numbers<[1], [0], [0], [1], [0, 0, 1, 1], [], []>} : vector<5x8xf32>, vector<8x32xf32>, vector<5x32xf32> -> vector<5x32xf32>
      %238 = arith.addf %228, %237 : vector<5x32xf32>
      %c2_143 = arith.constant 2 : index
      %c0_144 = arith.constant 0 : index
      %c0_145 = arith.constant 0 : index
      %239 = vector.load %arg18[%c2_143, %c0_144, %c0_145] : memref<4x5x8xf32, #tpu.memory_space<vmem>>, vector<1x5x8xf32>
      %240 = vector.shape_cast %239 : vector<1x5x8xf32> to vector<5x8xf32>
      %c2_146 = arith.constant 2 : index
      %c0_147 = arith.constant 0 : index
      %c0_148 = arith.constant 0 : index
      %241 = vector.load %arg20[%c2_146, %c0_147, %c0_148] : memref<4x5x1xf32, #tpu.memory_space<vmem>>, vector<1x5x1xf32>
      %242 = vector.shape_cast %241 : vector<1x5x1xf32> to vector<5x1xf32>
      %243 = tpu.reciprocal %242 : vector<5x1xf32> -> vector<5x1xf32>
      %244 = vector.broadcast %243 : vector<5x1xf32> to vector<5x8xf32>
      %245 = arith.mulf %240, %244 : vector<5x8xf32>
      %c16 = arith.constant 16 : index
      %c0_149 = arith.constant 0 : index
      %246 = vector.load %arg11[%c16, %c0_149] : memref<32x32xf32, #tpu.memory_space<vmem>>, vector<8x32xf32>
      %cst_150 = arith.constant dense<0.000000e+00> : vector<5x32xf32>
      %247 = tpu.matmul %245, %246, %cst_150 {dimension_numbers = #tpu.dot_dimension_numbers<[1], [0], [0], [1], [0, 0, 1, 1], [], []>} : vector<5x8xf32>, vector<8x32xf32>, vector<5x32xf32> -> vector<5x32xf32>
      %248 = arith.addf %238, %247 : vector<5x32xf32>
      %c3_151 = arith.constant 3 : index
      %c0_152 = arith.constant 0 : index
      %c0_153 = arith.constant 0 : index
      %249 = vector.load %arg18[%c3_151, %c0_152, %c0_153] : memref<4x5x8xf32, #tpu.memory_space<vmem>>, vector<1x5x8xf32>
      %250 = vector.shape_cast %249 : vector<1x5x8xf32> to vector<5x8xf32>
      %c3_154 = arith.constant 3 : index
      %c0_155 = arith.constant 0 : index
      %c0_156 = arith.constant 0 : index
      %251 = vector.load %arg20[%c3_154, %c0_155, %c0_156] : memref<4x5x1xf32, #tpu.memory_space<vmem>>, vector<1x5x1xf32>
      %252 = vector.shape_cast %251 : vector<1x5x1xf32> to vector<5x1xf32>
      %253 = tpu.reciprocal %252 : vector<5x1xf32> -> vector<5x1xf32>
      %254 = vector.broadcast %253 : vector<5x1xf32> to vector<5x8xf32>
      %255 = arith.mulf %250, %254 : vector<5x8xf32>
      %c24 = arith.constant 24 : index
      %c0_157 = arith.constant 0 : index
      %256 = vector.load %arg11[%c24, %c0_157] : memref<32x32xf32, #tpu.memory_space<vmem>>, vector<8x32xf32>
      %cst_158 = arith.constant dense<0.000000e+00> : vector<5x32xf32>
      %257 = tpu.matmul %255, %256, %cst_158 {dimension_numbers = #tpu.dot_dimension_numbers<[1], [0], [0], [1], [0, 0, 1, 1], [], []>} : vector<5x8xf32>, vector<8x32xf32>, vector<5x32xf32> -> vector<5x32xf32>
      %258 = arith.addf %248, %257 : vector<5x32xf32>
      %c0_159 = arith.constant 0 : index
      %c0_160 = arith.constant 0 : index
      %259 = vector.load %arg2[%c0_159, %c0_160] : memref<5x32xf32, #tpu.memory_space<vmem>>, vector<5x32xf32>
      %260 = arith.addf %259, %258 : vector<5x32xf32>
      %c0_161 = arith.constant 0 : index
      %c0_162 = arith.constant 0 : index
      %261 = vector.load %arg12[%c0_161, %c0_162] : memref<1x32xf32, #tpu.memory_space<vmem>>, vector<1x32xf32>
      %262 = vector.broadcast %261 : vector<1x32xf32> to vector<5x32xf32>
      %263 = arith.addf %260, %262 : vector<5x32xf32>
      %c0_163 = arith.constant 0 : index
      %c0_164 = arith.constant 0 : index
      %264 = vector.load %arg13[%c0_163, %c0_164] : memref<5x32xf32, #tpu.memory_space<vmem>>, vector<5x32xf32>
      tpu.vector_store %arg13[%c0_163, %c0_164], %263 {strides = array<i32>} : memref<5x32xf32, #tpu.memory_space<vmem>>, vector<5x32xf32>,
      %c0_165 = arith.constant 0 : index
      %c0_166 = arith.constant 0 : index
      %c0_167 = arith.constant 0 : index
      %265 = vector.load %arg19[%c0_165, %c0_166, %c0_167] : memref<4x5x1xf32, #tpu.memory_space<vmem>>, vector<4x5x1xf32>
      %c0_168 = arith.constant 0 : index
      %c0_169 = arith.constant 0 : index
      %c0_170 = arith.constant 0 : index
      %266 = vector.load %arg15[%c0_168, %c0_169, %c0_170] : memref<4x5x1xf32, #tpu.memory_space<vmem>>, vector<4x5x1xf32>
      tpu.vector_store %arg15[%c0_168, %c0_169, %c0_170], %265 {strides = array<i32>} : memref<4x5x1xf32, #tpu.memory_space<vmem>>, vector<4x5x1xf32>,
      %c0_171 = arith.constant 0 : index
      %c0_172 = arith.constant 0 : index
      %c0_173 = arith.constant 0 : index
      %267 = vector.load %arg20[%c0_171, %c0_172, %c0_173] : memref<4x5x1xf32, #tpu.memory_space<vmem>>, vector<4x5x1xf32>
      %c0_174 = arith.constant 0 : index
      %c0_175 = arith.constant 0 : index
      %c0_176 = arith.constant 0 : index
      %268 = vector.load %arg16[%c0_174, %c0_175, %c0_176] : memref<4x5x1xf32, #tpu.memory_space<vmem>>, vector<4x5x1xf32>
      tpu.vector_store %arg16[%c0_174, %c0_175, %c0_176], %267 {strides = array<i32>} : memref<4x5x1xf32, #tpu.memory_space<vmem>>, vector<4x5x1xf32>,
    } else {
    }
    return
  }
  func.func @transform_0(%arg0: i32) -> (i32, i32) {
    %c0_i32 = arith.constant 0 : i32
    %c0_i32_0 = arith.constant 0 : i32
    return %arg0, %c0_i32 : i32, i32
  }
  func.func @transform_1(%arg0: i32) -> (i32, i32) {
    %c0_i32 = arith.constant 0 : i32
    %c0_i32_0 = arith.constant 0 : i32
    %c0_i32_1 = arith.constant 0 : i32
    return %c0_i32, %c0_i32_0 : i32, i32
  }
  func.func @transform_2(%arg0: i32) -> (i32, i32) {
    %c0_i32 = arith.constant 0 : i32
    %c0_i32_0 = arith.constant 0 : i32
    %c0_i32_1 = arith.constant 0 : i32
    return %c0_i32, %c0_i32_0 : i32, i32
  }
  func.func @transform_3(%arg0: i32) -> (i32, i32) {
    %c0_i32 = arith.constant 0 : i32
    %c0_i32_0 = arith.constant 0 : i32
    %c0_i32_1 = arith.constant 0 : i32
    return %c0_i32, %c0_i32_0 : i32, i32
  }
  func.func @transform_4(%arg0: i32) -> (i32, i32) {
    %c0_i32 = arith.constant 0 : i32
    %c0_i32_0 = arith.constant 0 : i32
    %c0_i32_1 = arith.constant 0 : i32
    return %c0_i32, %c0_i32_0 : i32, i32
  }
  func.func @transform_5(%arg0: i32) -> (i32, i32) {
    %c0_i32 = arith.constant 0 : i32
    %c0_i32_0 = arith.constant 0 : i32
    %c0_i32_1 = arith.constant 0 : i32
    return %c0_i32, %c0_i32_0 : i32, i32
  }
  func.func @transform_6(%arg0: i32) -> (i32, i32) {
    %c0_i32 = arith.constant 0 : i32
    %c0_i32_0 = arith.constant 0 : i32
    %c0_i32_1 = arith.constant 0 : i32
    return %c0_i32, %c0_i32_0 : i32, i32
  }
  func.func @transform_7(%arg0: i32) -> (i32, i32) {
    %c0_i32 = arith.constant 0 : i32
    %c0_i32_0 = arith.constant 0 : i32
    %c0_i32_1 = arith.constant 0 : i32
    return %c0_i32, %c0_i32_0 : i32, i32
  }
  func.func @transform_8(%arg0: i32) -> (i32, i32) {
    %c0_i32 = arith.constant 0 : i32
    %c0_i32_0 = arith.constant 0 : i32
    %c0_i32_1 = arith.constant 0 : i32
    return %c0_i32, %c0_i32_0 : i32, i32
  }
  func.func @transform_9(%arg0: i32) -> (i32, i32) {
    %c0_i32 = arith.constant 0 : i32
    %c0_i32_0 = arith.constant 0 : i32
    %c0_i32_1 = arith.constant 0 : i32
    return %c0_i32, %c0_i32_0 : i32, i32
  }
  func.func @transform_10(%arg0: i32) -> (i32, i32) {
    %c0_i32 = arith.constant 0 : i32
    %c0_i32_0 = arith.constant 0 : i32
    %c0_i32_1 = arith.constant 0 : i32
    return %c0_i32, %c0_i32_0 : i32, i32
  }
  func.func @transform_11(%arg0: i32) -> (i32, i32) {
    %c0_i32 = arith.constant 0 : i32
    %c0_i32_0 = arith.constant 0 : i32
    %c0_i32_1 = arith.constant 0 : i32
    return %c0_i32, %c0_i32_0 : i32, i32
  }
  func.func @transform_12(%arg0: i32) -> (i32, i32) {
    %c0_i32 = arith.constant 0 : i32
    %c0_i32_0 = arith.constant 0 : i32
    %c0_i32_1 = arith.constant 0 : i32
    return %c0_i32, %c0_i32_0 : i32, i32
  }
  func.func @transform_13(%arg0: i32) -> (i32, i32, i32) {
    %c0_i32 = arith.constant 0 : i32
    %c0_i32_0 = arith.constant 0 : i32
    %c0_i32_1 = arith.constant 0 : i32
    return %c0_i32, %c0_i32_0, %arg0 : i32, i32, i32
  }
  func.func @transform_14(%arg0: i32) -> (i32, i32, i32) {
    %c0_i32 = arith.constant 0 : i32
    %c0_i32_0 = arith.constant 0 : i32
    %c0_i32_1 = arith.constant 0 : i32
    %c0_i32_2 = arith.constant 0 : i32
    return %c0_i32, %c0_i32_0, %c0_i32_1 : i32, i32, i32
  }
  func.func @transform_15(%arg0: i32) -> (i32, i32, i32) {
    %c0_i32 = arith.constant 0 : i32
    %c0_i32_0 = arith.constant 0 : i32
    %c0_i32_1 = arith.constant 0 : i32
    %c0_i32_2 = arith.constant 0 : i32
    return %c0_i32, %c0_i32_0, %c0_i32_1 : i32, i32, i32
  }
}

module attributes {stable_mosaic.version = 11 : i64} {
  func.func @_ffn_kernel(%arg0: i32, %arg1: memref<128x32xf32, #tpu.memory_space<vmem>>, %arg2: memref<1x5xi32, #tpu.memory_space<vmem>>, %arg3: memref<5x32xf32, #tpu.memory_space<vmem>>, %arg4: memref<1x32xf32, #tpu.memory_space<vmem>>, %arg5: memref<1x32xf32, #tpu.memory_space<vmem>>, %arg6: memref<32x64xf32, #tpu.memory_space<vmem>>, %arg7: memref<1x64xf32, #tpu.memory_space<vmem>>, %arg8: memref<64x32xf32, #tpu.memory_space<vmem>>, %arg9: memref<1x32xf32, #tpu.memory_space<vmem>>, %arg10: memref<4x5x128xf32, #tpu.memory_space<vmem>>, %arg11: memref<4x5x1xf32, #tpu.memory_space<vmem>>, %arg12: memref<4x5x1xf32, #tpu.memory_space<vmem>>, %arg13: memref<128x32xf32, #tpu.memory_space<vmem>>, %arg14: memref<4x5x128xf32, #tpu.memory_space<vmem>>) attributes {dimension_semantics = [#tpu.dimension_semantics<parallel>], iteration_bounds = array<i64: 2>, scalar_prefetch = 0 : i64, scratch_operands = 0 : i64, tpu.core_type = #tpu.core_type<tc>, window_params = [{transform_indices = @transform_0, window_bounds = array<i64: 128, 32>}, {pipeline_mode = #tpu.pipeline_mode<synchronous>, transform_indices = @transform_1, window_bounds = array<i64: 1, 5>}, {pipeline_mode = #tpu.pipeline_mode<synchronous>, transform_indices = @transform_2, window_bounds = array<i64: 5, 32>}, {pipeline_mode = #tpu.pipeline_mode<synchronous>, transform_indices = @transform_3, window_bounds = array<i64: 1, 32>}, {pipeline_mode = #tpu.pipeline_mode<synchronous>, transform_indices = @transform_4, window_bounds = array<i64: 1, 32>}, {pipeline_mode = #tpu.pipeline_mode<synchronous>, transform_indices = @transform_5, window_bounds = array<i64: 32, 64>}, {pipeline_mode = #tpu.pipeline_mode<synchronous>, transform_indices = @transform_6, window_bounds = array<i64: 1, 64>}, {pipeline_mode = #tpu.pipeline_mode<synchronous>, transform_indices = @transform_7, window_bounds = array<i64: 64, 32>}, {pipeline_mode = #tpu.pipeline_mode<synchronous>, transform_indices = @transform_8, window_bounds = array<i64: 1, 32>}, {transform_indices = @transform_9, window_bounds = array<i64: 4, 5, 128>}, {pipeline_mode = #tpu.pipeline_mode<synchronous>, transform_indices = @transform_10, window_bounds = array<i64: 4, 5, 1>}, {pipeline_mode = #tpu.pipeline_mode<synchronous>, transform_indices = @transform_11, window_bounds = array<i64: 4, 5, 1>}, {transform_indices = @transform_12, window_bounds = array<i64: 128, 32>}, {transform_indices = @transform_13, window_bounds = array<i64: 4, 5, 128>}]} {
    %c0 = arith.constant 0 : index
    %c0_0 = arith.constant 0 : index
    %0 = vector.load %arg1[%c0, %c0_0] : memref<128x32xf32, #tpu.memory_space<vmem>>, vector<128x32xf32>
    %c0_1 = arith.constant 0 : index
    %c0_2 = arith.constant 0 : index
    %1 = vector.load %arg3[%c0_1, %c0_2] : memref<5x32xf32, #tpu.memory_space<vmem>>, vector<5x32xf32>
    %c128_i32 = arith.constant 128 : i32
    %2 = arith.muli %arg0, %c128_i32 : i32
    %3 = tpu.iota {dimensions = array<i32: 0>} : vector<128x1xi32>
    %4 = vector.broadcast %2 : i32 to vector<128x1xi32>
    %5 = arith.addi %4, %3 : vector<128x1xi32>
    %c0_3 = arith.constant 0 : index
    %c0_4 = arith.constant 0 : index
    %6 = vector.load %arg2[%c0_3, %c0_4] : memref<1x5xi32, #tpu.memory_space<vmem>>, vector<1x5xi32>
    %7 = vector.broadcast %5 : vector<128x1xi32> to vector<128x5xi32>
    %8 = vector.broadcast %6 : vector<1x5xi32> to vector<128x5xi32>
    %9 = arith.cmpi eq, %7, %8 : vector<128x5xi32>
    %10 = arith.extui %9 : vector<128x5xi1> to vector<128x5xi32>
    %11 = arith.sitofp %10 : vector<128x5xi32> to vector<128x5xf32>
    %cst = arith.constant dense<0.000000e+00> : vector<128x32xf32>
    %12 = tpu.matmul %11, %1, %cst {dimension_numbers = #tpu.dot_dimension_numbers<[1], [0], [0], [1], [0, 0, 1, 1], [], []>} : vector<128x5xf32>, vector<5x32xf32>, vector<128x32xf32> -> vector<128x32xf32>
    %cst_5 = arith.constant dense<0.000000e+00> : vector<128xf32>
    %13 = vector.multi_reduction <add>, %11, %cst_5 [1] : vector<128x5xf32> to vector<128xf32>
    %14 = vector.shape_cast %13 : vector<128xf32> to vector<128x1xf32>
    %cst_6 = arith.constant 1.000000e+00 : f32
    %15 = vector.broadcast %cst_6 : f32 to vector<128x1xf32>
    %16 = arith.subf %15, %14 : vector<128x1xf32>
    %17 = vector.broadcast %16 : vector<128x1xf32> to vector<128x32xf32>
    %18 = arith.mulf %0, %17 : vector<128x32xf32>
    %19 = arith.addf %18, %12 : vector<128x32xf32>
    %c0_7 = arith.constant 0 : index
    %c0_8 = arith.constant 0 : index
    %20 = vector.load %arg4[%c0_7, %c0_8] : memref<1x32xf32, #tpu.memory_space<vmem>>, vector<1x32xf32>
    %c0_9 = arith.constant 0 : index
    %c0_10 = arith.constant 0 : index
    %21 = vector.load %arg5[%c0_9, %c0_10] : memref<1x32xf32, #tpu.memory_space<vmem>>, vector<1x32xf32>
    %cst_11 = arith.constant dense<0.000000e+00> : vector<128xf32>
    %22 = vector.multi_reduction <add>, %19, %cst_11 [1] : vector<128x32xf32> to vector<128xf32>
    %23 = vector.shape_cast %22 : vector<128xf32> to vector<128x1xf32>
    %cst_12 = arith.constant 3.200000e+01 : f32
    %24 = vector.broadcast %cst_12 : f32 to vector<128x1xf32>
    %25 = arith.divf %23, %24 : vector<128x1xf32>
    %26 = vector.broadcast %25 : vector<128x1xf32> to vector<128x32xf32>
    %27 = arith.subf %19, %26 : vector<128x32xf32>
    %28 = arith.mulf %27, %27 : vector<128x32xf32>
    %cst_13 = arith.constant dense<0.000000e+00> : vector<128xf32>
    %29 = vector.multi_reduction <add>, %28, %cst_13 [1] : vector<128x32xf32> to vector<128xf32>
    %30 = vector.shape_cast %29 : vector<128xf32> to vector<128x1xf32>
    %cst_14 = arith.constant 3.200000e+01 : f32
    %31 = vector.broadcast %cst_14 : f32 to vector<128x1xf32>
    %32 = arith.divf %30, %31 : vector<128x1xf32>
    %33 = vector.broadcast %25 : vector<128x1xf32> to vector<128x32xf32>
    %34 = arith.subf %19, %33 : vector<128x32xf32>
    %cst_15 = arith.constant 9.99999974E-6 : f32
    %35 = vector.broadcast %cst_15 : f32 to vector<128x1xf32>
    %36 = arith.addf %32, %35 : vector<128x1xf32>
    %37 = math.rsqrt %36 : vector<128x1xf32>
    %38 = vector.broadcast %37 : vector<128x1xf32> to vector<128x32xf32>
    %39 = arith.mulf %34, %38 : vector<128x32xf32>
    %40 = vector.broadcast %20 : vector<1x32xf32> to vector<128x32xf32>
    %41 = arith.mulf %39, %40 : vector<128x32xf32>
    %42 = vector.broadcast %21 : vector<1x32xf32> to vector<128x32xf32>
    %43 = arith.addf %41, %42 : vector<128x32xf32>
    %c0_16 = arith.constant 0 : index
    %c0_17 = arith.constant 0 : index
    %44 = vector.load %arg6[%c0_16, %c0_17] : memref<32x64xf32, #tpu.memory_space<vmem>>, vector<32x64xf32>
    %cst_18 = arith.constant dense<0.000000e+00> : vector<128x64xf32>
    %45 = tpu.matmul %43, %44, %cst_18 {dimension_numbers = #tpu.dot_dimension_numbers<[1], [0], [0], [1], [0, 0, 1, 1], [], []>} : vector<128x32xf32>, vector<32x64xf32>, vector<128x64xf32> -> vector<128x64xf32>
    %c0_19 = arith.constant 0 : index
    %c0_20 = arith.constant 0 : index
    %46 = vector.load %arg7[%c0_19, %c0_20] : memref<1x64xf32, #tpu.memory_space<vmem>>, vector<1x64xf32>
    %47 = vector.broadcast %46 : vector<1x64xf32> to vector<128x64xf32>
    %48 = arith.addf %45, %47 : vector<128x64xf32>
    %cst_21 = arith.constant 0.000000e+00 : f32
    %49 = vector.broadcast %cst_21 : f32 to vector<128x64xf32>
    %50 = arith.maximumf %48, %49 : vector<128x64xf32>
    %c0_22 = arith.constant 0 : index
    %c0_23 = arith.constant 0 : index
    %51 = vector.load %arg8[%c0_22, %c0_23] : memref<64x32xf32, #tpu.memory_space<vmem>>, vector<64x32xf32>
    %cst_24 = arith.constant dense<0.000000e+00> : vector<128x32xf32>
    %52 = tpu.matmul %50, %51, %cst_24 {dimension_numbers = #tpu.dot_dimension_numbers<[1], [0], [0], [1], [0, 0, 1, 1], [], []>} : vector<128x64xf32>, vector<64x32xf32>, vector<128x32xf32> -> vector<128x32xf32>
    %c0_25 = arith.constant 0 : index
    %c0_26 = arith.constant 0 : index
    %53 = vector.load %arg9[%c0_25, %c0_26] : memref<1x32xf32, #tpu.memory_space<vmem>>, vector<1x32xf32>
    %54 = vector.broadcast %53 : vector<1x32xf32> to vector<128x32xf32>
    %55 = arith.addf %52, %54 : vector<128x32xf32>
    %56 = arith.addf %19, %55 : vector<128x32xf32>
    %c0_27 = arith.constant 0 : index
    %c0_28 = arith.constant 0 : index
    %57 = vector.load %arg13[%c0_27, %c0_28] : memref<128x32xf32, #tpu.memory_space<vmem>>, vector<128x32xf32>
    tpu.vector_store %arg13[%c0_27, %c0_28], %56 {strides = array<i32>} : memref<128x32xf32, #tpu.memory_space<vmem>>, vector<128x32xf32>,
    %c0_29 = arith.constant 0 : index
    %c0_30 = arith.constant 0 : index
    %c0_31 = arith.constant 0 : index
    %58 = vector.load %arg10[%c0_29, %c0_30, %c0_31] : memref<4x5x128xf32, #tpu.memory_space<vmem>>, vector<4x5x128xf32>
    %c0_32 = arith.constant 0 : index
    %c0_33 = arith.constant 0 : index
    %c0_34 = arith.constant 0 : index
    %59 = vector.load %arg11[%c0_32, %c0_33, %c0_34] : memref<4x5x1xf32, #tpu.memory_space<vmem>>, vector<4x5x1xf32>
    %60 = vector.broadcast %59 : vector<4x5x1xf32> to vector<4x5x128xf32>
    %61 = arith.subf %58, %60 : vector<4x5x128xf32>
    %62 = math.exp %61 : vector<4x5x128xf32>
    %c0_35 = arith.constant 0 : index
    %c0_36 = arith.constant 0 : index
    %c0_37 = arith.constant 0 : index
    %63 = vector.load %arg12[%c0_35, %c0_36, %c0_37] : memref<4x5x1xf32, #tpu.memory_space<vmem>>, vector<4x5x1xf32>
    %64 = tpu.reciprocal %63 : vector<4x5x1xf32> -> vector<4x5x1xf32>
    %65 = vector.broadcast %64 : vector<4x5x1xf32> to vector<4x5x128xf32>
    %66 = arith.mulf %62, %65 : vector<4x5x128xf32>
    %c0_38 = arith.constant 0 : index
    %c0_39 = arith.constant 0 : index
    %c0_40 = arith.constant 0 : index
    %67 = vector.load %arg14[%c0_38, %c0_39, %c0_40] : memref<4x5x128xf32, #tpu.memory_space<vmem>>, vector<4x5x128xf32>
    tpu.vector_store %arg14[%c0_38, %c0_39, %c0_40], %66 {strides = array<i32>} : memref<4x5x128xf32, #tpu.memory_space<vmem>>, vector<4x5x128xf32>,
    return
  }
  func.func @transform_0(%arg0: i32) -> (i32, i32) {
    %c0_i32 = arith.constant 0 : i32
    %c0_i32_0 = arith.constant 0 : i32
    return %arg0, %c0_i32 : i32, i32
  }
  func.func @transform_1(%arg0: i32) -> (i32, i32) {
    %c0_i32 = arith.constant 0 : i32
    %c0_i32_0 = arith.constant 0 : i32
    %c0_i32_1 = arith.constant 0 : i32
    return %c0_i32, %c0_i32_0 : i32, i32
  }
  func.func @transform_2(%arg0: i32) -> (i32, i32) {
    %c0_i32 = arith.constant 0 : i32
    %c0_i32_0 = arith.constant 0 : i32
    %c0_i32_1 = arith.constant 0 : i32
    return %c0_i32, %c0_i32_0 : i32, i32
  }
  func.func @transform_3(%arg0: i32) -> (i32, i32) {
    %c0_i32 = arith.constant 0 : i32
    %c0_i32_0 = arith.constant 0 : i32
    %c0_i32_1 = arith.constant 0 : i32
    return %c0_i32, %c0_i32_0 : i32, i32
  }
  func.func @transform_4(%arg0: i32) -> (i32, i32) {
    %c0_i32 = arith.constant 0 : i32
    %c0_i32_0 = arith.constant 0 : i32
    %c0_i32_1 = arith.constant 0 : i32
    return %c0_i32, %c0_i32_0 : i32, i32
  }
  func.func @transform_5(%arg0: i32) -> (i32, i32) {
    %c0_i32 = arith.constant 0 : i32
    %c0_i32_0 = arith.constant 0 : i32
    %c0_i32_1 = arith.constant 0 : i32
    return %c0_i32, %c0_i32_0 : i32, i32
  }
  func.func @transform_6(%arg0: i32) -> (i32, i32) {
    %c0_i32 = arith.constant 0 : i32
    %c0_i32_0 = arith.constant 0 : i32
    %c0_i32_1 = arith.constant 0 : i32
    return %c0_i32, %c0_i32_0 : i32, i32
  }
  func.func @transform_7(%arg0: i32) -> (i32, i32) {
    %c0_i32 = arith.constant 0 : i32
    %c0_i32_0 = arith.constant 0 : i32
    %c0_i32_1 = arith.constant 0 : i32
    return %c0_i32, %c0_i32_0 : i32, i32
  }
  func.func @transform_8(%arg0: i32) -> (i32, i32) {
    %c0_i32 = arith.constant 0 : i32
    %c0_i32_0 = arith.constant 0 : i32
    %c0_i32_1 = arith.constant 0 : i32
    return %c0_i32, %c0_i32_0 : i32, i32
  }
  func.func @transform_9(%arg0: i32) -> (i32, i32, i32) {
    %c0_i32 = arith.constant 0 : i32
    %c0_i32_0 = arith.constant 0 : i32
    %c0_i32_1 = arith.constant 0 : i32
    return %c0_i32, %c0_i32_0, %arg0 : i32, i32, i32
  }
  func.func @transform_10(%arg0: i32) -> (i32, i32, i32) {
    %c0_i32 = arith.constant 0 : i32
    %c0_i32_0 = arith.constant 0 : i32
    %c0_i32_1 = arith.constant 0 : i32
    %c0_i32_2 = arith.constant 0 : i32
    return %c0_i32, %c0_i32_0, %c0_i32_1 : i32, i32, i32
  }
  func.func @transform_11(%arg0: i32) -> (i32, i32, i32) {
    %c0_i32 = arith.constant 0 : i32
    %c0_i32_0 = arith.constant 0 : i32
    %c0_i32_1 = arith.constant 0 : i32
    %c0_i32_2 = arith.constant 0 : i32
    return %c0_i32, %c0_i32_0, %c0_i32_1 : i32, i32, i32
  }
  func.func @transform_12(%arg0: i32) -> (i32, i32) {
    %c0_i32 = arith.constant 0 : i32
    %c0_i32_0 = arith.constant 0 : i32
    return %arg0, %c0_i32 : i32, i32
  }
  func.func @transform_13(%arg0: i32) -> (i32, i32, i32) {
    %c0_i32 = arith.constant 0 : i32
    %c0_i32_0 = arith.constant 0 : i32
    %c0_i32_1 = arith.constant 0 : i32
    return %c0_i32, %c0_i32_0, %arg0 : i32, i32, i32
  }
}

</mosaic_0001>

<llo_original>
// kernel: neg.0
$region0: #{neg.0}
  #allocation0 [shape = 's32[1]{0}', space=sflag, size = 0x4, scoped, tag = 'scoped memory for neg.0']
  %s0 = inlined_call_operand.vmem [shape: f32[1,250,1], index: 0, kind: input, shape index: {}]
  %s1 = inlined_call_operand.vmem [shape: f32[1,250,1], index: 1, kind: output, shape index: {}]
  %v2 = vld [vmem:[%s0] sm:$0x1]
  %3 = xla_tuple %v2
  %4 = xla_tuple %3
  %v5 = vxor.u32 %v2, 2147483648
  %6 = xla_tuple %v5
  %7 = vst [vmem:[%s1] sm:$0x1] %v5
  %s8 = scalar_lea.vmem %s0, 1
  %v9 = vld [vmem:[%s8] sm:$0x1]
  %10 = xla_tuple %v9
  %11 = xla_tuple %10
  %v12 = vxor.u32 %v9, 2147483648
  %13 = xla_tuple %v12
  %s14 = scalar_lea.vmem %s1, 1
  %15 = vst [vmem:[%s14] sm:$0x1] %v12

// kernel: encoder_layer_forward.3
$region0: #{encoder_layer_forward.3}
  #allocation0 [shape = 'u32[]', space=smem, size = 0x4, offset = 0x4, fixed_abs, tag = 'smem constant byte address 0x4 - core index']
  #allocation1 [shape = 'u32[144,128]{1,0:T(1,128)}', space=vmem, size = 0x12000, scoped, tag = 'internal scratch']
  %s0 = inlined_call_operand.vmem [shape: f32[256,32], index: 0, kind: input, shape index: {}]
  %s1 = inlined_call_operand.vmem [shape: s32[1,5], index: 1, kind: input, shape index: {}]
  %s2 = inlined_call_operand.vmem [shape: f32[5,32], index: 2, kind: input, shape index: {}]
  %s3 = inlined_call_operand.vmem [shape: f32[1,32], index: 3, kind: input, shape index: {}]
  %s4 = inlined_call_operand.vmem [shape: f32[1,32], index: 4, kind: input, shape index: {}]
  %s5 = inlined_call_operand.vmem [shape: f32[32,64], index: 5, kind: input, shape index: {}]
  %s6 = inlined_call_operand.vmem [shape: f32[1,64], index: 6, kind: input, shape index: {}]
  %s7 = inlined_call_operand.vmem [shape: f32[64,32], index: 7, kind: input, shape index: {}]
  %s8 = inlined_call_operand.vmem [shape: f32[1,32], index: 8, kind: input, shape index: {}]
  %s9 = inlined_call_operand.vmem [shape: f32[4,5,256], index: 9, kind: input, shape index: {}]
  %s10 = inlined_call_operand.vmem [shape: f32[4,5,1], index: 10, kind: input, shape index: {}]
  %s11 = inlined_call_operand.vmem [shape: f32[4,5,1], index: 11, kind: input, shape index: {}]
  %s12 = inlined_call_operand.vmem [shape: f32[256,32], index: 12, kind: output, shape index: {0}]
  %s13 = inlined_call_operand.vmem [shape: f32[4,5,256], index: 13, kind: output, shape index: {1}]
  %14 = xla_tuple %s12, %s13
  %s15 = sld [smem:[#allocation0]]
  $region161: #{encoder_layer_forward.3} parent=0
    _
  %s17 = ssub.s32 1, %s15
  %s18 = scalar_select 0, %s17, %s15
  $region1: #{encoder_layer_forward.3} parent=0
    #allocation2 [shape = 'u8[32768]{0}', space=vmem, size = 0x8000, scoped, tag = 'input window, operand 9']
    #allocation3 [shape = 'u8[32768]{0}', space=vmem, size = 0x8000, scoped, tag = 'output window, operand 1']
    loop: start=0, step=1, limit=4
    $region2: #{encoder_layer_forward.3} parent=1 // loop_pre_header
      _
    $region3: #{encoder_layer_forward.3} parent=1 // loop_header
      %s20 = sphi 0, %s24
      %p21 = scmp.ge.s32.totalorder %s20, 4
      %s30 = sphi 0, %s32
      %s33 = sphi 0, %s30
      %s34 = sphi 0, %s33
      %s50 = sphi 0, %s34
      %s54 = sphi 0, %s54
      %s56 = sphi 0, %s54
      %s57 = sphi 0, %s56
      %s71 = sphi 0, %s57
      %s75 = sphi 0, %s75
      %s77 = sphi 0, %s75
      %s78 = sphi 0, %s77
      %s92 = sphi 0, %s78
      %s96 = sphi 0, %s96
      %s98 = sphi 0, %s96
      %s99 = sphi 0, %s98
      %s113 = sphi 0, %s99
      %s117 = sphi 0, %s117
      %s119 = sphi 0, %s117
      %s120 = sphi 0, %s119
      %s134 = sphi 0, %s120
      %s138 = sphi 0, %s138
      %s140 = sphi 0, %s138
      %s141 = sphi 0, %s140
      %s155 = sphi 0, %s141
      %s159 = sphi 0, %s159
      %s161 = sphi 0, %s159
      %s162 = sphi 0, %s161
      %s176 = sphi 0, %s162
      %s180 = sphi 0, %s180
      %s182 = sphi 0, %s180
      %s183 = sphi 0, %s182
      %s197 = sphi 0, %s183
      %s201 = sphi 0, %s201
      %s203 = sphi 0, %s201
      %s204 = sphi 0, %s203
      %s218 = sphi 0, %s204
      %s224 = sphi 0, %s226
      %s227 = sphi 0, %s224
      %s228 = sphi 0, %s227
      %s244 = sphi 0, %s228
      %s248 = sphi 0, %s248
      %s250 = sphi 0, %s248
      %s251 = sphi 0, %s250
      %s265 = sphi 0, %s251
      %s269 = sphi 0, %s269
      %s271 = sphi 0, %s269
      %s272 = sphi 0, %s271
      %s286 = sphi 0, %s272
      %s292 = sphi 0, %s294
      %s295 = sphi 0, %s292
      %s296 = sphi 0, %s295
      %s312 = sphi 0, %s296
      %s318 = sphi 0, %s320
      %s321 = sphi 0, %s318
      %s322 = sphi 0, %s321
      %s338 = sphi 0, %s322
    $region4: #{encoder_layer_forward.3} parent=1 // loop_header_branch
      %23 = sbr.rel (%p21) target = $region8
    $region5: #{encoder_layer_forward.3} parent=1 // loop_body
      %s25 = ssub.s32 %s20, 1
      %s26 = ssub.s32 %s20, 2
      %s27 = sadd.s32 %s20, 1
      %s28 = ssub.s32 %s20, %s27
      %p29 = scmp.eq.s32.totalorder %s28, 0
      %s31 = sadd.s32 %s30, 1
      %s32 = scalar_select %p29, %s30, %s31
      %p35 = pneg %p29
      %p36 = scmp.eq.s32.totalorder %s20, 1
      %p37 = por %p35, %p36
      %p38 = scmp.ne.s32.totalorder %s30, %s33
      %p39 = scmp.eq.s32.totalorder %s20, 0
      %p40 = por %p38, %p39
      %p41 = scmp.ne.s32.totalorder %s30, %s33
      %p42 = scmp.eq.s32.totalorder %s25, 1
      %p43 = por %p41, %p42
      %p44 = scmp.ne.s32.totalorder %s33, %s34
      %p45 = scmp.eq.s32.totalorder %s25, 0
      %p46 = por %p44, %p45
      %p47 = scmp.ne.s32.totalorder %s33, %s34
      %p48 = scmp.eq.s32.totalorder %s26, 1
      %p49 = por %p47, %p48
      %p51 = scmp.ne.s32.totalorder %s34, %s50
      %p52 = scmp.eq.s32.totalorder %s26, 0
      %p53 = por %p51, %p52
      %s55 = sadd.s32 %s54, 1
      %p58 = scmp.eq.s32.totalorder %s20, 1
      %p59 = scmp.ne.s32.totalorder %s54, %s56
      %p60 = scmp.eq.s32.totalorder %s20, 0
      %p61 = por %p59, %p60
      %p62 = scmp.ne.s32.totalorder %s54, %s56
      %p63 = scmp.eq.s32.totalorder %s25, 1
      %p64 = por %p62, %p63
      %p65 = scmp.ne.s32.totalorder %s56, %s57
      %p66 = scmp.eq.s32.totalorder %s25, 0
      %p67 = por %p65, %p66
      %p68 = scmp.ne.s32.totalorder %s56, %s57
      %p69 = scmp.eq.s32.totalorder %s26, 1
      %p70 = por %p68, %p69
      %p72 = scmp.ne.s32.totalorder %s57, %s71
      %p73 = scmp.eq.s32.totalorder %s26, 0
      %p74 = por %p72, %p73
      %s76 = sadd.s32 %s75, 1
      %p79 = scmp.eq.s32.totalorder %s20, 1
      %p80 = scmp.ne.s32.totalorder %s75, %s77
      %p81 = scmp.eq.s32.totalorder %s20, 0
      %p82 = por %p80, %p81
      %p83 = scmp.ne.s32.totalorder %s75, %s77
      %p84 = scmp.eq.s32.totalorder %s25, 1
      %p85 = por %p83, %p84
      %p86 = scmp.ne.s32.totalorder %s77, %s78
      %p87 = scmp.eq.s32.totalorder %s25, 0
      %p88 = por %p86, %p87
      %p89 = scmp.ne.s32.totalorder %s77, %s78
      %p90 = scmp.eq.s32.totalorder %s26, 1
      %p91 = por %p89, %p90
      %p93 = scmp.ne.s32.totalorder %s78, %s92
      %p94 = scmp.eq.s32.totalorder %s26, 0
      %p95 = por %p93, %p94
      %s97 = sadd.s32 %s96, 1
      %p100 = scmp.eq.s32.totalorder %s20, 1
      %p101 = scmp.ne.s32.totalorder %s96, %s98
      %p102 = scmp.eq.s32.totalorder %s20, 0
      %p103 = por %p101, %p102
      %p104 = scmp.ne.s32.totalorder %s96, %s98
      %p105 = scmp.eq.s32.totalorder %s25, 1
      %p106 = por %p104, %p105
      %p107 = scmp.ne.s32.totalorder %s98, %s99
      %p108 = scmp.eq.s32.totalorder %s25, 0
      %p109 = por %p107, %p108
      %p110 = scmp.ne.s32.totalorder %s98, %s99
      %p111 = scmp.eq.s32.totalorder %s26, 1
      %p112 = por %p110, %p111
      %p114 = scmp.ne.s32.totalorder %s99, %s113
      %p115 = scmp.eq.s32.totalorder %s26, 0
      %p116 = por %p114, %p115
      %s118 = sadd.s32 %s117, 1
      %p121 = scmp.eq.s32.totalorder %s20, 1
      %p122 = scmp.ne.s32.totalorder %s117, %s119
      %p123 = scmp.eq.s32.totalorder %s20, 0
      %p124 = por %p122, %p123
      %p125 = scmp.ne.s32.totalorder %s117, %s119
      %p126 = scmp.eq.s32.totalorder %s25, 1
      %p127 = por %p125, %p126
      %p128 = scmp.ne.s32.totalorder %s119, %s120
      %p129 = scmp.eq.s32.totalorder %s25, 0
      %p130 = por %p128, %p129
      %p131 = scmp.ne.s32.totalorder %s119, %s120
      %p132 = scmp.eq.s32.totalorder %s26, 1
      %p133 = por %p131, %p132
      %p135 = scmp.ne.s32.totalorder %s120, %s134
      %p136 = scmp.eq.s32.totalorder %s26, 0
      %p137 = por %p135, %p136
      %s139 = sadd.s32 %s138, 1
      %p142 = scmp.eq.s32.totalorder %s20, 1
      %p143 = scmp.ne.s32.totalorder %s138, %s140
      %p144 = scmp.eq.s32.totalorder %s20, 0
      %p145 = por %p143, %p144
      %p146 = scmp.ne.s32.totalorder %s138, %s140
      %p147 = scmp.eq.s32.totalorder %s25, 1
      %p148 = por %p146, %p147
      %p149 = scmp.ne.s32.totalorder %s140, %s141
      %p150 = scmp.eq.s32.totalorder %s25, 0
      %p151 = por %p149, %p150
      %p152 = scmp.ne.s32.totalorder %s140, %s141
      %p153 = scmp.eq.s32.totalorder %s26, 1
      %p154 = por %p152, %p153
      %p156 = scmp.ne.s32.totalorder %s141, %s155
      %p157 = scmp.eq.s32.totalorder %s26, 0
      %p158 = por %p156, %p157
      %s160 = sadd.s32 %s159, 1
      %p163 = scmp.eq.s32.totalorder %s20, 1
      %p164 = scmp.ne.s32.totalorder %s159, %s161
      %p165 = scmp.eq.s32.totalorder %s20, 0
      %p166 = por %p164, %p165
      %p167 = scmp.ne.s32.totalorder %s159, %s161
      %p168 = scmp.eq.s32.totalorder %s25, 1
      %p169 = por %p167, %p168
      %p170 = scmp.ne.s32.totalorder %s161, %s162
      %p171 = scmp.eq.s32.totalorder %s25, 0
      %p172 = por %p170, %p171
      %p173 = scmp.ne.s32.totalorder %s161, %s162
      %p174 = scmp.eq.s32.totalorder %s26, 1
      %p175 = por %p173, %p174
      %p177 = scmp.ne.s32.totalorder %s162, %s176
      %p178 = scmp.eq.s32.totalorder %s26, 0
      %p179 = por %p177, %p178
      %s181 = sadd.s32 %s180, 1
      %p184 = scmp.eq.s32.totalorder %s20, 1
      %p185 = scmp.ne.s32.totalorder %s180, %s182
      %p186 = scmp.eq.s32.totalorder %s20, 0
      %p187 = por %p185, %p186
      %p188 = scmp.ne.s32.totalorder %s180, %s182
      %p189 = scmp.eq.s32.totalorder %s25, 1
      %p190 = por %p188, %p189
      %p191 = scmp.ne.s32.totalorder %s182, %s183
      %p192 = scmp.eq.s32.totalorder %s25, 0
      %p193 = por %p191, %p192
      %p194 = scmp.ne.s32.totalorder %s182, %s183
      %p195 = scmp.eq.s32.totalorder %s26, 1
      %p196 = por %p194, %p195
      %p198 = scmp.ne.s32.totalorder %s183, %s197
      %p199 = scmp.eq.s32.totalorder %s26, 0
      %p200 = por %p198, %p199
      %s202 = sadd.s32 %s201, 1
      %p205 = scmp.eq.s32.totalorder %s20, 1
      %p206 = scmp.ne.s32.totalorder %s201, %s203
      %p207 = scmp.eq.s32.totalorder %s20, 0
      %p208 = por %p206, %p207
      %p209 = scmp.ne.s32.totalorder %s201, %s203
      %p210 = scmp.eq.s32.totalorder %s25, 1
      %p211 = por %p209, %p210
      %p212 = scmp.ne.s32.totalorder %s203, %s204
      %p213 = scmp.eq.s32.totalorder %s25, 0
      %p214 = por %p212, %p213
      %p215 = scmp.ne.s32.totalorder %s203, %s204
      %p216 = scmp.eq.s32.totalorder %s26, 1
      %p217 = por %p215, %p216
      %p219 = scmp.ne.s32.totalorder %s204, %s218
      %p220 = scmp.eq.s32.totalorder %s26, 0
      %p221 = por %p219, %p220
      %s222 = ssub.s32 %s20, %s27
      %p223 = scmp.eq.s32.totalorder %s222, 0
      %s225 = sadd.s32 %s224, 1
      %s226 = scalar_select %p223, %s224, %s225
      %p229 = pneg %p223
      %p230 = scmp.eq.s32.totalorder %s20, 1
      %p231 = por %p229, %p230
      %p232 = scmp.ne.s32.totalorder %s224, %s227
      %p233 = scmp.eq.s32.totalorder %s20, 0
      %p234 = por %p232, %p233
      %p235 = scmp.ne.s32.totalorder %s224, %s227
      %p236 = scmp.eq.s32.totalorder %s25, 1
      %p237 = por %p235, %p236
      %p238 = scmp.ne.s32.totalorder %s227, %s228
      %p239 = scmp.eq.s32.totalorder %s25, 0
      %p240 = por %p238, %p239
      %p241 = scmp.ne.s32.totalorder %s227, %s228
      %p242 = scmp.eq.s32.totalorder %s26, 1
      %p243 = por %p241, %p242
      %p245 = scmp.ne.s32.totalorder %s228, %s244
      %p246 = scmp.eq.s32.totalorder %s26, 0
      %p247 = por %p245, %p246
      %s249 = sadd.s32 %s248, 1
      %p252 = scmp.eq.s32.totalorder %s20, 1
      %p253 = scmp.ne.s32.totalorder %s248, %s250
      %p254 = scmp.eq.s32.totalorder %s20, 0
      %p255 = por %p253, %p254
      %p256 = scmp.ne.s32.totalorder %s248, %s250
      %p257 = scmp.eq.s32.totalorder %s25, 1
      %p258 = por %p256, %p257
      %p259 = scmp.ne.s32.totalorder %s250, %s251
      %p260 = scmp.eq.s32.totalorder %s25, 0
      %p261 = por %p259, %p260
      %p262 = scmp.ne.s32.totalorder %s250, %s251
      %p263 = scmp.eq.s32.totalorder %s26, 1
      %p264 = por %p262, %p263
      %p266 = scmp.ne.s32.totalorder %s251, %s265
      %p267 = scmp.eq.s32.totalorder %s26, 0
      %p268 = por %p266, %p267
      %s270 = sadd.s32 %s269, 1
      %p273 = scmp.eq.s32.totalorder %s20, 1
      %p274 = scmp.ne.s32.totalorder %s269, %s271
      %p275 = scmp.eq.s32.totalorder %s20, 0
      %p276 = por %p274, %p275
      %p277 = scmp.ne.s32.totalorder %s269, %s271
      %p278 = scmp.eq.s32.totalorder %s25, 1
      %p279 = por %p277, %p278
      %p280 = scmp.ne.s32.totalorder %s271, %s272
      %p281 = scmp.eq.s32.totalorder %s25, 0
      %p282 = por %p280, %p281
      %p283 = scmp.ne.s32.totalorder %s271, %s272
      %p284 = scmp.eq.s32.totalorder %s26, 1
      %p285 = por %p283, %p284
      %p287 = scmp.ne.s32.totalorder %s272, %s286
      %p288 = scmp.eq.s32.totalorder %s26, 0
      %p289 = por %p287, %p288
      %s290 = ssub.s32 %s20, %s27
      %p291 = scmp.eq.s32.totalorder %s290, 0
      %s293 = sadd.s32 %s292, 1
      %s294 = scalar_select %p291, %s292, %s293
      %p297 = pneg %p291
      %p298 = scmp.eq.s32.totalorder %s20, 1
      %p299 = por %p297, %p298
      %p300 = scmp.ne.s32.totalorder %s292, %s295
      %p301 = scmp.eq.s32.totalorder %s20, 0
      %p302 = por %p300, %p301
      %p303 = scmp.ne.s32.totalorder %s292, %s295
      %p304 = scmp.eq.s32.totalorder %s25, 1
      %p305 = por %p303, %p304
      %p306 = scmp.ne.s32.totalorder %s295, %s296
      %p307 = scmp.eq.s32.totalorder %s25, 0
      %p308 = por %p306, %p307
      %p309 = scmp.ne.s32.totalorder %s295, %s296
      %p310 = scmp.eq.s32.totalorder %s26, 1
      %p311 = por %p309, %p310
      %p313 = scmp.ne.s32.totalorder %s296, %s312
      %p314 = scmp.eq.s32.totalorder %s26, 0
      %p315 = por %p313, %p314
      %s316 = ssub.s32 %s20, %s27
      %p317 = scmp.eq.s32.totalorder %s316, 0
      %s319 = sadd.s32 %s318, 1
      %s320 = scalar_select %p317, %s318, %s319
      %p323 = pneg %p317
      %p324 = scmp.eq.s32.totalorder %s20, 1
      %p325 = por %p323, %p324
      %p326 = scmp.ne.s32.totalorder %s318, %s321
      %p327 = scmp.eq.s32.totalorder %s20, 0
      %p328 = por %p326, %p327
      %p329 = scmp.ne.s32.totalorder %s318, %s321
      %p330 = scmp.eq.s32.totalorder %s25, 1
      %p331 = por %p329, %p330
      %p332 = scmp.ne.s32.totalorder %s321, %s322
      %p333 = scmp.eq.s32.totalorder %s25, 0
      %p334 = por %p332, %p333
      %p335 = scmp.ne.s32.totalorder %s321, %s322
      %p336 = scmp.eq.s32.totalorder %s26, 1
      %p337 = por %p335, %p336
      %p339 = scmp.ne.s32.totalorder %s322, %s338
      %p340 = scmp.eq.s32.totalorder %s26, 0
      %p341 = por %p339, %p340
      %p342 = scmp.le.s32.totalorder 1, %s20
      %p343 = scmp.lt.s32.totalorder %s20, 3
      %p344 = pnand %p342, %p343
      %p345 = pneg %p344
      // Predicated region
      $region9: #{encoder_layer_forward.3} parent=5 // pred_check
        _
      $region10: #{encoder_layer_forward.3} parent=5 // pred_check_branch
        %347 = sbr.rel (%p344) target = $region12
      $region11: #{encoder_layer_forward.3} parent=5 // pred_region
        %s348 = ssub.s32 %s20, 1
        // Predicated region
        $region13: #{encoder_layer_forward.3} parent=11 // pred_check
          %p349 = pneg %p67
        $region14: #{encoder_layer_forward.3} parent=11 // pred_check_branch
          %351 = sbr.rel (%p349) target = $region16
        $region15: #{encoder_layer_forward.3} parent=11 // pred_region
          _
        $region16: #{encoder_layer_forward.3} parent=11 // pred_fallthru
          _
        // Predicated region
        $region17: #{encoder_layer_forward.3} parent=11 // pred_check
          %p352 = pneg %p88
        $region18: #{encoder_layer_forward.3} parent=11 // pred_check_branch
          %354 = sbr.rel (%p352) target = $region20
        $region19: #{encoder_layer_forward.3} parent=11 // pred_region
          _
        $region20: #{encoder_layer_forward.3} parent=11 // pred_fallthru
          _
        // Predicated region
        $region21: #{encoder_layer_forward.3} parent=11 // pred_check
          %p355 = pneg %p109
        $region22: #{encoder_layer_forward.3} parent=11 // pred_check_branch
          %357 = sbr.rel (%p355) target = $region24
        $region23: #{encoder_layer_forward.3} parent=11 // pred_region
          _
        $region24: #{encoder_layer_forward.3} parent=11 // pred_fallthru
          _
        // Predicated region
        $region25: #{encoder_layer_forward.3} parent=11 // pred_check
          %p358 = pneg %p130
        $region26: #{encoder_layer_forward.3} parent=11 // pred_check_branch
          %360 = sbr.rel (%p358) target = $region28
        $region27: #{encoder_layer_forward.3} parent=11 // pred_region
          _
        $region28: #{encoder_layer_forward.3} parent=11 // pred_fallthru
          _
        // Predicated region
        $region29: #{encoder_layer_forward.3} parent=11 // pred_check
          %p361 = pneg %p151
        $region30: #{encoder_layer_forward.3} parent=11 // pred_check_branch
          %363 = sbr.rel (%p361) target = $region32
        $region31: #{encoder_layer_forward.3} parent=11 // pred_region
          _
        $region32: #{encoder_layer_forward.3} parent=11 // pred_fallthru
          _
        // Predicated region
        $region33: #{encoder_layer_forward.3} parent=11 // pred_check
          %p364 = pneg %p172
        $region34: #{encoder_layer_forward.3} parent=11 // pred_check_branch
          %366 = sbr.rel (%p364) target = $region36
        $region35: #{encoder_layer_forward.3} parent=11 // pred_region
          _
        $region36: #{encoder_layer_forward.3} parent=11 // pred_fallthru
          _
        // Predicated region
        $region37: #{encoder_layer_forward.3} parent=11 // pred_check
          %p367 = pneg %p193
        $region38: #{encoder_layer_forward.3} parent=11 // pred_check_branch
          %369 = sbr.rel (%p367) target = $region40
        $region39: #{encoder_layer_forward.3} parent=11 // pred_region
          _
        $region40: #{encoder_layer_forward.3} parent=11 // pred_fallthru
          _
        // Predicated region
        $region41: #{encoder_layer_forward.3} parent=11 // pred_check
          %p370 = pneg %p214
        $region42: #{encoder_layer_forward.3} parent=11 // pred_check_branch
          %372 = sbr.rel (%p370) target = $region44
        $region43: #{encoder_layer_forward.3} parent=11 // pred_region
          _
        $region44: #{encoder_layer_forward.3} parent=11 // pred_fallthru
          _
        // Predicated region
        $region45: #{encoder_layer_forward.3} parent=11 // pred_check
          %p373 = pneg %p261
        $region46: #{encoder_layer_forward.3} parent=11 // pred_check_branch
          %375 = sbr.rel (%p373) target = $region48
        $region47: #{encoder_layer_forward.3} parent=11 // pred_region
          _
        $region48: #{encoder_layer_forward.3} parent=11 // pred_fallthru
          _
        // Predicated region
        $region49: #{encoder_layer_forward.3} parent=11 // pred_check
          %p376 = pneg %p282
        $region50: #{encoder_layer_forward.3} parent=11 // pred_check_branch
          %378 = sbr.rel (%p376) target = $region52
        $region51: #{encoder_layer_forward.3} parent=11 // pred_region
          _
        $region52: #{encoder_layer_forward.3} parent=11 // pred_fallthru
          _
      $region12: #{encoder_layer_forward.3} parent=5 // pred_fallthru
        _
      %p379 = scmp.lt.s32.totalorder %s20, 2
      // Predicated region
      $region53: #{encoder_layer_forward.3} parent=5 // pred_check
        %p380 = pneg %p379
      $region54: #{encoder_layer_forward.3} parent=5 // pred_check_branch
        %382 = sbr.rel (%p380) target = $region56
      $region55: #{encoder_layer_forward.3} parent=5 // pred_region
        // Predicated region
        $region57: #{encoder_layer_forward.3} parent=55 // pred_check
          %p383 = pneg %p40
        $region58: #{encoder_layer_forward.3} parent=55 // pred_check_branch
          %385 = sbr.rel (%p383) target = $region60
        $region59: #{encoder_layer_forward.3} parent=55 // pred_region
          %s386 = smul.u32 16, %s20
          %p387 = scmp.lt.s32.totalorder %s386, 31
          %s388 = scalar_select %p387, %s386, 31
          %s389 = smul.addr %s388, 8
          %s390 = scalar_lea.vmem %s0, %s389
          %s391 = smul.u32 16, %s20
        $region60: #{encoder_layer_forward.3} parent=55 // pred_fallthru
          _
        // Predicated region
        $region61: #{encoder_layer_forward.3} parent=55 // pred_check
          %p392 = pneg %p234
        $region62: #{encoder_layer_forward.3} parent=55 // pred_check_branch
          %394 = sbr.rel (%p392) target = $region64
        $region63: #{encoder_layer_forward.3} parent=55 // pred_region
          %s395 = sand.u32 %s224, 1
          %s396 = sand.u32 %s224, 1
          %s397 = smul.addr %s396, 32
          %s398 = scalar_lea.vmem [#allocation2], %s397
          %s399 = smul.addr %s20, 8
          %s400 = scalar_lea.vmem %s9, %s399
          // Predicated region
          $region65: #{encoder_layer_forward.3} parent=63 // pred_check
            _
          $region66: #{encoder_layer_forward.3} parent=63 // pred_check_branch
            %402 = sbr.rel (0) target = $region68
          $region67: #{encoder_layer_forward.3} parent=63 // pred_region
            // Predicated region
            $region69: #{encoder_layer_forward.3} parent=67 // pred_check
              _
            $region70: #{encoder_layer_forward.3} parent=67 // pred_check_branch
              %404 = sbr.rel (0) target = $region72
            $region71: #{encoder_layer_forward.3} parent=67 // pred_region
              // Predicated region
              $region84: #{encoder_layer_forward.3} parent=71 // pred_check
                _
              $region85: #{encoder_layer_forward.3} parent=71 // pred_check_branch
                %426 = sbr.rel (0) target = $region87
              $region86: #{encoder_layer_forward.3} parent=71 // pred_region
                loop: start=0, step=1, limit=1
                $region88: #{encoder_layer_forward.3} parent=86 // loop_pre_header
                  _
                $region89: #{encoder_layer_forward.3} parent=86 // loop_header
                  %s428 = sphi 0, %s432
                  %p429 = scmp.ge.s32.totalorder %s428, 1
                  %s433 = sphi %s400, %s400
                  %s434 = sphi %s398, %s398
                $region90: #{encoder_layer_forward.3} parent=86 // loop_header_branch
                  %431 = sbr.rel (%p429) target = $region94
                $region91: #{encoder_layer_forward.3} parent=86 // loop_body
                  %v435 = vld [vmem:[%s433] sm:$0xff]
                  %436 = vst [vmem:[%s434] sm:$0xff] %v435
                  %v437 = vld [vmem:[%s433 + $0x10] sm:$0xff]
                  %438 = vst [vmem:[%s434 + $0x8] sm:$0xff] %v437
                  %v439 = vld [vmem:[%s433 + $0x20] sm:$0xff]
                  %440 = vst [vmem:[%s434 + $0x10] sm:$0xff] %v439
                  %v441 = vld [vmem:[%s433 + $0x30] sm:$0xff]
                  %442 = vst [vmem:[%s434 + $0x18] sm:$0xff] %v441
                $region92: #{encoder_layer_forward.3} parent=86 // loop_footer
                  %s432 = sadd.s32 1, %s428
                $region93: #{encoder_layer_forward.3} parent=86 // loop_footer_branch
                  %427 = sbr.rel target = $region89
                $region94: #{encoder_layer_forward.3} parent=86 // loop_exit
                  _
              $region87: #{encoder_layer_forward.3} parent=71 // pred_fallthru
                _
              // Predicated region
              $region95: #{encoder_layer_forward.3} parent=71 // pred_check
                _
              $region96: #{encoder_layer_forward.3} parent=71 // pred_check_branch
                %444 = sbr.rel target = $region98
              $region97: #{encoder_layer_forward.3} parent=71 // pred_region
                _
              $region98: #{encoder_layer_forward.3} parent=71 // pred_fallthru
                _
            $region72: #{encoder_layer_forward.3} parent=67 // pred_fallthru
              _
            // Predicated region
            $region73: #{encoder_layer_forward.3} parent=67 // pred_check
              _
            $region74: #{encoder_layer_forward.3} parent=67 // pred_check_branch
              %406 = sbr.rel target = $region76
            $region75: #{encoder_layer_forward.3} parent=67 // pred_region
              %s408 = ssub.s32 256, 1
              loop: start=0, step=1, limit=1
              $region77: #{encoder_layer_forward.3} parent=75 // loop_pre_header
                _
              $region78: #{encoder_layer_forward.3} parent=75 // loop_header
                %s410 = sphi 0, %s414
                %p411 = scmp.ge.s32.totalorder %s410, 1
                %s415 = sphi %s400, %s400
                %s416 = sphi %s398, %s398
              $region79: #{encoder_layer_forward.3} parent=75 // loop_header_branch
                %413 = sbr.rel (%p411) target = $region83
              $region80: #{encoder_layer_forward.3} parent=75 // loop_body
                %v417 = vld [vmem:[%s415] sm:%s408]
                %418 = vst [vmem:[%s416] sm:%s408] %v417
                %v419 = vld [vmem:[%s415 + $0x10] sm:%s408]
                %420 = vst [vmem:[%s416 + $0x8] sm:%s408] %v419
                %v421 = vld [vmem:[%s415 + $0x20] sm:%s408]
                %422 = vst [vmem:[%s416 + $0x10] sm:%s408] %v421
                %v423 = vld [vmem:[%s415 + $0x30] sm:%s408]
                %424 = vst [vmem:[%s416 + $0x18] sm:%s408] %v423
              $region81: #{encoder_layer_forward.3} parent=75 // loop_footer
                %s414 = sadd.s32 1, %s410
              $region82: #{encoder_layer_forward.3} parent=75 // loop_footer_branch
                %409 = sbr.rel target = $region78
              $region83: #{encoder_layer_forward.3} parent=75 // loop_exit
                _
            $region76: #{encoder_layer_forward.3} parent=67 // pred_fallthru
              _
          $region68: #{encoder_layer_forward.3} parent=63 // pred_fallthru
            _
          %445 = vnop
        $region64: #{encoder_layer_forward.3} parent=55 // pred_fallthru
          _
      $region56: #{encoder_layer_forward.3} parent=5 // pred_fallthru
        _
      %p446 = scmp.le.s32.totalorder 1, %s20
      %p447 = scmp.lt.s32.totalorder %s20, 3
      %p448 = pnand %p446, %p447
      %p449 = pneg %p448
      // Predicated region
      $region99: #{encoder_layer_forward.3} parent=5 // pred_check
        _
      $region100: #{encoder_layer_forward.3} parent=5 // pred_check_branch
        %451 = sbr.rel (%p448) target = $region102
      $region101: #{encoder_layer_forward.3} parent=5 // pred_region
        %s452 = ssub.s32 %s20, 1
        %s453 = sand.u32 %s227, 1
        %s454 = sand.u32 %s227, 1
        %s455 = smul.addr %s454, 32
        %s456 = scalar_lea.vmem [#allocation2], %s455
        // Predicated region
        $region103: #{encoder_layer_forward.3} parent=101 // pred_check
          %p457 = pneg %p240
        $region104: #{encoder_layer_forward.3} parent=101 // pred_check_branch
          %459 = sbr.rel (%p457) target = $region106
        $region105: #{encoder_layer_forward.3} parent=101 // pred_region
          _
        $region106: #{encoder_layer_forward.3} parent=101 // pred_fallthru
          _
        %s460 = smul.u32 16, %s25
        %p461 = scmp.lt.s32.totalorder %s460, 31
        %s462 = scalar_select %p461, %s460, 31
        %s463 = smul.addr %s462, 8
        %s464 = scalar_lea.vmem %s0, %s463
        %p465 = pneg %p46
        %p466 = pneg %p43
        %p467 = pneg %p67
        %p468 = pneg %p64
        %p469 = pneg %p88
        %p470 = pneg %p85
        %p471 = pneg %p109
        %p472 = pneg %p106
        %p473 = pneg %p130
        %p474 = pneg %p127
        %p475 = pneg %p151
        %p476 = pneg %p148
        %p477 = pneg %p172
        %p478 = pneg %p169
        %p479 = pneg %p193
        %p480 = pneg %p190
        %p481 = pneg %p214
        %p482 = pneg %p211
        %s483 = sand.u32 %s227, 1
        %s484 = sand.u32 %s227, 1
        %s485 = smul.addr %s484, 32
        %s486 = scalar_lea.vmem [#allocation2], %s485
        %p487 = pneg %p240
        %p488 = pneg %p237
        %p489 = pneg %p261
        %p490 = pneg %p258
        %p491 = pneg %p282
        %p492 = pneg %p279
        %p493 = pneg %p308
        %p494 = pneg %p305
        %s495 = smul.u32 16, %s25
        %p496 = scmp.lt.s32.totalorder %s495, 31
        %s497 = scalar_select %p496, %s495, 31
        %s498 = smul.addr %s497, 8
        %s499 = scalar_lea.vmem %s12, %s498
        %p500 = pneg %p334
        %p501 = pneg %p331
        %s502 = sand.u32 %s321, 1
        %s503 = sand.u32 %s321, 1
        %s504 = smul.addr %s503, 32
        %s505 = scalar_lea.vmem [#allocation3], %s504
        %s506 = smul.u32 16, %s25
        %p507 = scmp.lt.s32.totalorder %s506, 31
        %s508 = scalar_select %p507, %s506, 31
        %s509 = smul.addr %s508, 8
        %s510 = scalar_lea.vmem %s0, %s509
        %s511 = smul.u32 16, %s25
        %s512 = smul.u32 16, %s25
        %p513 = scmp.lt.s32.totalorder %s512, 31
        %s514 = scalar_select %p513, %s512, 31
        %s515 = smul.addr %s514, 8
        %s516 = scalar_lea.vmem %s12, %s515
        %s517 = smul.u32 16, %s25
        %v518 = vld [vmem:[%s510] sm:$0xff]
        %v519 = vld [vmem:[%s510 + $0x8] sm:$0xff]
        %v520 = vld [vmem:[%s510 + $0x10] sm:$0xff]
        %v521 = vld [vmem:[%s510 + $0x18] sm:$0xff]
        %v522 = vld [vmem:[%s510 + $0x20] sm:$0xff]
        %v523 = vld [vmem:[%s510 + $0x28] sm:$0xff]
        %v524 = vld [vmem:[%s510 + $0x30] sm:$0xff]
        %v525 = vld [vmem:[%s510 + $0x38] sm:$0xff]
        %v526 = vld [vmem:[%s510 + $0x40] sm:$0xff]
        %v527 = vld [vmem:[%s510 + $0x48] sm:$0xff]
        %v528 = vld [vmem:[%s510 + $0x50] sm:$0xff]
        %v529 = vld [vmem:[%s510 + $0x58] sm:$0xff]
        %v530 = vld [vmem:[%s510 + $0x60] sm:$0xff]
        %v531 = vld [vmem:[%s510 + $0x68] sm:$0xff]
        %v532 = vld [vmem:[%s510 + $0x70] sm:$0xff]
        %v533 = vld [vmem:[%s510 + $0x78] sm:$0xff]
        %v534 = vld [vmem:[%s2] sm:$0x1f]
        %s535 = smul.u32 %s25, 128
        %v536 = vlaneseq
        %v537 = vshrl.u32 %v536, 7
        %v538 = vadd.s32 %v537, 8
        %v539 = vadd.s32 %v537, 16
        %v540 = vadd.s32 %v537, 24
        %v541 = vadd.s32 %v537, 32
        %v542 = vadd.s32 %v537, 40
        %v543 = vadd.s32 %v537, 48
        %v544 = vadd.s32 %v537, 56
        %v545 = vadd.s32 %v537, 64
        %v546 = vadd.s32 %v537, 72
        %v547 = vadd.s32 %v537, 80
        %v548 = vadd.s32 %v537, 88
        %v549 = vadd.s32 %v537, 96
        %v550 = vadd.s32 %v537, 104
        %v551 = vadd.s32 %v537, 112
        %v552 = vadd.s32 %v537, 120
        %v553 = vstv %s535
        %v554 = vadd.s32 %v553, %v537
        %v555 = vadd.s32 %v553, %v538
        %v556 = vadd.s32 %v553, %v539
        %v557 = vadd.s32 %v553, %v540
        %v558 = vadd.s32 %v553, %v541
        %v559 = vadd.s32 %v553, %v542
        %v560 = vadd.s32 %v553, %v543
        %v561 = vadd.s32 %v553, %v544
        %v562 = vadd.s32 %v553, %v545
        %v563 = vadd.s32 %v553, %v546
        %v564 = vadd.s32 %v553, %v547
        %v565 = vadd.s32 %v553, %v548
        %v566 = vadd.s32 %v553, %v549
        %v567 = vadd.s32 %v553, %v550
        %v568 = vadd.s32 %v553, %v551
        %v569 = vadd.s32 %v553, %v552
        %v570 = vld [vmem:[%s1] sm:$0x1]
        %v571 = vlaneseq
        %v572 = vshrl.u32 %v571, 7
        %v573 = vsub.s32 0, %v572
        %v574 = vrot.slane %v570, %v573
        %vm575 = vcmp.eq.s32.totalorder %v554, %v574
        %vm576 = vcmp.eq.s32.totalorder %v555, %v574
        %vm577 = vcmp.eq.s32.totalorder %v556, %v574
        %vm578 = vcmp.eq.s32.totalorder %v557, %v574
        %vm579 = vcmp.eq.s32.totalorder %v558, %v574
        %vm580 = vcmp.eq.s32.totalorder %v559, %v574
        %vm581 = vcmp.eq.s32.totalorder %v560, %v574
        %vm582 = vcmp.eq.s32.totalorder %v561, %v574
        %vm583 = vcmp.eq.s32.totalorder %v562, %v574
        %vm584 = vcmp.eq.s32.totalorder %v563, %v574
        %vm585 = vcmp.eq.s32.totalorder %v564, %v574
        %vm586 = vcmp.eq.s32.totalorder %v565, %v574
        %vm587 = vcmp.eq.s32.totalorder %v566, %v574
        %vm588 = vcmp.eq.s32.totalorder %v567, %v574
        %vm589 = vcmp.eq.s32.totalorder %v568, %v574
        %vm590 = vcmp.eq.s32.totalorder %v569, %v574
        %v591 = vsel %vm575, 1, 0
        %v592 = vsel %vm576, 1, 0
        %v593 = vsel %vm577, 1, 0
        %v594 = vsel %vm578, 1, 0
        %v595 = vsel %vm579, 1, 0
        %v596 = vsel %vm580, 1, 0
        %v597 = vsel %vm581, 1, 0
        %v598 = vsel %vm582, 1, 0
        %v599 = vsel %vm583, 1, 0
        %v600 = vsel %vm584, 1, 0
        %v601 = vsel %vm585, 1, 0
        %v602 = vsel %vm586, 1, 0
        %v603 = vsel %vm587, 1, 0
        %v604 = vsel %vm588, 1, 0
        %v605 = vsel %vm589, 1, 0
        %v606 = vsel %vm590, 1, 0
        %v607 = vcvt.s32.f32 %v591
        %v608 = vcvt.s32.f32 %v592
        %v609 = vcvt.s32.f32 %v593
        %v610 = vcvt.s32.f32 %v594
        %v611 = vcvt.s32.f32 %v595
        %v612 = vcvt.s32.f32 %v596
        %v613 = vcvt.s32.f32 %v597
        %v614 = vcvt.s32.f32 %v598
        %v615 = vcvt.s32.f32 %v599
        %v616 = vcvt.s32.f32 %v600
        %v617 = vcvt.s32.f32 %v601
        %v618 = vcvt.s32.f32 %v602
        %v619 = vcvt.s32.f32 %v603
        %v620 = vcvt.s32.f32 %v604
        %v621 = vcvt.s32.f32 %v605
        %v622 = vcvt.s32.f32 %v606
        %vm623 = vcmask 39936
        %v625 = vsel %vm623, %v607, 0
        %v628 = vsel %vm623, %v608, 0
        %v631 = vsel %vm623, %v609, 0
        %v634 = vsel %vm623, %v610, 0
        %v637 = vsel %vm623, %v611, 0
        %v640 = vsel %vm623, %v612, 0
        %v643 = vsel %vm623, %v613, 0
        %v646 = vsel %vm623, %v614, 0
        %v649 = vsel %vm623, %v615, 0
        %v652 = vsel %vm623, %v616, 0
        %v655 = vsel %vm623, %v617, 0
        %v658 = vsel %vm623, %v618, 0
        %v661 = vsel %vm623, %v619, 0
        %v664 = vsel %vm623, %v620, 0
        %v667 = vsel %vm623, %v621, 0
        %v670 = vsel %vm623, %v622, 0
        %vm672 = vcmask 1044480
        %v674 = vsel %vm672, %v534, 0
        %676 = vmatprep.subr.mxu0 0.0
        %677 = vmatpush1.msra.mxu0 0.0
        %678 = vmatprep.subr.mxu0 0.0
        %679 = vmatpush1.msra.mxu0 0.0
        %680 = vmatprep.subr.mxu0 0.0
        %681 = vmatpush1.msra.mxu0 0.0
        %682 = vmatprep.subr.mxu0 0.0
        %683 = vmatpush1.msra.mxu0 0.0
        %684 = vmatprep.subr.mxu0 0.0
        %685 = vmatpush1.msra.mxu0 0.0
        %686 = vmatprep.subr.mxu0 0.0
        %687 = vmatpush1.msra.mxu0 0.0
        %688 = vmatprep.subr.mxu0 0.0
        %689 = vmatpush1.msra.mxu0 0.0
        %690 = vmatprep.subr.mxu0 0.0
        %691 = vmatpush1.msra.mxu0 0.0
        %692 = vmatprep.subr.mxu0 0.0
        %693 = vmatpush1.msra.mxu0 0.0
        %694 = vmatprep.subr.mxu0 0.0
        %695 = vmatpush1.msra.mxu0 0.0
        %696 = vmatprep.subr.mxu0 0.0
        %697 = vmatpush1.msra.mxu0 0.0
        %698 = vmatprep.subr.mxu0 0.0
        %699 = vmatpush1.msra.mxu0 0.0
        %700 = vmatprep.subr.mxu0 0.0
        %701 = vmatpush1.msra.mxu0 0.0
        %702 = vmatprep.subr.mxu0 0.0
        %703 = vmatpush1.msra.mxu0 0.0
        %704 = vmatprep.subr.mxu0 0.0
        %705 = vmatpush1.msra.mxu0 0.0
        %706 = vmatprep.subr.mxu0 0.0
        %707 = vmatpush1.msra.mxu0 %v674
        %708 = vmatprep.subr.mxu0 0.0
        %709 = vmatpush2.msra.mxu0 0.0
        %710 = vmatprep.subr.mxu0 0.0
        %711 = vmatpush2.msra.mxu0 0.0
        %712 = vmatprep.subr.mxu0 0.0
        %713 = vmatpush2.msra.mxu0 0.0
        %714 = vmatprep.subr.mxu0 0.0
        %715 = vmatpush2.msra.mxu0 0.0
        %716 = vmatprep.subr.mxu0 0.0
        %717 = vmatpush2.msra.mxu0 0.0
        %718 = vmatprep.subr.mxu0 0.0
        %719 = vmatpush2.msra.mxu0 0.0
        %720 = vmatprep.subr.mxu0 0.0
        %721 = vmatpush2.msra.mxu0 0.0
        %722 = vmatprep.subr.mxu0 0.0
        %723 = vmatpush2.msra.mxu0 0.0
        %724 = vmatprep.subr.mxu0 0.0
        %725 = vmatpush2.msra.mxu0 0.0
        %726 = vmatprep.subr.mxu0 0.0
        %727 = vmatpush2.msra.mxu0 0.0
        %728 = vmatprep.subr.mxu0 0.0
        %729 = vmatpush2.msra.mxu0 0.0
        %730 = vmatprep.subr.mxu0 0.0
        %731 = vmatpush2.msra.mxu0 0.0
        %732 = vmatprep.subr.mxu0 0.0
        %733 = vmatpush2.msra.mxu0 0.0
        %734 = vmatprep.subr.mxu0 0.0
        %735 = vmatpush2.msra.mxu0 0.0
        %736 = vmatprep.subr.mxu0 0.0
        %737 = vmatpush2.msra.mxu0 0.0
        %738 = vmatprep.subr.mxu0 0.0
        %739 = vmatpush2.msra.mxu0 0.0
        %740 = vmatprep.mubr.f32.mxu0 0.0
        %741 = vmatmul.mubr.f32.gmra.mxu0 %v625
        %v742 = vpop.f32.mrf.mxu0
        %v743 = vadd.f32 0.0, %v742
        %v744 = vpop.f32.mrf.mxu0
        %745 = vmatprep.mubr.f32.mxu0 0.0
        %746 = vmatmul.mubr.f32.gmra.mxu0 %v628
        %v747 = vpop.f32.mrf.mxu0
        %v748 = vadd.f32 0.0, %v747
        %v749 = vpop.f32.mrf.mxu0
        %750 = vmatprep.mubr.f32.mxu0 0.0
        %751 = vmatmul.mubr.f32.gmra.mxu0 %v631
        %v752 = vpop.f32.mrf.mxu0
        %v753 = vadd.f32 0.0, %v752
        %v754 = vpop.f32.mrf.mxu0
        %755 = vmatprep.mubr.f32.mxu0 0.0
        %756 = vmatmul.mubr.f32.gmra.mxu0 %v634
        %v757 = vpop.f32.mrf.mxu0
        %v758 = vadd.f32 0.0, %v757
        %v759 = vpop.f32.mrf.mxu0
        %760 = vmatprep.mubr.f32.mxu0 0.0
        %761 = vmatmul.mubr.f32.gmra.mxu0 %v637
        %v762 = vpop.f32.mrf.mxu0
        %v763 = vadd.f32 0.0, %v762
        %v764 = vpop.f32.mrf.mxu0
        %765 = vmatprep.mubr.f32.mxu0 0.0
        %766 = vmatmul.mubr.f32.gmra.mxu0 %v640
        %v767 = vpop.f32.mrf.mxu0
        %v768 = vadd.f32 0.0, %v767
        %v769 = vpop.f32.mrf.mxu0
        %770 = vmatprep.mubr.f32.mxu0 0.0
        %771 = vmatmul.mubr.f32.gmra.mxu0 %v643
        %v772 = vpop.f32.mrf.mxu0
        %v773 = vadd.f32 0.0, %v772
        %v774 = vpop.f32.mrf.mxu0
        %775 = vmatprep.mubr.f32.mxu0 0.0
        %776 = vmatmul.mubr.f32.gmra.mxu0 %v646
        %v777 = vpop.f32.mrf.mxu0
        %v778 = vadd.f32 0.0, %v777
        %v779 = vpop.f32.mrf.mxu0
        %780 = vmatprep.mubr.f32.mxu0 0.0
        %781 = vmatmul.mubr.f32.gmra.mxu0 %v649
        %v782 = vpop.f32.mrf.mxu0
        %v783 = vadd.f32 0.0, %v782
        %v784 = vpop.f32.mrf.mxu0
        %785 = vmatprep.mubr.f32.mxu0 0.0
        %786 = vmatmul.mubr.f32.gmra.mxu0 %v652
        %v787 = vpop.f32.mrf.mxu0
        %v788 = vadd.f32 0.0, %v787
        %v789 = vpop.f32.mrf.mxu0
        %790 = vmatprep.mubr.f32.mxu0 0.0
        %791 = vmatmul.mubr.f32.gmra.mxu0 %v655
        %v792 = vpop.f32.mrf.mxu0
        %v793 = vadd.f32 0.0, %v792
        %v794 = vpop.f32.mrf.mxu0
        %795 = vmatprep.mubr.f32.mxu0 0.0
        %796 = vmatmul.mubr.f32.gmra.mxu0 %v658
        %v797 = vpop.f32.mrf.mxu0
        %v798 = vadd.f32 0.0, %v797
        %v799 = vpop.f32.mrf.mxu0
        %800 = vmatprep.mubr.f32.mxu0 0.0
        %801 = vmatmul.mubr.f32.gmra.mxu0 %v661
        %v802 = vpop.f32.mrf.mxu0
        %v803 = vadd.f32 0.0, %v802
        %v804 = vpop.f32.mrf.mxu0
        %805 = vmatprep.mubr.f32.mxu0 0.0
        %806 = vmatmul.mubr.f32.gmra.mxu0 %v664
        %v807 = vpop.f32.mrf.mxu0
        %v808 = vadd.f32 0.0, %v807
        %v809 = vpop.f32.mrf.mxu0
        %810 = vmatprep.mubr.f32.mxu0 0.0
        %811 = vmatmul.mubr.f32.gmra.mxu0 %v667
        %v812 = vpop.f32.mrf.mxu0
        %v813 = vadd.f32 0.0, %v812
        %v814 = vpop.f32.mrf.mxu0
        %815 = vmatprep.mubr.f32.mxu0 0.0
        %816 = vmatmul.mubr.f32.gmra.mxu0 %v670
        %v817 = vpop.f32.mrf.mxu0
        %v818 = vadd.f32 0.0, %v817
        %v819 = vpop.f32.mrf.mxu0
        %820 = vdwg.mxu0
        %v821 = vsel %vm623, %v607, 0.0
        %822 = vadd.xlane.f32.xlu0 %v821
        %v823 = vpop.xlane.xlu0 %822
        %v824 = vsel %vm623, %v608, 0.0
        %825 = vadd.xlane.f32.xlu0 %v824
        %v826 = vpop.xlane.xlu0 %825
        %v827 = vsel %vm623, %v609, 0.0
        %828 = vadd.xlane.f32.xlu0 %v827
        %v829 = vpop.xlane.xlu0 %828
        %v830 = vsel %vm623, %v610, 0.0
        %831 = vadd.xlane.f32.xlu0 %v830
        %v832 = vpop.xlane.xlu0 %831
        %v833 = vsel %vm623, %v611, 0.0
        %834 = vadd.xlane.f32.xlu0 %v833
        %v835 = vpop.xlane.xlu0 %834
        %v836 = vsel %vm623, %v612, 0.0
        %837 = vadd.xlane.f32.xlu0 %v836
        %v838 = vpop.xlane.xlu0 %837
        %v839 = vsel %vm623, %v613, 0.0
        %840 = vadd.xlane.f32.xlu0 %v839
        %v841 = vpop.xlane.xlu0 %840
        %v842 = vsel %vm623, %v614, 0.0
        %843 = vadd.xlane.f32.xlu0 %v842
        %v844 = vpop.xlane.xlu0 %843
        %v845 = vsel %vm623, %v615, 0.0
        %846 = vadd.xlane.f32.xlu0 %v845
        %v847 = vpop.xlane.xlu0 %846
        %v848 = vsel %vm623, %v616, 0.0
        %849 = vadd.xlane.f32.xlu0 %v848
        %v850 = vpop.xlane.xlu0 %849
        %v851 = vsel %vm623, %v617, 0.0
        %852 = vadd.xlane.f32.xlu0 %v851
        %v853 = vpop.xlane.xlu0 %852
        %v854 = vsel %vm623, %v618, 0.0
        %855 = vadd.xlane.f32.xlu0 %v854
        %v856 = vpop.xlane.xlu0 %855
        %v857 = vsel %vm623, %v619, 0.0
        %858 = vadd.xlane.f32.xlu0 %v857
        %v859 = vpop.xlane.xlu0 %858
        %v860 = vsel %vm623, %v620, 0.0
        %861 = vadd.xlane.f32.xlu0 %v860
        %v862 = vpop.xlane.xlu0 %861
        %v863 = vsel %vm623, %v621, 0.0
        %864 = vadd.xlane.f32.xlu0 %v863
        %v865 = vpop.xlane.xlu0 %864
        %v866 = vsel %vm623, %v622, 0.0
        %867 = vadd.xlane.f32.xlu0 %v866
        %v868 = vpop.xlane.xlu0 %867
        %v869 = vsub.f32 1.0, %v823
        %v870 = vsub.f32 1.0, %v826
        %v871 = vsub.f32 1.0, %v829
        %v872 = vsub.f32 1.0, %v832
        %v873 = vsub.f32 1.0, %v835
        %v874 = vsub.f32 1.0, %v838
        %v875 = vsub.f32 1.0, %v841
        %v876 = vsub.f32 1.0, %v844
        %v877 = vsub.f32 1.0, %v847
        %v878 = vsub.f32 1.0, %v850
        %v879 = vsub.f32 1.0, %v853
        %v880 = vsub.f32 1.0, %v856
        %v881 = vsub.f32 1.0, %v859
        %v882 = vsub.f32 1.0, %v862
        %v883 = vsub.f32 1.0, %v865
        %v884 = vsub.f32 1.0, %v868
        %v885 = vmul.f32 %v518, %v869
        %v886 = vmul.f32 %v519, %v870
        %v887 = vmul.f32 %v520, %v871
        %v888 = vmul.f32 %v521, %v872
        %v889 = vmul.f32 %v522, %v873
        %v890 = vmul.f32 %v523, %v874
        %v891 = vmul.f32 %v524, %v875
        %v892 = vmul.f32 %v525, %v876
        %v893 = vmul.f32 %v526, %v877
        %v894 = vmul.f32 %v527, %v878
        %v895 = vmul.f32 %v528, %v879
        %v896 = vmul.f32 %v529, %v880
        %v897 = vmul.f32 %v530, %v881
        %v898 = vmul.f32 %v531, %v882
        %v899 = vmul.f32 %v532, %v883
        %v900 = vmul.f32 %v533, %v884
        %v901 = vadd.f32 %v885, %v743
        %v902 = vadd.f32 %v886, %v748
        %v903 = vadd.f32 %v887, %v753
        %v904 = vadd.f32 %v888, %v758
        %v905 = vadd.f32 %v889, %v763
        %v906 = vadd.f32 %v890, %v768
        %v907 = vadd.f32 %v891, %v773
        %v908 = vadd.f32 %v892, %v778
        %v909 = vadd.f32 %v893, %v783
        %v910 = vadd.f32 %v894, %v788
        %v911 = vadd.f32 %v895, %v793
        %v912 = vadd.f32 %v896, %v798
        %v913 = vadd.f32 %v897, %v803
        %v914 = vadd.f32 %v898, %v808
        %v915 = vadd.f32 %v899, %v813
        %v916 = vadd.f32 %v900, %v818
        %v917 = vld [vmem:[%s3] sm:$0x1]
        %v918 = vld [vmem:[%s4] sm:$0x1]
        %vm919 = vcmask 261120
        %v920 = vsel %vm919, %v901, 0.0
        %921 = vadd.xlane.f32.xlu0 %v920
        %v922 = vpop.xlane.xlu0 %921
        %v923 = vsel %vm919, %v902, 0.0
        %924 = vadd.xlane.f32.xlu0 %v923
        %v925 = vpop.xlane.xlu0 %924
        %v926 = vsel %vm919, %v903, 0.0
        %927 = vadd.xlane.f32.xlu0 %v926
        %v928 = vpop.xlane.xlu0 %927
        %v929 = vsel %vm919, %v904, 0.0
        %930 = vadd.xlane.f32.xlu0 %v929
        %v931 = vpop.xlane.xlu0 %930
        %v932 = vsel %vm919, %v905, 0.0
        %933 = vadd.xlane.f32.xlu0 %v932
        %v934 = vpop.xlane.xlu0 %933
        %v935 = vsel %vm919, %v906, 0.0
        %936 = vadd.xlane.f32.xlu0 %v935
        %v937 = vpop.xlane.xlu0 %936
        %v938 = vsel %vm919, %v907, 0.0
        %939 = vadd.xlane.f32.xlu0 %v938
        %v940 = vpop.xlane.xlu0 %939
        %v941 = vsel %vm919, %v908, 0.0
        %942 = vadd.xlane.f32.xlu0 %v941
        %v943 = vpop.xlane.xlu0 %942
        %v944 = vsel %vm919, %v909, 0.0
        %945 = vadd.xlane.f32.xlu0 %v944
        %v946 = vpop.xlane.xlu0 %945
        %v947 = vsel %vm919, %v910, 0.0
        %948 = vadd.xlane.f32.xlu0 %v947
        %v949 = vpop.xlane.xlu0 %948
        %v950 = vsel %vm919, %v911, 0.0
        %951 = vadd.xlane.f32.xlu0 %v950
        %v952 = vpop.xlane.xlu0 %951
        %v953 = vsel %vm919, %v912, 0.0
        %954 = vadd.xlane.f32.xlu0 %v953
        %v955 = vpop.xlane.xlu0 %954
        %v956 = vsel %vm919, %v913, 0.0
        %957 = vadd.xlane.f32.xlu0 %v956
        %v958 = vpop.xlane.xlu0 %957
        %v959 = vsel %vm919, %v914, 0.0
        %960 = vadd.xlane.f32.xlu0 %v959
        %v961 = vpop.xlane.xlu0 %960
        %v962 = vsel %vm919, %v915, 0.0
        %963 = vadd.xlane.f32.xlu0 %v962
        %v964 = vpop.xlane.xlu0 %963
        %v965 = vsel %vm919, %v916, 0.0
        %966 = vadd.xlane.f32.xlu0 %v965
        %v967 = vpop.xlane.xlu0 %966
        %v968 = vrcp.pop 32.0
        %v969 = vmul.f32 %v922, %v968
        %v970 = vmul.f32 %v925, %v968
        %v971 = vmul.f32 %v928, %v968
        %v972 = vmul.f32 %v931, %v968
        %v973 = vmul.f32 %v934, %v968
        %v974 = vmul.f32 %v937, %v968
        %v975 = vmul.f32 %v940, %v968
        %v976 = vmul.f32 %v943, %v968
        %v977 = vmul.f32 %v946, %v968
        %v978 = vmul.f32 %v949, %v968
        %v979 = vmul.f32 %v952, %v968
        %v980 = vmul.f32 %v955, %v968
        %v981 = vmul.f32 %v958, %v968
        %v982 = vmul.f32 %v961, %v968
        %v983 = vmul.f32 %v964, %v968
        %v984 = vmul.f32 %v967, %v968
        %v985 = vsub.f32 %v901, %v969
        %v986 = vsub.f32 %v902, %v970
        %v987 = vsub.f32 %v903, %v971
        %v988 = vsub.f32 %v904, %v972
        %v989 = vsub.f32 %v905, %v973
        %v990 = vsub.f32 %v906, %v974
        %v991 = vsub.f32 %v907, %v975
        %v992 = vsub.f32 %v908, %v976
        %v993 = vsub.f32 %v909, %v977
        %v994 = vsub.f32 %v910, %v978
        %v995 = vsub.f32 %v911, %v979
        %v996 = vsub.f32 %v912, %v980
        %v997 = vsub.f32 %v913, %v981
        %v998 = vsub.f32 %v914, %v982
        %v999 = vsub.f32 %v915, %v983
        %v1000 = vsub.f32 %v916, %v984
        %v1001 = vmul.f32 %v985, %v985
        %v1002 = vmul.f32 %v986, %v986
        %v1003 = vmul.f32 %v987, %v987
        %v1004 = vmul.f32 %v988, %v988
        %v1005 = vmul.f32 %v989, %v989
        %v1006 = vmul.f32 %v990, %v990
        %v1007 = vmul.f32 %v991, %v991
        %v1008 = vmul.f32 %v992, %v992
        %v1009 = vmul.f32 %v993, %v993
        %v1010 = vmul.f32 %v994, %v994
        %v1011 = vmul.f32 %v995, %v995
        %v1012 = vmul.f32 %v996, %v996
        %v1013 = vmul.f32 %v997, %v997
        %v1014 = vmul.f32 %v998, %v998
        %v1015 = vmul.f32 %v999, %v999
        %v1016 = vmul.f32 %v1000, %v1000
        %v1017 = vsel %vm919, %v1001, 0.0
        %1018 = vadd.xlane.f32.xlu0 %v1017
        %v1019 = vpop.xlane.xlu0 %1018
        %v1020 = vsel %vm919, %v1002, 0.0
        %1021 = vadd.xlane.f32.xlu0 %v1020
        %v1022 = vpop.xlane.xlu0 %1021
        %v1023 = vsel %vm919, %v1003, 0.0
        %1024 = vadd.xlane.f32.xlu0 %v1023
        %v1025 = vpop.xlane.xlu0 %1024
        %v1026 = vsel %vm919, %v1004, 0.0
        %1027 = vadd.xlane.f32.xlu0 %v1026
        %v1028 = vpop.xlane.xlu0 %1027
        %v1029 = vsel %vm919, %v1005, 0.0
        %1030 = vadd.xlane.f32.xlu0 %v1029
        %v1031 = vpop.xlane.xlu0 %1030
        %v1032 = vsel %vm919, %v1006, 0.0
        %1033 = vadd.xlane.f32.xlu0 %v1032
        %v1034 = vpop.xlane.xlu0 %1033
        %v1035 = vsel %vm919, %v1007, 0.0
        %1036 = vadd.xlane.f32.xlu0 %v1035
        %v1037 = vpop.xlane.xlu0 %1036
        %v1038 = vsel %vm919, %v1008, 0.0
        %1039 = vadd.xlane.f32.xlu0 %v1038
        %v1040 = vpop.xlane.xlu0 %1039
        %v1041 = vsel %vm919, %v1009, 0.0
        %1042 = vadd.xlane.f32.xlu0 %v1041
        %v1043 = vpop.xlane.xlu0 %1042
        %v1044 = vsel %vm919, %v1010, 0.0
        %1045 = vadd.xlane.f32.xlu0 %v1044
        %v1046 = vpop.xlane.xlu0 %1045
        %v1047 = vsel %vm919, %v1011, 0.0
        %1048 = vadd.xlane.f32.xlu0 %v1047
        %v1049 = vpop.xlane.xlu0 %1048
        %v1050 = vsel %vm919, %v1012, 0.0
        %1051 = vadd.xlane.f32.xlu0 %v1050
        %v1052 = vpop.xlane.xlu0 %1051
        %v1053 = vsel %vm919, %v1013, 0.0
        %1054 = vadd.xlane.f32.xlu0 %v1053
        %v1055 = vpop.xlane.xlu0 %1054
        %v1056 = vsel %vm919, %v1014, 0.0
        %1057 = vadd.xlane.f32.xlu0 %v1056
        %v1058 = vpop.xlane.xlu0 %1057
        %v1059 = vsel %vm919, %v1015, 0.0
        %1060 = vadd.xlane.f32.xlu0 %v1059
        %v1061 = vpop.xlane.xlu0 %1060
        %v1062 = vsel %vm919, %v1016, 0.0
        %1063 = vadd.xlane.f32.xlu0 %v1062
        %v1064 = vpop.xlane.xlu0 %1063
        %v1065 = vmul.f32 %v1019, %v968
        %v1066 = vmul.f32 %v1022, %v968
        %v1067 = vmul.f32 %v1025, %v968
        %v1068 = vmul.f32 %v1028, %v968
        %v1069 = vmul.f32 %v1031, %v968
        %v1070 = vmul.f32 %v1034, %v968
        %v1071 = vmul.f32 %v1037, %v968
        %v1072 = vmul.f32 %v1040, %v968
        %v1073 = vmul.f32 %v1043, %v968
        %v1074 = vmul.f32 %v1046, %v968
        %v1075 = vmul.f32 %v1049, %v968
        %v1076 = vmul.f32 %v1052, %v968
        %v1077 = vmul.f32 %v1055, %v968
        %v1078 = vmul.f32 %v1058, %v968
        %v1079 = vmul.f32 %v1061, %v968
        %v1080 = vmul.f32 %v1064, %v968
        %v1081 = vadd.f32 %v1065, 1e-05
        %v1082 = vadd.f32 %v1066, 1e-05
        %v1083 = vadd.f32 %v1067, 1e-05
        %v1084 = vadd.f32 %v1068, 1e-05
        %v1085 = vadd.f32 %v1069, 1e-05
        %v1086 = vadd.f32 %v1070, 1e-05
        %v1087 = vadd.f32 %v1071, 1e-05
        %v1088 = vadd.f32 %v1072, 1e-05
        %v1089 = vadd.f32 %v1073, 1e-05
        %v1090 = vadd.f32 %v1074, 1e-05
        %v1091 = vadd.f32 %v1075, 1e-05
        %v1092 = vadd.f32 %v1076, 1e-05
        %v1093 = vadd.f32 %v1077, 1e-05
        %v1094 = vadd.f32 %v1078, 1e-05
        %v1095 = vadd.f32 %v1079, 1e-05
        %v1096 = vadd.f32 %v1080, 1e-05
        %v1097 = vrsqrt.pop %v1081
        %v1098 = vrsqrt.pop %v1082
        %v1099 = vrsqrt.pop %v1083
        %v1100 = vrsqrt.pop %v1084
        %v1101 = vrsqrt.pop %v1085
        %v1102 = vrsqrt.pop %v1086
        %v1103 = vrsqrt.pop %v1087
        %v1104 = vrsqrt.pop %v1088
        %v1105 = vrsqrt.pop %v1089
        %v1106 = vrsqrt.pop %v1090
        %v1107 = vrsqrt.pop %v1091
        %v1108 = vrsqrt.pop %v1092
        %v1109 = vrsqrt.pop %v1093
        %v1110 = vrsqrt.pop %v1094
        %v1111 = vrsqrt.pop %v1095
        %v1112 = vrsqrt.pop %v1096
        %v1113 = vmul.f32 %v985, %v1097
        %v1114 = vmul.f32 %v986, %v1098
        %v1115 = vmul.f32 %v987, %v1099
        %v1116 = vmul.f32 %v988, %v1100
        %v1117 = vmul.f32 %v989, %v1101
        %v1118 = vmul.f32 %v990, %v1102
        %v1119 = vmul.f32 %v991, %v1103
        %v1120 = vmul.f32 %v992, %v1104
        %v1121 = vmul.f32 %v993, %v1105
        %v1122 = vmul.f32 %v994, %v1106
        %v1123 = vmul.f32 %v995, %v1107
        %v1124 = vmul.f32 %v996, %v1108
        %v1125 = vmul.f32 %v997, %v1109
        %v1126 = vmul.f32 %v998, %v1110
        %v1127 = vmul.f32 %v999, %v1111
        %v1128 = vmul.f32 %v1000, %v1112
        %v1130 = vlaneseq
        %v1131 = vshrl.u32 %v1130, 7
        %v1132 = vsub.s32 0, %v1131
        %v1133 = vrot.slane %v917, %v1132
        %v1135 = vmul.f32 %v1113, %v1133
        %v1136 = vmul.f32 %v1114, %v1133
        %v1137 = vmul.f32 %v1115, %v1133
        %v1138 = vmul.f32 %v1116, %v1133
        %v1139 = vmul.f32 %v1117, %v1133
        %v1140 = vmul.f32 %v1118, %v1133
        %v1141 = vmul.f32 %v1119, %v1133
        %v1142 = vmul.f32 %v1120, %v1133
        %v1143 = vmul.f32 %v1121, %v1133
        %v1144 = vmul.f32 %v1122, %v1133
        %v1145 = vmul.f32 %v1123, %v1133
        %v1146 = vmul.f32 %v1124, %v1133
        %v1147 = vmul.f32 %v1125, %v1133
        %v1148 = vmul.f32 %v1126, %v1133
        %v1149 = vmul.f32 %v1127, %v1133
        %v1150 = vmul.f32 %v1128, %v1133
        %v1152 = vlaneseq
        %v1153 = vshrl.u32 %v1152, 7
        %v1154 = vsub.s32 0, %v1153
        %v1155 = vrot.slane %v918, %v1154
        %v1157 = vadd.f32 %v1135, %v1155
        %v1158 = vadd.f32 %v1136, %v1155
        %v1159 = vadd.f32 %v1137, %v1155
        %v1160 = vadd.f32 %v1138, %v1155
        %v1161 = vadd.f32 %v1139, %v1155
        %v1162 = vadd.f32 %v1140, %v1155
        %v1163 = vadd.f32 %v1141, %v1155
        %v1164 = vadd.f32 %v1142, %v1155
        %v1165 = vadd.f32 %v1143, %v1155
        %v1166 = vadd.f32 %v1144, %v1155
        %v1167 = vadd.f32 %v1145, %v1155
        %v1168 = vadd.f32 %v1146, %v1155
        %v1169 = vadd.f32 %v1147, %v1155
        %v1170 = vadd.f32 %v1148, %v1155
        %v1171 = vadd.f32 %v1149, %v1155
        %v1172 = vadd.f32 %v1150, %v1155
        %v1173 = vld [vmem:[%s5] sm:$0xff]
        %v1174 = vld [vmem:[%s5 + $0x8] sm:$0xff]
        %v1175 = vld [vmem:[%s5 + $0x10] sm:$0xff]
        %v1176 = vld [vmem:[%s5 + $0x18] sm:$0xff]
        %v1177 = vld [vmem:[%s6] sm:$0x1]
        %v1179 = vlaneseq
        %v1180 = vshrl.u32 %v1179, 7
        %v1181 = vsub.s32 0, %v1180
        %v1182 = vrot.slane %v1177, %v1181
        %v1185 = vsel %vm919, %v1157, 0
        %v1188 = vsel %vm919, %v1158, 0
        %v1191 = vsel %vm919, %v1159, 0
        %v1194 = vsel %vm919, %v1160, 0
        %v1197 = vsel %vm919, %v1161, 0
        %v1200 = vsel %vm919, %v1162, 0
        %v1203 = vsel %vm919, %v1163, 0
        %v1206 = vsel %vm919, %v1164, 0
        %v1209 = vsel %vm919, %v1165, 0
        %v1212 = vsel %vm919, %v1166, 0
        %v1215 = vsel %vm919, %v1167, 0
        %v1218 = vsel %vm919, %v1168, 0
        %v1221 = vsel %vm919, %v1169, 0
        %v1224 = vsel %vm919, %v1170, 0
        %v1227 = vsel %vm919, %v1171, 0
        %v1230 = vsel %vm919, %v1172, 0
        %1232 = vmatprep.subr.mxu0 0.0
        %1233 = vmatpush1.msra.mxu0 0.0
        %1234 = vmatprep.subr.mxu0 0.0
        %1235 = vmatpush1.msra.mxu0 0.0
        %1236 = vmatprep.subr.mxu0 0.0
        %1237 = vmatpush1.msra.mxu0 0.0
        %1238 = vmatprep.subr.mxu0 0.0
        %1239 = vmatpush1.msra.mxu0 0.0
        %1240 = vmatprep.subr.mxu0 0.0
        %1241 = vmatpush1.msra.mxu0 0.0
        %1242 = vmatprep.subr.mxu0 0.0
        %1243 = vmatpush1.msra.mxu0 0.0
        %1244 = vmatprep.subr.mxu0 0.0
        %1245 = vmatpush1.msra.mxu0 0.0
        %1246 = vmatprep.subr.mxu0 0.0
        %1247 = vmatpush1.msra.mxu0 0.0
        %1248 = vmatprep.subr.mxu0 0.0
        %1249 = vmatpush1.msra.mxu0 0.0
        %1250 = vmatprep.subr.mxu0 0.0
        %1251 = vmatpush1.msra.mxu0 0.0
        %1252 = vmatprep.subr.mxu0 0.0
        %1253 = vmatpush1.msra.mxu0 0.0
        %1254 = vmatprep.subr.mxu0 0.0
        %1255 = vmatpush1.msra.mxu0 0.0
        %1256 = vmatprep.subr.mxu0 0.0
        %1257 = vmatpush1.msra.mxu0 %v1176
        %1258 = vmatprep.subr.mxu0 0.0
        %1259 = vmatpush1.msra.mxu0 %v1175
        %1260 = vmatprep.subr.mxu0 0.0
        %1261 = vmatpush1.msra.mxu0 %v1174
        %1262 = vmatprep.subr.mxu0 0.0
        %1263 = vmatpush1.msra.mxu0 %v1173
        %1264 = vmatprep.subr.mxu0 0.0
        %1265 = vmatpush2.msra.mxu0 0.0
        %1266 = vmatprep.subr.mxu0 0.0
        %1267 = vmatpush2.msra.mxu0 0.0
        %1268 = vmatprep.subr.mxu0 0.0
        %1269 = vmatpush2.msra.mxu0 0.0
        %1270 = vmatprep.subr.mxu0 0.0
        %1271 = vmatpush2.msra.mxu0 0.0
        %1272 = vmatprep.subr.mxu0 0.0
        %1273 = vmatpush2.msra.mxu0 0.0
        %1274 = vmatprep.subr.mxu0 0.0
        %1275 = vmatpush2.msra.mxu0 0.0
        %1276 = vmatprep.subr.mxu0 0.0
        %1277 = vmatpush2.msra.mxu0 0.0
        %1278 = vmatprep.subr.mxu0 0.0
        %1279 = vmatpush2.msra.mxu0 0.0
        %1280 = vmatprep.subr.mxu0 0.0
        %1281 = vmatpush2.msra.mxu0 0.0
        %1282 = vmatprep.subr.mxu0 0.0
        %1283 = vmatpush2.msra.mxu0 0.0
        %1284 = vmatprep.subr.mxu0 0.0
        %1285 = vmatpush2.msra.mxu0 0.0
        %1286 = vmatprep.subr.mxu0 0.0
        %1287 = vmatpush2.msra.mxu0 0.0
        %1288 = vmatprep.subr.mxu0 0.0
        %1289 = vmatpush2.msra.mxu0 0.0
        %1290 = vmatprep.subr.mxu0 0.0
        %1291 = vmatpush2.msra.mxu0 0.0
        %1292 = vmatprep.subr.mxu0 0.0
        %1293 = vmatpush2.msra.mxu0 0.0
        %1294 = vmatprep.subr.mxu0 0.0
        %1295 = vmatpush2.msra.mxu0 0.0
        %1296 = vmatprep.mubr.f32.mxu0 0.0
        %1297 = vmatmul.mubr.f32.gmra.mxu0 %v1185
        %v1298 = vpop.f32.mrf.mxu0
        %v1299 = vadd.f32 %v1182, %v1298
        %v1300 = vpop.f32.mrf.mxu0
        %1301 = vmatprep.mubr.f32.mxu0 0.0
        %1302 = vmatmul.mubr.f32.gmra.mxu0 %v1188
        %v1303 = vpop.f32.mrf.mxu0
        %v1304 = vadd.f32 %v1182, %v1303
        %v1305 = vpop.f32.mrf.mxu0
        %1306 = vmatprep.mubr.f32.mxu0 0.0
        %1307 = vmatmul.mubr.f32.gmra.mxu0 %v1191
        %v1308 = vpop.f32.mrf.mxu0
        %v1309 = vadd.f32 %v1182, %v1308
        %v1310 = vpop.f32.mrf.mxu0
        %1311 = vmatprep.mubr.f32.mxu0 0.0
        %1312 = vmatmul.mubr.f32.gmra.mxu0 %v1194
        %v1313 = vpop.f32.mrf.mxu0
        %v1314 = vadd.f32 %v1182, %v1313
        %v1315 = vpop.f32.mrf.mxu0
        %1316 = vmatprep.mubr.f32.mxu0 0.0
        %1317 = vmatmul.mubr.f32.gmra.mxu0 %v1197
        %v1318 = vpop.f32.mrf.mxu0
        %v1319 = vadd.f32 %v1182, %v1318
        %v1320 = vpop.f32.mrf.mxu0
        %1321 = vmatprep.mubr.f32.mxu0 0.0
        %1322 = vmatmul.mubr.f32.gmra.mxu0 %v1200
        %v1323 = vpop.f32.mrf.mxu0
        %v1324 = vadd.f32 %v1182, %v1323
        %v1325 = vpop.f32.mrf.mxu0
        %1326 = vmatprep.mubr.f32.mxu0 0.0
        %1327 = vmatmul.mubr.f32.gmra.mxu0 %v1203
        %v1328 = vpop.f32.mrf.mxu0
        %v1329 = vadd.f32 %v1182, %v1328
        %v1330 = vpop.f32.mrf.mxu0
        %1331 = vmatprep.mubr.f32.mxu0 0.0
        %1332 = vmatmul.mubr.f32.gmra.mxu0 %v1206
        %v1333 = vpop.f32.mrf.mxu0
        %v1334 = vadd.f32 %v1182, %v1333
        %v1335 = vpop.f32.mrf.mxu0
        %1336 = vmatprep.mubr.f32.mxu0 0.0
        %1337 = vmatmul.mubr.f32.gmra.mxu0 %v1209
        %v1338 = vpop.f32.mrf.mxu0
        %v1339 = vadd.f32 %v1182, %v1338
        %v1340 = vpop.f32.mrf.mxu0
        %1341 = vmatprep.mubr.f32.mxu0 0.0
        %1342 = vmatmul.mubr.f32.gmra.mxu0 %v1212
        %v1343 = vpop.f32.mrf.mxu0
        %v1344 = vadd.f32 %v1182, %v1343
        %v1345 = vpop.f32.mrf.mxu0
        %1346 = vmatprep.mubr.f32.mxu0 0.0
        %1347 = vmatmul.mubr.f32.gmra.mxu0 %v1215
        %v1348 = vpop.f32.mrf.mxu0
        %v1349 = vadd.f32 %v1182, %v1348
        %v1350 = vpop.f32.mrf.mxu0
        %1351 = vmatprep.mubr.f32.mxu0 0.0
        %1352 = vmatmul.mubr.f32.gmra.mxu0 %v1218
        %v1353 = vpop.f32.mrf.mxu0
        %v1354 = vadd.f32 %v1182, %v1353
        %v1355 = vpop.f32.mrf.mxu0
        %1356 = vmatprep.mubr.f32.mxu0 0.0
        %1357 = vmatmul.mubr.f32.gmra.mxu0 %v1221
        %v1358 = vpop.f32.mrf.mxu0
        %v1359 = vadd.f32 %v1182, %v1358
        %v1360 = vpop.f32.mrf.mxu0
        %1361 = vmatprep.mubr.f32.mxu0 0.0
        %1362 = vmatmul.mubr.f32.gmra.mxu0 %v1224
        %v1363 = vpop.f32.mrf.mxu0
        %v1364 = vadd.f32 %v1182, %v1363
        %v1365 = vpop.f32.mrf.mxu0
        %1366 = vmatprep.mubr.f32.mxu0 0.0
        %1367 = vmatmul.mubr.f32.gmra.mxu0 %v1227
        %v1368 = vpop.f32.mrf.mxu0
        %v1369 = vadd.f32 %v1182, %v1368
        %v1370 = vpop.f32.mrf.mxu0
        %1371 = vmatprep.mubr.f32.mxu0 0.0
        %1372 = vmatmul.mubr.f32.gmra.mxu0 %v1230
        %v1373 = vpop.f32.mrf.mxu0
        %v1374 = vadd.f32 %v1182, %v1373
        %v1375 = vpop.f32.mrf.mxu0
        %1376 = vdwg.mxu0
        %v1377 = vmax.f32 %v1299, 0.0
        %v1378 = vmax.f32 %v1304, 0.0
        %v1379 = vmax.f32 %v1309, 0.0
        %v1380 = vmax.f32 %v1314, 0.0
        %v1381 = vmax.f32 %v1319, 0.0
        %v1382 = vmax.f32 %v1324, 0.0
        %v1383 = vmax.f32 %v1329, 0.0
        %v1384 = vmax.f32 %v1334, 0.0
        %v1385 = vmax.f32 %v1339, 0.0
        %v1386 = vmax.f32 %v1344, 0.0
        %v1387 = vmax.f32 %v1349, 0.0
        %v1388 = vmax.f32 %v1354, 0.0
        %v1389 = vmax.f32 %v1359, 0.0
        %v1390 = vmax.f32 %v1364, 0.0
        %v1391 = vmax.f32 %v1369, 0.0
        %v1392 = vmax.f32 %v1374, 0.0
        %v1393 = vld [vmem:[%s7] sm:$0xff]
        %v1394 = vld [vmem:[%s7 + $0x8] sm:$0xff]
        %v1395 = vld [vmem:[%s7 + $0x10] sm:$0xff]
        %v1396 = vld [vmem:[%s7 + $0x18] sm:$0xff]
        %v1397 = vld [vmem:[%s7 + $0x20] sm:$0xff]
        %v1398 = vld [vmem:[%s7 + $0x28] sm:$0xff]
        %v1399 = vld [vmem:[%s7 + $0x30] sm:$0xff]
        %v1400 = vld [vmem:[%s7 + $0x38] sm:$0xff]
        %v1401 = vld [vmem:[%s8] sm:$0x1]
        %v1403 = vlaneseq
        %v1404 = vshrl.u32 %v1403, 7
        %v1405 = vsub.s32 0, %v1404
        %v1406 = vrot.slane %v1401, %v1405
        %vm1408 = vcmask 523264
        %v1410 = vsel %vm1408, %v1377, 0
        %v1413 = vsel %vm1408, %v1378, 0
        %v1416 = vsel %vm1408, %v1379, 0
        %v1419 = vsel %vm1408, %v1380, 0
        %v1422 = vsel %vm1408, %v1381, 0
        %v1425 = vsel %vm1408, %v1382, 0
        %v1428 = vsel %vm1408, %v1383, 0
        %v1431 = vsel %vm1408, %v1384, 0
        %v1434 = vsel %vm1408, %v1385, 0
        %v1437 = vsel %vm1408, %v1386, 0
        %v1440 = vsel %vm1408, %v1387, 0
        %v1443 = vsel %vm1408, %v1388, 0
        %v1446 = vsel %vm1408, %v1389, 0
        %v1449 = vsel %vm1408, %v1390, 0
        %v1452 = vsel %vm1408, %v1391, 0
        %v1455 = vsel %vm1408, %v1392, 0
        %1457 = vmatprep.subr.mxu0 0.0
        %1458 = vmatpush1.msra.mxu0 0.0
        %1459 = vmatprep.subr.mxu0 0.0
        %1460 = vmatpush1.msra.mxu0 0.0
        %1461 = vmatprep.subr.mxu0 0.0
        %1462 = vmatpush1.msra.mxu0 0.0
        %1463 = vmatprep.subr.mxu0 0.0
        %1464 = vmatpush1.msra.mxu0 0.0
        %1465 = vmatprep.subr.mxu0 0.0
        %1466 = vmatpush1.msra.mxu0 0.0
        %1467 = vmatprep.subr.mxu0 0.0
        %1468 = vmatpush1.msra.mxu0 0.0
        %1469 = vmatprep.subr.mxu0 0.0
        %1470 = vmatpush1.msra.mxu0 0.0
        %1471 = vmatprep.subr.mxu0 0.0
        %1472 = vmatpush1.msra.mxu0 0.0
        %1473 = vmatprep.subr.mxu0 0.0
        %1474 = vmatpush1.msra.mxu0 %v1400
        %1475 = vmatprep.subr.mxu0 0.0
        %1476 = vmatpush1.msra.mxu0 %v1399
        %1477 = vmatprep.subr.mxu0 0.0
        %1478 = vmatpush1.msra.mxu0 %v1398
        %1479 = vmatprep.subr.mxu0 0.0
        %1480 = vmatpush1.msra.mxu0 %v1397
        %1481 = vmatprep.subr.mxu0 0.0
        %1482 = vmatpush1.msra.mxu0 %v1396
        %1483 = vmatprep.subr.mxu0 0.0
        %1484 = vmatpush1.msra.mxu0 %v1395
        %1485 = vmatprep.subr.mxu0 0.0
        %1486 = vmatpush1.msra.mxu0 %v1394
        %1487 = vmatprep.subr.mxu0 0.0
        %1488 = vmatpush1.msra.mxu0 %v1393
        %1489 = vmatprep.subr.mxu0 0.0
        %1490 = vmatpush2.msra.mxu0 0.0
        %1491 = vmatprep.subr.mxu0 0.0
        %1492 = vmatpush2.msra.mxu0 0.0
        %1493 = vmatprep.subr.mxu0 0.0
        %1494 = vmatpush2.msra.mxu0 0.0
        %1495 = vmatprep.subr.mxu0 0.0
        %1496 = vmatpush2.msra.mxu0 0.0
        %1497 = vmatprep.subr.mxu0 0.0
        %1498 = vmatpush2.msra.mxu0 0.0
        %1499 = vmatprep.subr.mxu0 0.0
        %1500 = vmatpush2.msra.mxu0 0.0
        %1501 = vmatprep.subr.mxu0 0.0
        %1502 = vmatpush2.msra.mxu0 0.0
        %1503 = vmatprep.subr.mxu0 0.0
        %1504 = vmatpush2.msra.mxu0 0.0
        %1505 = vmatprep.subr.mxu0 0.0
        %1506 = vmatpush2.msra.mxu0 0.0
        %1507 = vmatprep.subr.mxu0 0.0
        %1508 = vmatpush2.msra.mxu0 0.0
        %1509 = vmatprep.subr.mxu0 0.0
        %1510 = vmatpush2.msra.mxu0 0.0
        %1511 = vmatprep.subr.mxu0 0.0
        %1512 = vmatpush2.msra.mxu0 0.0
        %1513 = vmatprep.subr.mxu0 0.0
        %1514 = vmatpush2.msra.mxu0 0.0
        %1515 = vmatprep.subr.mxu0 0.0
        %1516 = vmatpush2.msra.mxu0 0.0
        %1517 = vmatprep.subr.mxu0 0.0
        %1518 = vmatpush2.msra.mxu0 0.0
        %1519 = vmatprep.subr.mxu0 0.0
        %1520 = vmatpush2.msra.mxu0 0.0
        %1521 = vmatprep.mubr.f32.mxu0 0.0
        %1522 = vmatmul.mubr.f32.gmra.mxu0 %v1410
        %v1523 = vpop.f32.mrf.mxu0
        %v1524 = vadd.f32 %v1406, %v1523
        %v1525 = vpop.f32.mrf.mxu0
        %1526 = vmatprep.mubr.f32.mxu0 0.0
        %1527 = vmatmul.mubr.f32.gmra.mxu0 %v1413
        %v1528 = vpop.f32.mrf.mxu0
        %v1529 = vadd.f32 %v1406, %v1528
        %v1530 = vpop.f32.mrf.mxu0
        %1531 = vmatprep.mubr.f32.mxu0 0.0
        %1532 = vmatmul.mubr.f32.gmra.mxu0 %v1416
        %v1533 = vpop.f32.mrf.mxu0
        %v1534 = vadd.f32 %v1406, %v1533
        %v1535 = vpop.f32.mrf.mxu0
        %1536 = vmatprep.mubr.f32.mxu0 0.0
        %1537 = vmatmul.mubr.f32.gmra.mxu0 %v1419
        %v1538 = vpop.f32.mrf.mxu0
        %v1539 = vadd.f32 %v1406, %v1538
        %v1540 = vpop.f32.mrf.mxu0
        %1541 = vmatprep.mubr.f32.mxu0 0.0
        %1542 = vmatmul.mubr.f32.gmra.mxu0 %v1422
        %v1543 = vpop.f32.mrf.mxu0
        %v1544 = vadd.f32 %v1406, %v1543
        %v1545 = vpop.f32.mrf.mxu0
        %1546 = vmatprep.mubr.f32.mxu0 0.0
        %1547 = vmatmul.mubr.f32.gmra.mxu0 %v1425
        %v1548 = vpop.f32.mrf.mxu0
        %v1549 = vadd.f32 %v1406, %v1548
        %v1550 = vpop.f32.mrf.mxu0
        %1551 = vmatprep.mubr.f32.mxu0 0.0
        %1552 = vmatmul.mubr.f32.gmra.mxu0 %v1428
        %v1553 = vpop.f32.mrf.mxu0
        %v1554 = vadd.f32 %v1406, %v1553
        %v1555 = vpop.f32.mrf.mxu0
        %1556 = vmatprep.mubr.f32.mxu0 0.0
        %1557 = vmatmul.mubr.f32.gmra.mxu0 %v1431
        %v1558 = vpop.f32.mrf.mxu0
        %v1559 = vadd.f32 %v1406, %v1558
        %v1560 = vpop.f32.mrf.mxu0
        %1561 = vmatprep.mubr.f32.mxu0 0.0
        %1562 = vmatmul.mubr.f32.gmra.mxu0 %v1434
        %v1563 = vpop.f32.mrf.mxu0
        %v1564 = vadd.f32 %v1406, %v1563
        %v1565 = vpop.f32.mrf.mxu0
        %1566 = vmatprep.mubr.f32.mxu0 0.0
        %1567 = vmatmul.mubr.f32.gmra.mxu0 %v1437
        %v1568 = vpop.f32.mrf.mxu0
        %v1569 = vadd.f32 %v1406, %v1568
        %v1570 = vpop.f32.mrf.mxu0
        %1571 = vmatprep.mubr.f32.mxu0 0.0
        %1572 = vmatmul.mubr.f32.gmra.mxu0 %v1440
        %v1573 = vpop.f32.mrf.mxu0
        %v1574 = vadd.f32 %v1406, %v1573
        %v1575 = vpop.f32.mrf.mxu0
        %1576 = vmatprep.mubr.f32.mxu0 0.0
        %1577 = vmatmul.mubr.f32.gmra.mxu0 %v1443
        %v1578 = vpop.f32.mrf.mxu0
        %v1579 = vadd.f32 %v1406, %v1578
        %v1580 = vpop.f32.mrf.mxu0
        %1581 = vmatprep.mubr.f32.mxu0 0.0
        %1582 = vmatmul.mubr.f32.gmra.mxu0 %v1446
        %v1583 = vpop.f32.mrf.mxu0
        %v1584 = vadd.f32 %v1406, %v1583
        %v1585 = vpop.f32.mrf.mxu0
        %1586 = vmatprep.mubr.f32.mxu0 0.0
        %1587 = vmatmul.mubr.f32.gmra.mxu0 %v1449
        %v1588 = vpop.f32.mrf.mxu0
        %v1589 = vadd.f32 %v1406, %v1588
        %v1590 = vpop.f32.mrf.mxu0
        %1591 = vmatprep.mubr.f32.mxu0 0.0
        %1592 = vmatmul.mubr.f32.gmra.mxu0 %v1452
        %v1593 = vpop.f32.mrf.mxu0
        %v1594 = vadd.f32 %v1406, %v1593
        %v1595 = vpop.f32.mrf.mxu0
        %1596 = vmatprep.mubr.f32.mxu0 0.0
        %1597 = vmatmul.mubr.f32.gmra.mxu0 %v1455
        %v1598 = vpop.f32.mrf.mxu0
        %v1599 = vadd.f32 %v1406, %v1598
        %v1600 = vpop.f32.mrf.mxu0
        %1601 = vdwg.mxu0
        %v1602 = vadd.f32 %v901, %v1524
        %v1603 = vadd.f32 %v902, %v1529
        %v1604 = vadd.f32 %v903, %v1534
        %v1605 = vadd.f32 %v904, %v1539
        %v1606 = vadd.f32 %v905, %v1544
        %v1607 = vadd.f32 %v906, %v1549
        %v1608 = vadd.f32 %v907, %v1554
        %v1609 = vadd.f32 %v908, %v1559
        %v1610 = vadd.f32 %v909, %v1564
        %v1611 = vadd.f32 %v910, %v1569
        %v1612 = vadd.f32 %v911, %v1574
        %v1613 = vadd.f32 %v912, %v1579
        %v1614 = vadd.f32 %v913, %v1584
        %v1615 = vadd.f32 %v914, %v1589
        %v1616 = vadd.f32 %v915, %v1594
        %v1617 = vadd.f32 %v916, %v1599
        %1618 = vst.msk [vmem:[%s516] sm:$0xff] %vm919, %v1602
        %1619 = vst.msk [vmem:[%s516 + $0x8] sm:$0xff] %vm919, %v1603
        %1620 = vst.msk [vmem:[%s516 + $0x10] sm:$0xff] %vm919, %v1604
        %1621 = vst.msk [vmem:[%s516 + $0x18] sm:$0xff] %vm919, %v1605
        %1622 = vst.msk [vmem:[%s516 + $0x20] sm:$0xff] %vm919, %v1606
        %1623 = vst.msk [vmem:[%s516 + $0x28] sm:$0xff] %vm919, %v1607
        %1624 = vst.msk [vmem:[%s516 + $0x30] sm:$0xff] %vm919, %v1608
        %1625 = vst.msk [vmem:[%s516 + $0x38] sm:$0xff] %vm919, %v1609
        %1626 = vst.msk [vmem:[%s516 + $0x40] sm:$0xff] %vm919, %v1610
        %1627 = vst.msk [vmem:[%s516 + $0x48] sm:$0xff] %vm919, %v1611
        %1628 = vst.msk [vmem:[%s516 + $0x50] sm:$0xff] %vm919, %v1612
        %1629 = vst.msk [vmem:[%s516 + $0x58] sm:$0xff] %vm919, %v1613
        %1630 = vst.msk [vmem:[%s516 + $0x60] sm:$0xff] %vm919, %v1614
        %1631 = vst.msk [vmem:[%s516 + $0x68] sm:$0xff] %vm919, %v1615
        %1632 = vst.msk [vmem:[%s516 + $0x70] sm:$0xff] %vm919, %v1616
        %1633 = vst.msk [vmem:[%s516 + $0x78] sm:$0xff] %vm919, %v1617
        %v1634 = vld [vmem:[%s456] sm:$0x1f]
        %v1635 = vld [vmem:[%s456 + $0x8] sm:$0x1f]
        %v1636 = vld [vmem:[%s456 + $0x10] sm:$0x1f]
        %v1637 = vld [vmem:[%s456 + $0x18] sm:$0x1f]
        %v1638 = vld [vmem:[%s10] sm:$0x1f]
        %v1639 = vld [vmem:[%s10 + $0x8] sm:$0x1f]
        %v1640 = vld [vmem:[%s10 + $0x10] sm:$0x1f]
        %v1641 = vld [vmem:[%s10 + $0x18] sm:$0x1f]
        %1643 = vset.pattern.permute.xlu0 0
        %1644 = vperm.xlu0 %1643, %v1638
        %v1645 = vpop.permute.xlu0 %1644
        %1648 = vset.pattern.permute.xlu0 0
        %1649 = vperm.xlu0 %1648, %v1639
        %v1650 = vpop.permute.xlu0 %1649
        %1653 = vset.pattern.permute.xlu0 0
        %1654 = vperm.xlu0 %1653, %v1640
        %v1655 = vpop.permute.xlu0 %1654
        %1658 = vset.pattern.permute.xlu0 0
        %1659 = vperm.xlu0 %1658, %v1641
        %v1660 = vpop.permute.xlu0 %1659
        %v1662 = vsub.f32 %v1634, %v1645
        %v1663 = vsub.f32 %v1635, %v1650
        %v1664 = vsub.f32 %v1636, %v1655
        %v1665 = vsub.f32 %v1637, %v1660
        %v1666 = vmul.f32 %v1662, 1.442695
        %v1667 = vpow.pop %v1666
        %v1668 = vmul.f32 %v1663, 1.442695
        %v1669 = vpow.pop %v1668
        %v1670 = vmul.f32 %v1664, 1.442695
        %v1671 = vpow.pop %v1670
        %v1672 = vmul.f32 %v1665, 1.442695
        %v1673 = vpow.pop %v1672
        %v1674 = vld [vmem:[%s11] sm:$0x1f]
        %v1675 = vld [vmem:[%s11 + $0x8] sm:$0x1f]
        %v1676 = vld [vmem:[%s11 + $0x10] sm:$0x1f]
        %v1677 = vld [vmem:[%s11 + $0x18] sm:$0x1f]
        %v1678 = vrcp.pop %v1674
        %v1679 = vrcp.pop %v1675
        %v1680 = vrcp.pop %v1676
        %v1681 = vrcp.pop %v1677
        %1683 = vset.pattern.permute.xlu0 0
        %1684 = vperm.xlu0 %1683, %v1678
        %v1685 = vpop.permute.xlu0 %1684
        %1688 = vset.pattern.permute.xlu0 0
        %1689 = vperm.xlu0 %1688, %v1679
        %v1690 = vpop.permute.xlu0 %1689
        %1693 = vset.pattern.permute.xlu0 0
        %1694 = vperm.xlu0 %1693, %v1680
        %v1695 = vpop.permute.xlu0 %1694
        %1698 = vset.pattern.permute.xlu0 0
        %1699 = vperm.xlu0 %1698, %v1681
        %v1700 = vpop.permute.xlu0 %1699
        %v1702 = vmul.f32 %v1667, %v1685
        %v1703 = vmul.f32 %v1669, %v1690
        %v1704 = vmul.f32 %v1671, %v1695
        %v1705 = vmul.f32 %v1673, %v1700
        %1706 = vst [vmem:[%s505] sm:$0x1f] %v1702
        %1707 = vst [vmem:[%s505 + $0x8] sm:$0x1f] %v1703
        %1708 = vst [vmem:[%s505 + $0x10] sm:$0x1f] %v1704
        %1709 = vst [vmem:[%s505 + $0x18] sm:$0x1f] %v1705
        %s1710 = smul.u32 16, %s25
        %p1711 = scmp.lt.s32.totalorder %s1710, 31
        %s1712 = scalar_select %p1711, %s1710, 31
        %s1713 = smul.addr %s1712, 8
        %s1714 = scalar_lea.vmem %s12, %s1713
        %s1715 = sand.u32 %s321, 1
        %s1716 = sand.u32 %s321, 1
        %s1717 = smul.addr %s1716, 32
        %s1718 = scalar_lea.vmem [#allocation3], %s1717
        // Predicated region
        $region107: #{encoder_layer_forward.3} parent=101 // pred_check
          %p1719 = pneg %p305
        $region108: #{encoder_layer_forward.3} parent=101 // pred_check_branch
          %1721 = sbr.rel (%p1719) target = $region110
        $region109: #{encoder_layer_forward.3} parent=101 // pred_region
          %s1722 = smul.u32 16, %s25
        $region110: #{encoder_layer_forward.3} parent=101 // pred_fallthru
          _
        // Predicated region
        $region111: #{encoder_layer_forward.3} parent=101 // pred_check
          %p1723 = pneg %p331
        $region112: #{encoder_layer_forward.3} parent=101 // pred_check_branch
          %1725 = sbr.rel (%p1723) target = $region114
        $region113: #{encoder_layer_forward.3} parent=101 // pred_region
          %s1726 = smul.addr %s25, 8
          %s1727 = scalar_lea.vmem %s13, %s1726
          // Predicated region
          $region115: #{encoder_layer_forward.3} parent=113 // pred_check
            _
          $region116: #{encoder_layer_forward.3} parent=113 // pred_check_branch
            %1729 = sbr.rel (0) target = $region118
          $region117: #{encoder_layer_forward.3} parent=113 // pred_region
            // Predicated region
            $region119: #{encoder_layer_forward.3} parent=117 // pred_check
              _
            $region120: #{encoder_layer_forward.3} parent=117 // pred_check_branch
              %1731 = sbr.rel (0) target = $region122
            $region121: #{encoder_layer_forward.3} parent=117 // pred_region
              // Predicated region
              $region134: #{encoder_layer_forward.3} parent=121 // pred_check
                _
              $region135: #{encoder_layer_forward.3} parent=121 // pred_check_branch
                %1753 = sbr.rel (0) target = $region137
              $region136: #{encoder_layer_forward.3} parent=121 // pred_region
                loop: start=0, step=1, limit=1
                $region138: #{encoder_layer_forward.3} parent=136 // loop_pre_header
                  _
                $region139: #{encoder_layer_forward.3} parent=136 // loop_header
                  %s1755 = sphi 0, %s1759
                  %p1756 = scmp.ge.s32.totalorder %s1755, 1
                  %s1760 = sphi %s1718, %s1718
                  %s1761 = sphi %s1727, %s1727
                $region140: #{encoder_layer_forward.3} parent=136 // loop_header_branch
                  %1758 = sbr.rel (%p1756) target = $region144
                $region141: #{encoder_layer_forward.3} parent=136 // loop_body
                  %v1762 = vld [vmem:[%s1760] sm:$0xff]
                  %1763 = vst [vmem:[%s1761] sm:$0xff] %v1762
                  %v1764 = vld [vmem:[%s1760 + $0x8] sm:$0xff]
                  %1765 = vst [vmem:[%s1761 + $0x10] sm:$0xff] %v1764
                  %v1766 = vld [vmem:[%s1760 + $0x10] sm:$0xff]
                  %1767 = vst [vmem:[%s1761 + $0x20] sm:$0xff] %v1766
                  %v1768 = vld [vmem:[%s1760 + $0x18] sm:$0xff]
                  %1769 = vst [vmem:[%s1761 + $0x30] sm:$0xff] %v1768
                $region142: #{encoder_layer_forward.3} parent=136 // loop_footer
                  %s1759 = sadd.s32 1, %s1755
                $region143: #{encoder_layer_forward.3} parent=136 // loop_footer_branch
                  %1754 = sbr.rel target = $region139
                $region144: #{encoder_layer_forward.3} parent=136 // loop_exit
                  _
              $region137: #{encoder_layer_forward.3} parent=121 // pred_fallthru
                _
              // Predicated region
              $region145: #{encoder_layer_forward.3} parent=121 // pred_check
                _
              $region146: #{encoder_layer_forward.3} parent=121 // pred_check_branch
                %1771 = sbr.rel target = $region148
              $region147: #{encoder_layer_forward.3} parent=121 // pred_region
                _
              $region148: #{encoder_layer_forward.3} parent=121 // pred_fallthru
                _
            $region122: #{encoder_layer_forward.3} parent=117 // pred_fallthru
              _
            // Predicated region
            $region123: #{encoder_layer_forward.3} parent=117 // pred_check
              _
            $region124: #{encoder_layer_forward.3} parent=117 // pred_check_branch
              %1733 = sbr.rel target = $region126
            $region125: #{encoder_layer_forward.3} parent=117 // pred_region
              %s1735 = ssub.s32 256, 1
              loop: start=0, step=1, limit=1
              $region127: #{encoder_layer_forward.3} parent=125 // loop_pre_header
                _
              $region128: #{encoder_layer_forward.3} parent=125 // loop_header
                %s1737 = sphi 0, %s1741
                %p1738 = scmp.ge.s32.totalorder %s1737, 1
                %s1742 = sphi %s1718, %s1718
                %s1743 = sphi %s1727, %s1727
              $region129: #{encoder_layer_forward.3} parent=125 // loop_header_branch
                %1740 = sbr.rel (%p1738) target = $region133
              $region130: #{encoder_layer_forward.3} parent=125 // loop_body
                %v1744 = vld [vmem:[%s1742] sm:%s1735]
                %1745 = vst [vmem:[%s1743] sm:%s1735] %v1744
                %v1746 = vld [vmem:[%s1742 + $0x8] sm:%s1735]
                %1747 = vst [vmem:[%s1743 + $0x10] sm:%s1735] %v1746
                %v1748 = vld [vmem:[%s1742 + $0x10] sm:%s1735]
                %1749 = vst [vmem:[%s1743 + $0x20] sm:%s1735] %v1748
                %v1750 = vld [vmem:[%s1742 + $0x18] sm:%s1735]
                %1751 = vst [vmem:[%s1743 + $0x30] sm:%s1735] %v1750
              $region131: #{encoder_layer_forward.3} parent=125 // loop_footer
                %s1741 = sadd.s32 1, %s1737
              $region132: #{encoder_layer_forward.3} parent=125 // loop_footer_branch
                %1736 = sbr.rel target = $region128
              $region133: #{encoder_layer_forward.3} parent=125 // loop_exit
                _
            $region126: #{encoder_layer_forward.3} parent=117 // pred_fallthru
              _
          $region118: #{encoder_layer_forward.3} parent=113 // pred_fallthru
            _
          %1772 = vnop
        $region114: #{encoder_layer_forward.3} parent=101 // pred_fallthru
          _
      $region102: #{encoder_layer_forward.3} parent=5 // pred_fallthru
        _
      %p1773 = scmp.le.s32.totalorder 2, %s20
      // Predicated region
      $region149: #{encoder_layer_forward.3} parent=5 // pred_check
        %p1774 = pneg %p1773
      $region150: #{encoder_layer_forward.3} parent=5 // pred_check_branch
        %1776 = sbr.rel (%p1774) target = $region152
      $region151: #{encoder_layer_forward.3} parent=5 // pred_region
        %s1777 = ssub.s32 %s20, 2
        // Predicated region
        $region153: #{encoder_layer_forward.3} parent=151 // pred_check
          %p1778 = pneg %p311
        $region154: #{encoder_layer_forward.3} parent=151 // pred_check_branch
          %1780 = sbr.rel (%p1778) target = $region156
        $region155: #{encoder_layer_forward.3} parent=151 // pred_region
          %s1781 = smul.u32 16, %s26
          %p1782 = scmp.lt.s32.totalorder %s1781, 31
          %s1783 = scalar_select %p1782, %s1781, 31
          %s1784 = smul.addr %s1783, 8
          %s1785 = scalar_lea.vmem %s12, %s1784
        $region156: #{encoder_layer_forward.3} parent=151 // pred_fallthru
          _
        // Predicated region
        $region157: #{encoder_layer_forward.3} parent=151 // pred_check
          %p1786 = pneg %p337
        $region158: #{encoder_layer_forward.3} parent=151 // pred_check_branch
          %1788 = sbr.rel (%p1786) target = $region160
        $region159: #{encoder_layer_forward.3} parent=151 // pred_region
          %s1789 = sand.u32 %s322, 1
          %s1790 = sand.u32 %s322, 1
          %s1791 = smul.addr %s1790, 32
          %s1792 = scalar_lea.vmem [#allocation3], %s1791
        $region160: #{encoder_layer_forward.3} parent=151 // pred_fallthru
          _
      $region152: #{encoder_layer_forward.3} parent=5 // pred_fallthru
        _
    $region6: #{encoder_layer_forward.3} parent=1 // loop_footer
      %s24 = sadd.s32 1, %s20
    $region7: #{encoder_layer_forward.3} parent=1 // loop_footer_branch
      %19 = sbr.rel target = $region3
    $region8: #{encoder_layer_forward.3} parent=1 // loop_exit
      _

// kernel: encoder_layer_forward.2
$region0: #{encoder_layer_forward.2}
  #allocation0 [shape = 'u32[]', space=smem, size = 0x4, offset = 0x4, fixed_abs, tag = 'smem constant byte address 0x4 - core index']
  #allocation1 [shape = 'u32[144,128]{1,0:T(1,128)}', space=vmem, size = 0x12000, scoped, tag = 'internal scratch']
  #allocation2 [shape = 'f32[5,32]{1,0:T(8,128)}', space=vmem, size = 0x1000, scoped, tag = 'scratch operand']
  #allocation3 [shape = 'f32[4,5,8]{2,1,0:T(8,128)}', space=vmem, size = 0x4000, scoped, tag = 'scratch operand']
  #allocation4 [shape = 'f32[4,5,1]{2,1,0:T(8,128)}', space=vmem, size = 0x4000, scoped, tag = 'scratch operand']
  #allocation5 [shape = 'f32[4,5,1]{2,1,0:T(8,128)}', space=vmem, size = 0x4000, scoped, tag = 'scratch operand']
  %s0 = inlined_call_operand.vmem [shape: f32[256,32], index: 0, kind: input, shape index: {}]
  %s1 = inlined_call_operand.vmem [shape: f32[5,32], index: 1, kind: input, shape index: {}]
  %s2 = inlined_call_operand.vmem [shape: f32[1,32], index: 2, kind: input, shape index: {}]
  %s3 = inlined_call_operand.vmem [shape: f32[1,32], index: 3, kind: input, shape index: {}]
  %s4 = inlined_call_operand.vmem [shape: f32[32,32], index: 4, kind: input, shape index: {}]
  %s5 = inlined_call_operand.vmem [shape: f32[1,32], index: 5, kind: input, shape index: {}]
  %s6 = inlined_call_operand.vmem [shape: f32[32,32], index: 6, kind: input, shape index: {}]
  %s7 = inlined_call_operand.vmem [shape: f32[1,32], index: 7, kind: input, shape index: {}]
  %s8 = inlined_call_operand.vmem [shape: f32[32,32], index: 8, kind: input, shape index: {}]
  %s9 = inlined_call_operand.vmem [shape: f32[1,32], index: 9, kind: input, shape index: {}]
  %s10 = inlined_call_operand.vmem [shape: f32[32,32], index: 10, kind: input, shape index: {}]
  %s11 = inlined_call_operand.vmem [shape: f32[1,32], index: 11, kind: input, shape index: {}]
  %s12 = inlined_call_operand.vmem [shape: f32[5,32], index: 12, kind: output, shape index: {0}]
  %s13 = inlined_call_operand.vmem [shape: f32[4,5,256], index: 13, kind: output, shape index: {1}]
  %s14 = inlined_call_operand.vmem [shape: f32[4,5,1], index: 14, kind: output, shape index: {2}]
  %s15 = inlined_call_operand.vmem [shape: f32[4,5,1], index: 15, kind: output, shape index: {3}]
  %16 = xla_tuple %s12, %s13, %s14, %s15
  %s17 = sld [smem:[#allocation0]]
  $region147: #{encoder_layer_forward.2} parent=0
    _
  %s19 = ssub.s32 1, %s17
  %s20 = scalar_select 0, %s19, %s17
  $region1: #{encoder_layer_forward.2} parent=0
    #allocation6 [shape = 'u8[32768]{0}', space=vmem, size = 0x8000, scoped, tag = 'output window, operand 1']
    loop: start=0, step=1, limit=4
    $region2: #{encoder_layer_forward.2} parent=1 // loop_pre_header
      _
    $region3: #{encoder_layer_forward.2} parent=1 // loop_header
      %s22 = sphi 0, %s26
      %p23 = scmp.ge.s32.totalorder %s22, 4
      %s32 = sphi 0, %s34
      %s35 = sphi 0, %s32
      %s36 = sphi 0, %s35
      %s52 = sphi 0, %s36
      %s56 = sphi 0, %s56
      %s58 = sphi 0, %s56
      %s59 = sphi 0, %s58
      %s73 = sphi 0, %s59
      %s77 = sphi 0, %s77
      %s79 = sphi 0, %s77
      %s80 = sphi 0, %s79
      %s94 = sphi 0, %s80
      %s98 = sphi 0, %s98
      %s100 = sphi 0, %s98
      %s101 = sphi 0, %s100
      %s115 = sphi 0, %s101
      %s119 = sphi 0, %s119
      %s121 = sphi 0, %s119
      %s122 = sphi 0, %s121
      %s136 = sphi 0, %s122
      %s140 = sphi 0, %s140
      %s142 = sphi 0, %s140
      %s143 = sphi 0, %s142
      %s157 = sphi 0, %s143
      %s161 = sphi 0, %s161
      %s163 = sphi 0, %s161
      %s164 = sphi 0, %s163
      %s178 = sphi 0, %s164
      %s182 = sphi 0, %s182
      %s184 = sphi 0, %s182
      %s185 = sphi 0, %s184
      %s199 = sphi 0, %s185
      %s203 = sphi 0, %s203
      %s205 = sphi 0, %s203
      %s206 = sphi 0, %s205
      %s220 = sphi 0, %s206
      %s224 = sphi 0, %s224
      %s226 = sphi 0, %s224
      %s227 = sphi 0, %s226
      %s241 = sphi 0, %s227
      %s245 = sphi 0, %s245
      %s247 = sphi 0, %s245
      %s248 = sphi 0, %s247
      %s262 = sphi 0, %s248
      %s266 = sphi 0, %s266
      %s268 = sphi 0, %s266
      %s269 = sphi 0, %s268
      %s283 = sphi 0, %s269
      %s287 = sphi 0, %s287
      %s289 = sphi 0, %s287
      %s290 = sphi 0, %s289
      %s304 = sphi 0, %s290
      %s310 = sphi 0, %s312
      %s313 = sphi 0, %s310
      %s314 = sphi 0, %s313
      %s330 = sphi 0, %s314
      %s334 = sphi 0, %s334
      %s336 = sphi 0, %s334
      %s337 = sphi 0, %s336
      %s351 = sphi 0, %s337
      %s355 = sphi 0, %s355
      %s357 = sphi 0, %s355
      %s358 = sphi 0, %s357
      %s372 = sphi 0, %s358
    $region4: #{encoder_layer_forward.2} parent=1 // loop_header_branch
      %25 = sbr.rel (%p23) target = $region8
    $region5: #{encoder_layer_forward.2} parent=1 // loop_body
      %s27 = ssub.s32 %s22, 1
      %s28 = ssub.s32 %s22, 2
      %s29 = sadd.s32 %s22, 1
      %s30 = ssub.s32 %s22, %s29
      %p31 = scmp.eq.s32.totalorder %s30, 0
      %s33 = sadd.s32 %s32, 1
      %s34 = scalar_select %p31, %s32, %s33
      %p37 = pneg %p31
      %p38 = scmp.eq.s32.totalorder %s22, 1
      %p39 = por %p37, %p38
      %p40 = scmp.ne.s32.totalorder %s32, %s35
      %p41 = scmp.eq.s32.totalorder %s22, 0
      %p42 = por %p40, %p41
      %p43 = scmp.ne.s32.totalorder %s32, %s35
      %p44 = scmp.eq.s32.totalorder %s27, 1
      %p45 = por %p43, %p44
      %p46 = scmp.ne.s32.totalorder %s35, %s36
      %p47 = scmp.eq.s32.totalorder %s27, 0
      %p48 = por %p46, %p47
      %p49 = scmp.ne.s32.totalorder %s35, %s36
      %p50 = scmp.eq.s32.totalorder %s28, 1
      %p51 = por %p49, %p50
      %p53 = scmp.ne.s32.totalorder %s36, %s52
      %p54 = scmp.eq.s32.totalorder %s28, 0
      %p55 = por %p53, %p54
      %s57 = sadd.s32 %s56, 1
      %p60 = scmp.eq.s32.totalorder %s22, 1
      %p61 = scmp.ne.s32.totalorder %s56, %s58
      %p62 = scmp.eq.s32.totalorder %s22, 0
      %p63 = por %p61, %p62
      %p64 = scmp.ne.s32.totalorder %s56, %s58
      %p65 = scmp.eq.s32.totalorder %s27, 1
      %p66 = por %p64, %p65
      %p67 = scmp.ne.s32.totalorder %s58, %s59
      %p68 = scmp.eq.s32.totalorder %s27, 0
      %p69 = por %p67, %p68
      %p70 = scmp.ne.s32.totalorder %s58, %s59
      %p71 = scmp.eq.s32.totalorder %s28, 1
      %p72 = por %p70, %p71
      %p74 = scmp.ne.s32.totalorder %s59, %s73
      %p75 = scmp.eq.s32.totalorder %s28, 0
      %p76 = por %p74, %p75
      %s78 = sadd.s32 %s77, 1
      %p81 = scmp.eq.s32.totalorder %s22, 1
      %p82 = scmp.ne.s32.totalorder %s77, %s79
      %p83 = scmp.eq.s32.totalorder %s22, 0
      %p84 = por %p82, %p83
      %p85 = scmp.ne.s32.totalorder %s77, %s79
      %p86 = scmp.eq.s32.totalorder %s27, 1
      %p87 = por %p85, %p86
      %p88 = scmp.ne.s32.totalorder %s79, %s80
      %p89 = scmp.eq.s32.totalorder %s27, 0
      %p90 = por %p88, %p89
      %p91 = scmp.ne.s32.totalorder %s79, %s80
      %p92 = scmp.eq.s32.totalorder %s28, 1
      %p93 = por %p91, %p92
      %p95 = scmp.ne.s32.totalorder %s80, %s94
      %p96 = scmp.eq.s32.totalorder %s28, 0
      %p97 = por %p95, %p96
      %s99 = sadd.s32 %s98, 1
      %p102 = scmp.eq.s32.totalorder %s22, 1
      %p103 = scmp.ne.s32.totalorder %s98, %s100
      %p104 = scmp.eq.s32.totalorder %s22, 0
      %p105 = por %p103, %p104
      %p106 = scmp.ne.s32.totalorder %s98, %s100
      %p107 = scmp.eq.s32.totalorder %s27, 1
      %p108 = por %p106, %p107
      %p109 = scmp.ne.s32.totalorder %s100, %s101
      %p110 = scmp.eq.s32.totalorder %s27, 0
      %p111 = por %p109, %p110
      %p112 = scmp.ne.s32.totalorder %s100, %s101
      %p113 = scmp.eq.s32.totalorder %s28, 1
      %p114 = por %p112, %p113
      %p116 = scmp.ne.s32.totalorder %s101, %s115
      %p117 = scmp.eq.s32.totalorder %s28, 0
      %p118 = por %p116, %p117
      %s120 = sadd.s32 %s119, 1
      %p123 = scmp.eq.s32.totalorder %s22, 1
      %p124 = scmp.ne.s32.totalorder %s119, %s121
      %p125 = scmp.eq.s32.totalorder %s22, 0
      %p126 = por %p124, %p125
      %p127 = scmp.ne.s32.totalorder %s119, %s121
      %p128 = scmp.eq.s32.totalorder %s27, 1
      %p129 = por %p127, %p128
      %p130 = scmp.ne.s32.totalorder %s121, %s122
      %p131 = scmp.eq.s32.totalorder %s27, 0
      %p132 = por %p130, %p131
      %p133 = scmp.ne.s32.totalorder %s121, %s122
      %p134 = scmp.eq.s32.totalorder %s28, 1
      %p135 = por %p133, %p134
      %p137 = scmp.ne.s32.totalorder %s122, %s136
      %p138 = scmp.eq.s32.totalorder %s28, 0
      %p139 = por %p137, %p138
      %s141 = sadd.s32 %s140, 1
      %p144 = scmp.eq.s32.totalorder %s22, 1
      %p145 = scmp.ne.s32.totalorder %s140, %s142
      %p146 = scmp.eq.s32.totalorder %s22, 0
      %p147 = por %p145, %p146
      %p148 = scmp.ne.s32.totalorder %s140, %s142
      %p149 = scmp.eq.s32.totalorder %s27, 1
      %p150 = por %p148, %p149
      %p151 = scmp.ne.s32.totalorder %s142, %s143
      %p152 = scmp.eq.s32.totalorder %s27, 0
      %p153 = por %p151, %p152
      %p154 = scmp.ne.s32.totalorder %s142, %s143
      %p155 = scmp.eq.s32.totalorder %s28, 1
      %p156 = por %p154, %p155
      %p158 = scmp.ne.s32.totalorder %s143, %s157
      %p159 = scmp.eq.s32.totalorder %s28, 0
      %p160 = por %p158, %p159
      %s162 = sadd.s32 %s161, 1
      %p165 = scmp.eq.s32.totalorder %s22, 1
      %p166 = scmp.ne.s32.totalorder %s161, %s163
      %p167 = scmp.eq.s32.totalorder %s22, 0
      %p168 = por %p166, %p167
      %p169 = scmp.ne.s32.totalorder %s161, %s163
      %p170 = scmp.eq.s32.totalorder %s27, 1
      %p171 = por %p169, %p170
      %p172 = scmp.ne.s32.totalorder %s163, %s164
      %p173 = scmp.eq.s32.totalorder %s27, 0
      %p174 = por %p172, %p173
      %p175 = scmp.ne.s32.totalorder %s163, %s164
      %p176 = scmp.eq.s32.totalorder %s28, 1
      %p177 = por %p175, %p176
      %p179 = scmp.ne.s32.totalorder %s164, %s178
      %p180 = scmp.eq.s32.totalorder %s28, 0
      %p181 = por %p179, %p180
      %s183 = sadd.s32 %s182, 1
      %p186 = scmp.eq.s32.totalorder %s22, 1
      %p187 = scmp.ne.s32.totalorder %s182, %s184
      %p188 = scmp.eq.s32.totalorder %s22, 0
      %p189 = por %p187, %p188
      %p190 = scmp.ne.s32.totalorder %s182, %s184
      %p191 = scmp.eq.s32.totalorder %s27, 1
      %p192 = por %p190, %p191
      %p193 = scmp.ne.s32.totalorder %s184, %s185
      %p194 = scmp.eq.s32.totalorder %s27, 0
      %p195 = por %p193, %p194
      %p196 = scmp.ne.s32.totalorder %s184, %s185
      %p197 = scmp.eq.s32.totalorder %s28, 1
      %p198 = por %p196, %p197
      %p200 = scmp.ne.s32.totalorder %s185, %s199
      %p201 = scmp.eq.s32.totalorder %s28, 0
      %p202 = por %p200, %p201
      %s204 = sadd.s32 %s203, 1
      %p207 = scmp.eq.s32.totalorder %s22, 1
      %p208 = scmp.ne.s32.totalorder %s203, %s205
      %p209 = scmp.eq.s32.totalorder %s22, 0
      %p210 = por %p208, %p209
      %p211 = scmp.ne.s32.totalorder %s203, %s205
      %p212 = scmp.eq.s32.totalorder %s27, 1
      %p213 = por %p211, %p212
      %p214 = scmp.ne.s32.totalorder %s205, %s206
      %p215 = scmp.eq.s32.totalorder %s27, 0
      %p216 = por %p214, %p215
      %p217 = scmp.ne.s32.totalorder %s205, %s206
      %p218 = scmp.eq.s32.totalorder %s28, 1
      %p219 = por %p217, %p218
      %p221 = scmp.ne.s32.totalorder %s206, %s220
      %p222 = scmp.eq.s32.totalorder %s28, 0
      %p223 = por %p221, %p222
      %s225 = sadd.s32 %s224, 1
      %p228 = scmp.eq.s32.totalorder %s22, 1
      %p229 = scmp.ne.s32.totalorder %s224, %s226
      %p230 = scmp.eq.s32.totalorder %s22, 0
      %p231 = por %p229, %p230
      %p232 = scmp.ne.s32.totalorder %s224, %s226
      %p233 = scmp.eq.s32.totalorder %s27, 1
      %p234 = por %p232, %p233
      %p235 = scmp.ne.s32.totalorder %s226, %s227
      %p236 = scmp.eq.s32.totalorder %s27, 0
      %p237 = por %p235, %p236
      %p238 = scmp.ne.s32.totalorder %s226, %s227
      %p239 = scmp.eq.s32.totalorder %s28, 1
      %p240 = por %p238, %p239
      %p242 = scmp.ne.s32.totalorder %s227, %s241
      %p243 = scmp.eq.s32.totalorder %s28, 0
      %p244 = por %p242, %p243
      %s246 = sadd.s32 %s245, 1
      %p249 = scmp.eq.s32.totalorder %s22, 1
      %p250 = scmp.ne.s32.totalorder %s245, %s247
      %p251 = scmp.eq.s32.totalorder %s22, 0
      %p252 = por %p250, %p251
      %p253 = scmp.ne.s32.totalorder %s245, %s247
      %p254 = scmp.eq.s32.totalorder %s27, 1
      %p255 = por %p253, %p254
      %p256 = scmp.ne.s32.totalorder %s247, %s248
      %p257 = scmp.eq.s32.totalorder %s27, 0
      %p258 = por %p256, %p257
      %p259 = scmp.ne.s32.totalorder %s247, %s248
      %p260 = scmp.eq.s32.totalorder %s28, 1
      %p261 = por %p259, %p260
      %p263 = scmp.ne.s32.totalorder %s248, %s262
      %p264 = scmp.eq.s32.totalorder %s28, 0
      %p265 = por %p263, %p264
      %s267 = sadd.s32 %s266, 1
      %p270 = scmp.eq.s32.totalorder %s22, 1
      %p271 = scmp.ne.s32.totalorder %s266, %s268
      %p272 = scmp.eq.s32.totalorder %s22, 0
      %p273 = por %p271, %p272
      %p274 = scmp.ne.s32.totalorder %s266, %s268
      %p275 = scmp.eq.s32.totalorder %s27, 1
      %p276 = por %p274, %p275
      %p277 = scmp.ne.s32.totalorder %s268, %s269
      %p278 = scmp.eq.s32.totalorder %s27, 0
      %p279 = por %p277, %p278
      %p280 = scmp.ne.s32.totalorder %s268, %s269
      %p281 = scmp.eq.s32.totalorder %s28, 1
      %p282 = por %p280, %p281
      %p284 = scmp.ne.s32.totalorder %s269, %s283
      %p285 = scmp.eq.s32.totalorder %s28, 0
      %p286 = por %p284, %p285
      %s288 = sadd.s32 %s287, 1
      %p291 = scmp.eq.s32.totalorder %s22, 1
      %p292 = scmp.ne.s32.totalorder %s287, %s289
      %p293 = scmp.eq.s32.totalorder %s22, 0
      %p294 = por %p292, %p293
      %p295 = scmp.ne.s32.totalorder %s287, %s289
      %p296 = scmp.eq.s32.totalorder %s27, 1
      %p297 = por %p295, %p296
      %p298 = scmp.ne.s32.totalorder %s289, %s290
      %p299 = scmp.eq.s32.totalorder %s27, 0
      %p300 = por %p298, %p299
      %p301 = scmp.ne.s32.totalorder %s289, %s290
      %p302 = scmp.eq.s32.totalorder %s28, 1
      %p303 = por %p301, %p302
      %p305 = scmp.ne.s32.totalorder %s290, %s304
      %p306 = scmp.eq.s32.totalorder %s28, 0
      %p307 = por %p305, %p306
      %s308 = ssub.s32 %s22, %s29
      %p309 = scmp.eq.s32.totalorder %s308, 0
      %s311 = sadd.s32 %s310, 1
      %s312 = scalar_select %p309, %s310, %s311
      %p315 = pneg %p309
      %p316 = scmp.eq.s32.totalorder %s22, 1
      %p317 = por %p315, %p316
      %p318 = scmp.ne.s32.totalorder %s310, %s313
      %p319 = scmp.eq.s32.totalorder %s22, 0
      %p320 = por %p318, %p319
      %p321 = scmp.ne.s32.totalorder %s310, %s313
      %p322 = scmp.eq.s32.totalorder %s27, 1
      %p323 = por %p321, %p322
      %p324 = scmp.ne.s32.totalorder %s313, %s314
      %p325 = scmp.eq.s32.totalorder %s27, 0
      %p326 = por %p324, %p325
      %p327 = scmp.ne.s32.totalorder %s313, %s314
      %p328 = scmp.eq.s32.totalorder %s28, 1
      %p329 = por %p327, %p328
      %p331 = scmp.ne.s32.totalorder %s314, %s330
      %p332 = scmp.eq.s32.totalorder %s28, 0
      %p333 = por %p331, %p332
      %s335 = sadd.s32 %s334, 1
      %p338 = scmp.eq.s32.totalorder %s22, 1
      %p339 = scmp.ne.s32.totalorder %s334, %s336
      %p340 = scmp.eq.s32.totalorder %s22, 0
      %p341 = por %p339, %p340
      %p342 = scmp.ne.s32.totalorder %s334, %s336
      %p343 = scmp.eq.s32.totalorder %s27, 1
      %p344 = por %p342, %p343
      %p345 = scmp.ne.s32.totalorder %s336, %s337
      %p346 = scmp.eq.s32.totalorder %s27, 0
      %p347 = por %p345, %p346
      %p348 = scmp.ne.s32.totalorder %s336, %s337
      %p349 = scmp.eq.s32.totalorder %s28, 1
      %p350 = por %p348, %p349
      %p352 = scmp.ne.s32.totalorder %s337, %s351
      %p353 = scmp.eq.s32.totalorder %s28, 0
      %p354 = por %p352, %p353
      %s356 = sadd.s32 %s355, 1
      %p359 = scmp.eq.s32.totalorder %s22, 1
      %p360 = scmp.ne.s32.totalorder %s355, %s357
      %p361 = scmp.eq.s32.totalorder %s22, 0
      %p362 = por %p360, %p361
      %p363 = scmp.ne.s32.totalorder %s355, %s357
      %p364 = scmp.eq.s32.totalorder %s27, 1
      %p365 = por %p363, %p364
      %p366 = scmp.ne.s32.totalorder %s357, %s358
      %p367 = scmp.eq.s32.totalorder %s27, 0
      %p368 = por %p366, %p367
      %p369 = scmp.ne.s32.totalorder %s357, %s358
      %p370 = scmp.eq.s32.totalorder %s28, 1
      %p371 = por %p369, %p370
      %p373 = scmp.ne.s32.totalorder %s358, %s372
      %p374 = scmp.eq.s32.totalorder %s28, 0
      %p375 = por %p373, %p374
      %p376 = scmp.le.s32.totalorder 1, %s22
      %p377 = scmp.lt.s32.totalorder %s22, 3
      %p378 = pnand %p376, %p377
      %p379 = pneg %p378
      // Predicated region
      $region9: #{encoder_layer_forward.2} parent=5 // pred_check
        _
      $region10: #{encoder_layer_forward.2} parent=5 // pred_check_branch
        %381 = sbr.rel (%p378) target = $region12
      $region11: #{encoder_layer_forward.2} parent=5 // pred_region
        %s382 = ssub.s32 %s22, 1
        // Predicated region
        $region13: #{encoder_layer_forward.2} parent=11 // pred_check
          %p383 = pneg %p69
        $region14: #{encoder_layer_forward.2} parent=11 // pred_check_branch
          %385 = sbr.rel (%p383) target = $region16
        $region15: #{encoder_layer_forward.2} parent=11 // pred_region
          _
        $region16: #{encoder_layer_forward.2} parent=11 // pred_fallthru
          _
        // Predicated region
        $region17: #{encoder_layer_forward.2} parent=11 // pred_check
          %p386 = pneg %p90
        $region18: #{encoder_layer_forward.2} parent=11 // pred_check_branch
          %388 = sbr.rel (%p386) target = $region20
        $region19: #{encoder_layer_forward.2} parent=11 // pred_region
          _
        $region20: #{encoder_layer_forward.2} parent=11 // pred_fallthru
          _
        // Predicated region
        $region21: #{encoder_layer_forward.2} parent=11 // pred_check
          %p389 = pneg %p111
        $region22: #{encoder_layer_forward.2} parent=11 // pred_check_branch
          %391 = sbr.rel (%p389) target = $region24
        $region23: #{encoder_layer_forward.2} parent=11 // pred_region
          _
        $region24: #{encoder_layer_forward.2} parent=11 // pred_fallthru
          _
        // Predicated region
        $region25: #{encoder_layer_forward.2} parent=11 // pred_check
          %p392 = pneg %p132
        $region26: #{encoder_layer_forward.2} parent=11 // pred_check_branch
          %394 = sbr.rel (%p392) target = $region28
        $region27: #{encoder_layer_forward.2} parent=11 // pred_region
          _
        $region28: #{encoder_layer_forward.2} parent=11 // pred_fallthru
          _
        // Predicated region
        $region29: #{encoder_layer_forward.2} parent=11 // pred_check
          %p395 = pneg %p153
        $region30: #{encoder_layer_forward.2} parent=11 // pred_check_branch
          %397 = sbr.rel (%p395) target = $region32
        $region31: #{encoder_layer_forward.2} parent=11 // pred_region
          _
        $region32: #{encoder_layer_forward.2} parent=11 // pred_fallthru
          _
        // Predicated region
        $region33: #{encoder_layer_forward.2} parent=11 // pred_check
          %p398 = pneg %p174
        $region34: #{encoder_layer_forward.2} parent=11 // pred_check_branch
          %400 = sbr.rel (%p398) target = $region36
        $region35: #{encoder_layer_forward.2} parent=11 // pred_region
          _
        $region36: #{encoder_layer_forward.2} parent=11 // pred_fallthru
          _
        // Predicated region
        $region37: #{encoder_layer_forward.2} parent=11 // pred_check
          %p401 = pneg %p195
        $region38: #{encoder_layer_forward.2} parent=11 // pred_check_branch
          %403 = sbr.rel (%p401) target = $region40
        $region39: #{encoder_layer_forward.2} parent=11 // pred_region
          _
        $region40: #{encoder_layer_forward.2} parent=11 // pred_fallthru
          _
        // Predicated region
        $region41: #{encoder_layer_forward.2} parent=11 // pred_check
          %p404 = pneg %p216
        $region42: #{encoder_layer_forward.2} parent=11 // pred_check_branch
          %406 = sbr.rel (%p404) target = $region44
        $region43: #{encoder_layer_forward.2} parent=11 // pred_region
          _
        $region44: #{encoder_layer_forward.2} parent=11 // pred_fallthru
          _
        // Predicated region
        $region45: #{encoder_layer_forward.2} parent=11 // pred_check
          %p407 = pneg %p237
        $region46: #{encoder_layer_forward.2} parent=11 // pred_check_branch
          %409 = sbr.rel (%p407) target = $region48
        $region47: #{encoder_layer_forward.2} parent=11 // pred_region
          _
        $region48: #{encoder_layer_forward.2} parent=11 // pred_fallthru
          _
        // Predicated region
        $region49: #{encoder_layer_forward.2} parent=11 // pred_check
          %p410 = pneg %p258
        $region50: #{encoder_layer_forward.2} parent=11 // pred_check_branch
          %412 = sbr.rel (%p410) target = $region52
        $region51: #{encoder_layer_forward.2} parent=11 // pred_region
          _
        $region52: #{encoder_layer_forward.2} parent=11 // pred_fallthru
          _
        // Predicated region
        $region53: #{encoder_layer_forward.2} parent=11 // pred_check
          %p413 = pneg %p279
        $region54: #{encoder_layer_forward.2} parent=11 // pred_check_branch
          %415 = sbr.rel (%p413) target = $region56
        $region55: #{encoder_layer_forward.2} parent=11 // pred_region
          _
        $region56: #{encoder_layer_forward.2} parent=11 // pred_fallthru
          _
      $region12: #{encoder_layer_forward.2} parent=5 // pred_fallthru
        _
      %p416 = scmp.lt.s32.totalorder %s22, 2
      // Predicated region
      $region57: #{encoder_layer_forward.2} parent=5 // pred_check
        %p417 = pneg %p416
      $region58: #{encoder_layer_forward.2} parent=5 // pred_check_branch
        %419 = sbr.rel (%p417) target = $region60
      $region59: #{encoder_layer_forward.2} parent=5 // pred_region
        // Predicated region
        $region61: #{encoder_layer_forward.2} parent=59 // pred_check
          %p420 = pneg %p42
        $region62: #{encoder_layer_forward.2} parent=59 // pred_check_branch
          %422 = sbr.rel (%p420) target = $region64
        $region63: #{encoder_layer_forward.2} parent=59 // pred_region
          %s423 = smul.u32 16, %s22
          %p424 = scmp.lt.s32.totalorder %s423, 31
          %s425 = scalar_select %p424, %s423, 31
          %s426 = smul.addr %s425, 8
          %s427 = scalar_lea.vmem %s0, %s426
          %s428 = smul.u32 16, %s22
        $region64: #{encoder_layer_forward.2} parent=59 // pred_fallthru
          _
      $region60: #{encoder_layer_forward.2} parent=5 // pred_fallthru
        _
      %p429 = scmp.le.s32.totalorder 1, %s22
      %p430 = scmp.lt.s32.totalorder %s22, 3
      %p431 = pnand %p429, %p430
      %p432 = pneg %p431
      // Predicated region
      $region65: #{encoder_layer_forward.2} parent=5 // pred_check
        _
      $region66: #{encoder_layer_forward.2} parent=5 // pred_check_branch
        %434 = sbr.rel (%p431) target = $region68
      $region67: #{encoder_layer_forward.2} parent=5 // pred_region
        %s435 = ssub.s32 %s22, 1
        %s436 = smul.u32 16, %s27
        %p437 = scmp.lt.s32.totalorder %s436, 31
        %s438 = scalar_select %p437, %s436, 31
        %s439 = smul.addr %s438, 8
        %s440 = scalar_lea.vmem %s0, %s439
        %p441 = pneg %p48
        %p442 = pneg %p45
        %p443 = pneg %p69
        %p444 = pneg %p66
        %p445 = pneg %p90
        %p446 = pneg %p87
        %p447 = pneg %p111
        %p448 = pneg %p108
        %p449 = pneg %p132
        %p450 = pneg %p129
        %p451 = pneg %p153
        %p452 = pneg %p150
        %p453 = pneg %p174
        %p454 = pneg %p171
        %p455 = pneg %p195
        %p456 = pneg %p192
        %p457 = pneg %p216
        %p458 = pneg %p213
        %p459 = pneg %p237
        %p460 = pneg %p234
        %p461 = pneg %p258
        %p462 = pneg %p255
        %p463 = pneg %p279
        %p464 = pneg %p276
        %p465 = pneg %p300
        %p466 = pneg %p297
        %p467 = pneg %p326
        %p468 = pneg %p323
        %s469 = sand.u32 %s313, 1
        %s470 = sand.u32 %s313, 1
        %s471 = smul.addr %s470, 32
        %s472 = scalar_lea.vmem [#allocation6], %s471
        %p473 = pneg %p347
        %p474 = pneg %p344
        %p475 = pneg %p368
        %p476 = pneg %p365
        %s477 = smul.u32 16, %s27
        %p478 = scmp.lt.s32.totalorder %s477, 31
        %s479 = scalar_select %p478, %s477, 31
        %s480 = smul.addr %s479, 8
        %s481 = scalar_lea.vmem %s0, %s480
        %s482 = smul.u32 16, %s27
        %p483 = scmp.eq.s32.totalorder %s27, 0
        // Predicated region
        $region69: #{encoder_layer_forward.2} parent=67 // pred_check
          %p484 = pneg %p483
        $region70: #{encoder_layer_forward.2} parent=67 // pred_check_branch
          %486 = sbr.rel (%p484) target = $region72
        $region71: #{encoder_layer_forward.2} parent=67 // pred_region
          %v487 = vld [vmem:[%s1] sm:$0x1f]
          %v488 = vld [vmem:[%s6] sm:$0xff]
          %v489 = vld [vmem:[%s6 + $0x8] sm:$0xff]
          %v490 = vld [vmem:[%s6 + $0x10] sm:$0xff]
          %v491 = vld [vmem:[%s6 + $0x18] sm:$0xff]
          %v492 = vld [vmem:[%s7] sm:$0x1]
          %v494 = vlaneseq
          %v495 = vshrl.u32 %v494, 7
          %v496 = vsub.s32 0, %v495
          %v497 = vrot.slane %v492, %v496
          %vm499 = vcmask 261120
          %v501 = vsel %vm499, %v487, 0
          %503 = vmatprep.subr.mxu0 0.0
          %504 = vmatpush1.msra.mxu0 0.0
          %505 = vmatprep.subr.mxu0 0.0
          %506 = vmatpush1.msra.mxu0 0.0
          %507 = vmatprep.subr.mxu0 0.0
          %508 = vmatpush1.msra.mxu0 0.0
          %509 = vmatprep.subr.mxu0 0.0
          %510 = vmatpush1.msra.mxu0 0.0
          %511 = vmatprep.subr.mxu0 0.0
          %512 = vmatpush1.msra.mxu0 0.0
          %513 = vmatprep.subr.mxu0 0.0
          %514 = vmatpush1.msra.mxu0 0.0
          %515 = vmatprep.subr.mxu0 0.0
          %516 = vmatpush1.msra.mxu0 0.0
          %517 = vmatprep.subr.mxu0 0.0
          %518 = vmatpush1.msra.mxu0 0.0
          %519 = vmatprep.subr.mxu0 0.0
          %520 = vmatpush1.msra.mxu0 0.0
          %521 = vmatprep.subr.mxu0 0.0
          %522 = vmatpush1.msra.mxu0 0.0
          %523 = vmatprep.subr.mxu0 0.0
          %524 = vmatpush1.msra.mxu0 0.0
          %525 = vmatprep.subr.mxu0 0.0
          %526 = vmatpush1.msra.mxu0 0.0
          %527 = vmatprep.subr.mxu0 0.0
          %528 = vmatpush1.msra.mxu0 %v491
          %529 = vmatprep.subr.mxu0 0.0
          %530 = vmatpush1.msra.mxu0 %v490
          %531 = vmatprep.subr.mxu0 0.0
          %532 = vmatpush1.msra.mxu0 %v489
          %533 = vmatprep.subr.mxu0 0.0
          %534 = vmatpush1.msra.mxu0 %v488
          %535 = vmatprep.subr.mxu0 0.0
          %536 = vmatpush2.msra.mxu0 0.0
          %537 = vmatprep.subr.mxu0 0.0
          %538 = vmatpush2.msra.mxu0 0.0
          %539 = vmatprep.subr.mxu0 0.0
          %540 = vmatpush2.msra.mxu0 0.0
          %541 = vmatprep.subr.mxu0 0.0
          %542 = vmatpush2.msra.mxu0 0.0
          %543 = vmatprep.subr.mxu0 0.0
          %544 = vmatpush2.msra.mxu0 0.0
          %545 = vmatprep.subr.mxu0 0.0
          %546 = vmatpush2.msra.mxu0 0.0
          %547 = vmatprep.subr.mxu0 0.0
          %548 = vmatpush2.msra.mxu0 0.0
          %549 = vmatprep.subr.mxu0 0.0
          %550 = vmatpush2.msra.mxu0 0.0
          %551 = vmatprep.subr.mxu0 0.0
          %552 = vmatpush2.msra.mxu0 0.0
          %553 = vmatprep.subr.mxu0 0.0
          %554 = vmatpush2.msra.mxu0 0.0
          %555 = vmatprep.subr.mxu0 0.0
          %556 = vmatpush2.msra.mxu0 0.0
          %557 = vmatprep.subr.mxu0 0.0
          %558 = vmatpush2.msra.mxu0 0.0
          %559 = vmatprep.subr.mxu0 0.0
          %560 = vmatpush2.msra.mxu0 0.0
          %561 = vmatprep.subr.mxu0 0.0
          %562 = vmatpush2.msra.mxu0 0.0
          %563 = vmatprep.subr.mxu0 0.0
          %564 = vmatpush2.msra.mxu0 0.0
          %565 = vmatprep.subr.mxu0 0.0
          %566 = vmatpush2.msra.mxu0 0.0
          %567 = vmatprep.mubr.f32.mxu0 0.0
          %568 = vmatmul.mubr.f32.gmra.mxu0 %v501
          %v569 = vpop.f32.mrf.mxu0
          %v570 = vadd.f32 %v497, %v569
          %v571 = vpop.f32.mrf.mxu0
          %572 = vdwg.mxu0
          %vm573 = vcmask 258048
          %574 = vst.msk [vmem:[#allocation2] sm:$0x1f] %vm573, %v570
          %vm575 = vcmask 61440
          %576 = vst.msk [vmem:[#allocation3] sm:$0x1f] %vm575, 0.0
          %577 = vst.msk [vmem:[#allocation3 + $0x8] sm:$0x1f] %vm575, 0.0
          %578 = vst.msk [vmem:[#allocation3 + $0x10] sm:$0x1f] %vm575, 0.0
          %579 = vst.msk [vmem:[#allocation3 + $0x18] sm:$0x1f] %vm575, 0.0
          %vm580 = vcmask 4096
          %581 = vst.msk [vmem:[#allocation4] sm:$0x1f] %vm580, -1e+30
          %582 = vst.msk [vmem:[#allocation4 + $0x8] sm:$0x1f] %vm580, -1e+30
          %583 = vst.msk [vmem:[#allocation4 + $0x10] sm:$0x1f] %vm580, -1e+30
          %584 = vst.msk [vmem:[#allocation4 + $0x18] sm:$0x1f] %vm580, -1e+30
          %585 = vst.msk [vmem:[#allocation5] sm:$0x1f] %vm580, 0.0
          %586 = vst.msk [vmem:[#allocation5 + $0x8] sm:$0x1f] %vm580, 0.0
          %587 = vst.msk [vmem:[#allocation5 + $0x10] sm:$0x1f] %vm580, 0.0
          %588 = vst.msk [vmem:[#allocation5 + $0x18] sm:$0x1f] %vm580, 0.0
        $region72: #{encoder_layer_forward.2} parent=67 // pred_fallthru
          _
        %v589 = vld [vmem:[%s481] sm:$0xff]
        %v590 = vld [vmem:[%s481 + $0x8] sm:$0xff]
        %v591 = vld [vmem:[%s481 + $0x10] sm:$0xff]
        %v592 = vld [vmem:[%s481 + $0x18] sm:$0xff]
        %v593 = vld [vmem:[%s481 + $0x20] sm:$0xff]
        %v594 = vld [vmem:[%s481 + $0x28] sm:$0xff]
        %v595 = vld [vmem:[%s481 + $0x30] sm:$0xff]
        %v596 = vld [vmem:[%s481 + $0x38] sm:$0xff]
        %v597 = vld [vmem:[%s481 + $0x40] sm:$0xff]
        %v598 = vld [vmem:[%s481 + $0x48] sm:$0xff]
        %v599 = vld [vmem:[%s481 + $0x50] sm:$0xff]
        %v600 = vld [vmem:[%s481 + $0x58] sm:$0xff]
        %v601 = vld [vmem:[%s481 + $0x60] sm:$0xff]
        %v602 = vld [vmem:[%s481 + $0x68] sm:$0xff]
        %v603 = vld [vmem:[%s481 + $0x70] sm:$0xff]
        %v604 = vld [vmem:[%s481 + $0x78] sm:$0xff]
        %v605 = vld [vmem:[%s2] sm:$0x1]
        %v606 = vld [vmem:[%s3] sm:$0x1]
        %vm607 = vcmask 261120
        %v608 = vsel %vm607, %v589, 0.0
        %609 = vadd.xlane.f32.xlu0 %v608
        %v610 = vpop.xlane.xlu0 %609
        %v611 = vsel %vm607, %v590, 0.0
        %612 = vadd.xlane.f32.xlu0 %v611
        %v613 = vpop.xlane.xlu0 %612
        %v614 = vsel %vm607, %v591, 0.0
        %615 = vadd.xlane.f32.xlu0 %v614
        %v616 = vpop.xlane.xlu0 %615
        %v617 = vsel %vm607, %v592, 0.0
        %618 = vadd.xlane.f32.xlu0 %v617
        %v619 = vpop.xlane.xlu0 %618
        %v620 = vsel %vm607, %v593, 0.0
        %621 = vadd.xlane.f32.xlu0 %v620
        %v622 = vpop.xlane.xlu0 %621
        %v623 = vsel %vm607, %v594, 0.0
        %624 = vadd.xlane.f32.xlu0 %v623
        %v625 = vpop.xlane.xlu0 %624
        %v626 = vsel %vm607, %v595, 0.0
        %627 = vadd.xlane.f32.xlu0 %v626
        %v628 = vpop.xlane.xlu0 %627
        %v629 = vsel %vm607, %v596, 0.0
        %630 = vadd.xlane.f32.xlu0 %v629
        %v631 = vpop.xlane.xlu0 %630
        %v632 = vsel %vm607, %v597, 0.0
        %633 = vadd.xlane.f32.xlu0 %v632
        %v634 = vpop.xlane.xlu0 %633
        %v635 = vsel %vm607, %v598, 0.0
        %636 = vadd.xlane.f32.xlu0 %v635
        %v637 = vpop.xlane.xlu0 %636
        %v638 = vsel %vm607, %v599, 0.0
        %639 = vadd.xlane.f32.xlu0 %v638
        %v640 = vpop.xlane.xlu0 %639
        %v641 = vsel %vm607, %v600, 0.0
        %642 = vadd.xlane.f32.xlu0 %v641
        %v643 = vpop.xlane.xlu0 %642
        %v644 = vsel %vm607, %v601, 0.0
        %645 = vadd.xlane.f32.xlu0 %v644
        %v646 = vpop.xlane.xlu0 %645
        %v647 = vsel %vm607, %v602, 0.0
        %648 = vadd.xlane.f32.xlu0 %v647
        %v649 = vpop.xlane.xlu0 %648
        %v650 = vsel %vm607, %v603, 0.0
        %651 = vadd.xlane.f32.xlu0 %v650
        %v652 = vpop.xlane.xlu0 %651
        %v653 = vsel %vm607, %v604, 0.0
        %654 = vadd.xlane.f32.xlu0 %v653
        %v655 = vpop.xlane.xlu0 %654
        %v656 = vrcp.pop 32.0
        %v657 = vmul.f32 %v610, %v656
        %v658 = vmul.f32 %v613, %v656
        %v659 = vmul.f32 %v616, %v656
        %v660 = vmul.f32 %v619, %v656
        %v661 = vmul.f32 %v622, %v656
        %v662 = vmul.f32 %v625, %v656
        %v663 = vmul.f32 %v628, %v656
        %v664 = vmul.f32 %v631, %v656
        %v665 = vmul.f32 %v634, %v656
        %v666 = vmul.f32 %v637, %v656
        %v667 = vmul.f32 %v640, %v656
        %v668 = vmul.f32 %v643, %v656
        %v669 = vmul.f32 %v646, %v656
        %v670 = vmul.f32 %v649, %v656
        %v671 = vmul.f32 %v652, %v656
        %v672 = vmul.f32 %v655, %v656
        %v673 = vsub.f32 %v589, %v657
        %v674 = vsub.f32 %v590, %v658
        %v675 = vsub.f32 %v591, %v659
        %v676 = vsub.f32 %v592, %v660
        %v677 = vsub.f32 %v593, %v661
        %v678 = vsub.f32 %v594, %v662
        %v679 = vsub.f32 %v595, %v663
        %v680 = vsub.f32 %v596, %v664
        %v681 = vsub.f32 %v597, %v665
        %v682 = vsub.f32 %v598, %v666
        %v683 = vsub.f32 %v599, %v667
        %v684 = vsub.f32 %v600, %v668
        %v685 = vsub.f32 %v601, %v669
        %v686 = vsub.f32 %v602, %v670
        %v687 = vsub.f32 %v603, %v671
        %v688 = vsub.f32 %v604, %v672
        %v689 = vmul.f32 %v673, %v673
        %v690 = vmul.f32 %v674, %v674
        %v691 = vmul.f32 %v675, %v675
        %v692 = vmul.f32 %v676, %v676
        %v693 = vmul.f32 %v677, %v677
        %v694 = vmul.f32 %v678, %v678
        %v695 = vmul.f32 %v679, %v679
        %v696 = vmul.f32 %v680, %v680
        %v697 = vmul.f32 %v681, %v681
        %v698 = vmul.f32 %v682, %v682
        %v699 = vmul.f32 %v683, %v683
        %v700 = vmul.f32 %v684, %v684
        %v701 = vmul.f32 %v685, %v685
        %v702 = vmul.f32 %v686, %v686
        %v703 = vmul.f32 %v687, %v687
        %v704 = vmul.f32 %v688, %v688
        %v705 = vsel %vm607, %v689, 0.0
        %706 = vadd.xlane.f32.xlu0 %v705
        %v707 = vpop.xlane.xlu0 %706
        %v708 = vsel %vm607, %v690, 0.0
        %709 = vadd.xlane.f32.xlu0 %v708
        %v710 = vpop.xlane.xlu0 %709
        %v711 = vsel %vm607, %v691, 0.0
        %712 = vadd.xlane.f32.xlu0 %v711
        %v713 = vpop.xlane.xlu0 %712
        %v714 = vsel %vm607, %v692, 0.0
        %715 = vadd.xlane.f32.xlu0 %v714
        %v716 = vpop.xlane.xlu0 %715
        %v717 = vsel %vm607, %v693, 0.0
        %718 = vadd.xlane.f32.xlu0 %v717
        %v719 = vpop.xlane.xlu0 %718
        %v720 = vsel %vm607, %v694, 0.0
        %721 = vadd.xlane.f32.xlu0 %v720
        %v722 = vpop.xlane.xlu0 %721
        %v723 = vsel %vm607, %v695, 0.0
        %724 = vadd.xlane.f32.xlu0 %v723
        %v725 = vpop.xlane.xlu0 %724
        %v726 = vsel %vm607, %v696, 0.0
        %727 = vadd.xlane.f32.xlu0 %v726
        %v728 = vpop.xlane.xlu0 %727
        %v729 = vsel %vm607, %v697, 0.0
        %730 = vadd.xlane.f32.xlu0 %v729
        %v731 = vpop.xlane.xlu0 %730
        %v732 = vsel %vm607, %v698, 0.0
        %733 = vadd.xlane.f32.xlu0 %v732
        %v734 = vpop.xlane.xlu0 %733
        %v735 = vsel %vm607, %v699, 0.0
        %736 = vadd.xlane.f32.xlu0 %v735
        %v737 = vpop.xlane.xlu0 %736
        %v738 = vsel %vm607, %v700, 0.0
        %739 = vadd.xlane.f32.xlu0 %v738
        %v740 = vpop.xlane.xlu0 %739
        %v741 = vsel %vm607, %v701, 0.0
        %742 = vadd.xlane.f32.xlu0 %v741
        %v743 = vpop.xlane.xlu0 %742
        %v744 = vsel %vm607, %v702, 0.0
        %745 = vadd.xlane.f32.xlu0 %v744
        %v746 = vpop.xlane.xlu0 %745
        %v747 = vsel %vm607, %v703, 0.0
        %748 = vadd.xlane.f32.xlu0 %v747
        %v749 = vpop.xlane.xlu0 %748
        %v750 = vsel %vm607, %v704, 0.0
        %751 = vadd.xlane.f32.xlu0 %v750
        %v752 = vpop.xlane.xlu0 %751
        %v753 = vmul.f32 %v707, %v656
        %v754 = vmul.f32 %v710, %v656
        %v755 = vmul.f32 %v713, %v656
        %v756 = vmul.f32 %v716, %v656
        %v757 = vmul.f32 %v719, %v656
        %v758 = vmul.f32 %v722, %v656
        %v759 = vmul.f32 %v725, %v656
        %v760 = vmul.f32 %v728, %v656
        %v761 = vmul.f32 %v731, %v656
        %v762 = vmul.f32 %v734, %v656
        %v763 = vmul.f32 %v737, %v656
        %v764 = vmul.f32 %v740, %v656
        %v765 = vmul.f32 %v743, %v656
        %v766 = vmul.f32 %v746, %v656
        %v767 = vmul.f32 %v749, %v656
        %v768 = vmul.f32 %v752, %v656
        %v769 = vadd.f32 %v753, 1e-05
        %v770 = vadd.f32 %v754, 1e-05
        %v771 = vadd.f32 %v755, 1e-05
        %v772 = vadd.f32 %v756, 1e-05
        %v773 = vadd.f32 %v757, 1e-05
        %v774 = vadd.f32 %v758, 1e-05
        %v775 = vadd.f32 %v759, 1e-05
        %v776 = vadd.f32 %v760, 1e-05
        %v777 = vadd.f32 %v761, 1e-05
        %v778 = vadd.f32 %v762, 1e-05
        %v779 = vadd.f32 %v763, 1e-05
        %v780 = vadd.f32 %v764, 1e-05
        %v781 = vadd.f32 %v765, 1e-05
        %v782 = vadd.f32 %v766, 1e-05
        %v783 = vadd.f32 %v767, 1e-05
        %v784 = vadd.f32 %v768, 1e-05
        %v785 = vrsqrt.pop %v769
        %v786 = vrsqrt.pop %v770
        %v787 = vrsqrt.pop %v771
        %v788 = vrsqrt.pop %v772
        %v789 = vrsqrt.pop %v773
        %v790 = vrsqrt.pop %v774
        %v791 = vrsqrt.pop %v775
        %v792 = vrsqrt.pop %v776
        %v793 = vrsqrt.pop %v777
        %v794 = vrsqrt.pop %v778
        %v795 = vrsqrt.pop %v779
        %v796 = vrsqrt.pop %v780
        %v797 = vrsqrt.pop %v781
        %v798 = vrsqrt.pop %v782
        %v799 = vrsqrt.pop %v783
        %v800 = vrsqrt.pop %v784
        %v801 = vmul.f32 %v673, %v785
        %v802 = vmul.f32 %v674, %v786
        %v803 = vmul.f32 %v675, %v787
        %v804 = vmul.f32 %v676, %v788
        %v805 = vmul.f32 %v677, %v789
        %v806 = vmul.f32 %v678, %v790
        %v807 = vmul.f32 %v679, %v791
        %v808 = vmul.f32 %v680, %v792
        %v809 = vmul.f32 %v681, %v793
        %v810 = vmul.f32 %v682, %v794
        %v811 = vmul.f32 %v683, %v795
        %v812 = vmul.f32 %v684, %v796
        %v813 = vmul.f32 %v685, %v797
        %v814 = vmul.f32 %v686, %v798
        %v815 = vmul.f32 %v687, %v799
        %v816 = vmul.f32 %v688, %v800
        %v818 = vlaneseq
        %v819 = vshrl.u32 %v818, 7
        %v820 = vsub.s32 0, %v819
        %v821 = vrot.slane %v605, %v820
        %v823 = vmul.f32 %v801, %v821
        %v824 = vmul.f32 %v802, %v821
        %v825 = vmul.f32 %v803, %v821
        %v826 = vmul.f32 %v804, %v821
        %v827 = vmul.f32 %v805, %v821
        %v828 = vmul.f32 %v806, %v821
        %v829 = vmul.f32 %v807, %v821
        %v830 = vmul.f32 %v808, %v821
        %v831 = vmul.f32 %v809, %v821
        %v832 = vmul.f32 %v810, %v821
        %v833 = vmul.f32 %v811, %v821
        %v834 = vmul.f32 %v812, %v821
        %v835 = vmul.f32 %v813, %v821
        %v836 = vmul.f32 %v814, %v821
        %v837 = vmul.f32 %v815, %v821
        %v838 = vmul.f32 %v816, %v821
        %v840 = vlaneseq
        %v841 = vshrl.u32 %v840, 7
        %v842 = vsub.s32 0, %v841
        %v843 = vrot.slane %v606, %v842
        %v845 = vadd.f32 %v823, %v843
        %v846 = vadd.f32 %v824, %v843
        %v847 = vadd.f32 %v825, %v843
        %v848 = vadd.f32 %v826, %v843
        %v849 = vadd.f32 %v827, %v843
        %v850 = vadd.f32 %v828, %v843
        %v851 = vadd.f32 %v829, %v843
        %v852 = vadd.f32 %v830, %v843
        %v853 = vadd.f32 %v831, %v843
        %v854 = vadd.f32 %v832, %v843
        %v855 = vadd.f32 %v833, %v843
        %v856 = vadd.f32 %v834, %v843
        %v857 = vadd.f32 %v835, %v843
        %v858 = vadd.f32 %v836, %v843
        %v859 = vadd.f32 %v837, %v843
        %v860 = vadd.f32 %v838, %v843
        %v861 = vld [vmem:[%s4] sm:$0xff]
        %v862 = vld [vmem:[%s4 + $0x8] sm:$0xff]
        %v863 = vld [vmem:[%s4 + $0x10] sm:$0xff]
        %v864 = vld [vmem:[%s4 + $0x18] sm:$0xff]
        %v865 = vld [vmem:[%s5] sm:$0x1]
        %v867 = vlaneseq
        %v868 = vshrl.u32 %v867, 7
        %v869 = vsub.s32 0, %v868
        %v870 = vrot.slane %v865, %v869
        %v873 = vsel %vm607, %v845, 0
        %v876 = vsel %vm607, %v846, 0
        %v879 = vsel %vm607, %v847, 0
        %v882 = vsel %vm607, %v848, 0
        %v885 = vsel %vm607, %v849, 0
        %v888 = vsel %vm607, %v850, 0
        %v891 = vsel %vm607, %v851, 0
        %v894 = vsel %vm607, %v852, 0
        %v897 = vsel %vm607, %v853, 0
        %v900 = vsel %vm607, %v854, 0
        %v903 = vsel %vm607, %v855, 0
        %v906 = vsel %vm607, %v856, 0
        %v909 = vsel %vm607, %v857, 0
        %v912 = vsel %vm607, %v858, 0
        %v915 = vsel %vm607, %v859, 0
        %v918 = vsel %vm607, %v860, 0
        %920 = vmatprep.subr.mxu0 0.0
        %921 = vmatpush1.msra.mxu0 0.0
        %922 = vmatprep.subr.mxu0 0.0
        %923 = vmatpush1.msra.mxu0 0.0
        %924 = vmatprep.subr.mxu0 0.0
        %925 = vmatpush1.msra.mxu0 0.0
        %926 = vmatprep.subr.mxu0 0.0
        %927 = vmatpush1.msra.mxu0 0.0
        %928 = vmatprep.subr.mxu0 0.0
        %929 = vmatpush1.msra.mxu0 0.0
        %930 = vmatprep.subr.mxu0 0.0
        %931 = vmatpush1.msra.mxu0 0.0
        %932 = vmatprep.subr.mxu0 0.0
        %933 = vmatpush1.msra.mxu0 0.0
        %934 = vmatprep.subr.mxu0 0.0
        %935 = vmatpush1.msra.mxu0 0.0
        %936 = vmatprep.subr.mxu0 0.0
        %937 = vmatpush1.msra.mxu0 0.0
        %938 = vmatprep.subr.mxu0 0.0
        %939 = vmatpush1.msra.mxu0 0.0
        %940 = vmatprep.subr.mxu0 0.0
        %941 = vmatpush1.msra.mxu0 0.0
        %942 = vmatprep.subr.mxu0 0.0
        %943 = vmatpush1.msra.mxu0 0.0
        %944 = vmatprep.subr.mxu0 0.0
        %945 = vmatpush1.msra.mxu0 %v864
        %946 = vmatprep.subr.mxu0 0.0
        %947 = vmatpush1.msra.mxu0 %v863
        %948 = vmatprep.subr.mxu0 0.0
        %949 = vmatpush1.msra.mxu0 %v862
        %950 = vmatprep.subr.mxu0 0.0
        %951 = vmatpush1.msra.mxu0 %v861
        %952 = vmatprep.subr.mxu0 0.0
        %953 = vmatpush2.msra.mxu0 0.0
        %954 = vmatprep.subr.mxu0 0.0
        %955 = vmatpush2.msra.mxu0 0.0
        %956 = vmatprep.subr.mxu0 0.0
        %957 = vmatpush2.msra.mxu0 0.0
        %958 = vmatprep.subr.mxu0 0.0
        %959 = vmatpush2.msra.mxu0 0.0
        %960 = vmatprep.subr.mxu0 0.0
        %961 = vmatpush2.msra.mxu0 0.0
        %962 = vmatprep.subr.mxu0 0.0
        %963 = vmatpush2.msra.mxu0 0.0
        %964 = vmatprep.subr.mxu0 0.0
        %965 = vmatpush2.msra.mxu0 0.0
        %966 = vmatprep.subr.mxu0 0.0
        %967 = vmatpush2.msra.mxu0 0.0
        %968 = vmatprep.subr.mxu0 0.0
        %969 = vmatpush2.msra.mxu0 0.0
        %970 = vmatprep.subr.mxu0 0.0
        %971 = vmatpush2.msra.mxu0 0.0
        %972 = vmatprep.subr.mxu0 0.0
        %973 = vmatpush2.msra.mxu0 0.0
        %974 = vmatprep.subr.mxu0 0.0
        %975 = vmatpush2.msra.mxu0 0.0
        %976 = vmatprep.subr.mxu0 0.0
        %977 = vmatpush2.msra.mxu0 0.0
        %978 = vmatprep.subr.mxu0 0.0
        %979 = vmatpush2.msra.mxu0 0.0
        %980 = vmatprep.subr.mxu0 0.0
        %981 = vmatpush2.msra.mxu0 0.0
        %982 = vmatprep.subr.mxu0 0.0
        %983 = vmatpush2.msra.mxu0 0.0
        %984 = vmatprep.mubr.f32.mxu0 0.0
        %985 = vmatmul.mubr.f32.gmra.mxu0 %v873
        %v986 = vpop.f32.mrf.mxu0
        %v987 = vadd.f32 %v870, %v986
        %v988 = vpop.f32.mrf.mxu0
        %989 = vmatprep.mubr.f32.mxu0 0.0
        %990 = vmatmul.mubr.f32.gmra.mxu0 %v876
        %v991 = vpop.f32.mrf.mxu0
        %v992 = vadd.f32 %v870, %v991
        %v993 = vpop.f32.mrf.mxu0
        %994 = vmatprep.mubr.f32.mxu0 0.0
        %995 = vmatmul.mubr.f32.gmra.mxu0 %v879
        %v996 = vpop.f32.mrf.mxu0
        %v997 = vadd.f32 %v870, %v996
        %v998 = vpop.f32.mrf.mxu0
        %999 = vmatprep.mubr.f32.mxu0 0.0
        %1000 = vmatmul.mubr.f32.gmra.mxu0 %v882
        %v1001 = vpop.f32.mrf.mxu0
        %v1002 = vadd.f32 %v870, %v1001
        %v1003 = vpop.f32.mrf.mxu0
        %1004 = vmatprep.mubr.f32.mxu0 0.0
        %1005 = vmatmul.mubr.f32.gmra.mxu0 %v885
        %v1006 = vpop.f32.mrf.mxu0
        %v1007 = vadd.f32 %v870, %v1006
        %v1008 = vpop.f32.mrf.mxu0
        %1009 = vmatprep.mubr.f32.mxu0 0.0
        %1010 = vmatmul.mubr.f32.gmra.mxu0 %v888
        %v1011 = vpop.f32.mrf.mxu0
        %v1012 = vadd.f32 %v870, %v1011
        %v1013 = vpop.f32.mrf.mxu0
        %1014 = vmatprep.mubr.f32.mxu0 0.0
        %1015 = vmatmul.mubr.f32.gmra.mxu0 %v891
        %v1016 = vpop.f32.mrf.mxu0
        %v1017 = vadd.f32 %v870, %v1016
        %v1018 = vpop.f32.mrf.mxu0
        %1019 = vmatprep.mubr.f32.mxu0 0.0
        %1020 = vmatmul.mubr.f32.gmra.mxu0 %v894
        %v1021 = vpop.f32.mrf.mxu0
        %v1022 = vadd.f32 %v870, %v1021
        %v1023 = vpop.f32.mrf.mxu0
        %1024 = vmatprep.mubr.f32.mxu0 0.0
        %1025 = vmatmul.mubr.f32.gmra.mxu0 %v897
        %v1026 = vpop.f32.mrf.mxu0
        %v1027 = vadd.f32 %v870, %v1026
        %v1028 = vpop.f32.mrf.mxu0
        %1029 = vmatprep.mubr.f32.mxu0 0.0
        %1030 = vmatmul.mubr.f32.gmra.mxu0 %v900
        %v1031 = vpop.f32.mrf.mxu0
        %v1032 = vadd.f32 %v870, %v1031
        %v1033 = vpop.f32.mrf.mxu0
        %1034 = vmatprep.mubr.f32.mxu0 0.0
        %1035 = vmatmul.mubr.f32.gmra.mxu0 %v903
        %v1036 = vpop.f32.mrf.mxu0
        %v1037 = vadd.f32 %v870, %v1036
        %v1038 = vpop.f32.mrf.mxu0
        %1039 = vmatprep.mubr.f32.mxu0 0.0
        %1040 = vmatmul.mubr.f32.gmra.mxu0 %v906
        %v1041 = vpop.f32.mrf.mxu0
        %v1042 = vadd.f32 %v870, %v1041
        %v1043 = vpop.f32.mrf.mxu0
        %1044 = vmatprep.mubr.f32.mxu0 0.0
        %1045 = vmatmul.mubr.f32.gmra.mxu0 %v909
        %v1046 = vpop.f32.mrf.mxu0
        %v1047 = vadd.f32 %v870, %v1046
        %v1048 = vpop.f32.mrf.mxu0
        %1049 = vmatprep.mubr.f32.mxu0 0.0
        %1050 = vmatmul.mubr.f32.gmra.mxu0 %v912
        %v1051 = vpop.f32.mrf.mxu0
        %v1052 = vadd.f32 %v870, %v1051
        %v1053 = vpop.f32.mrf.mxu0
        %1054 = vmatprep.mubr.f32.mxu0 0.0
        %1055 = vmatmul.mubr.f32.gmra.mxu0 %v915
        %v1056 = vpop.f32.mrf.mxu0
        %v1057 = vadd.f32 %v870, %v1056
        %v1058 = vpop.f32.mrf.mxu0
        %1059 = vmatprep.mubr.f32.mxu0 0.0
        %1060 = vmatmul.mubr.f32.gmra.mxu0 %v918
        %v1061 = vpop.f32.mrf.mxu0
        %v1062 = vadd.f32 %v870, %v1061
        %v1063 = vpop.f32.mrf.mxu0
        %1064 = vdwg.mxu0
        %v1065 = vld [vmem:[%s8] sm:$0xff]
        %v1066 = vld [vmem:[%s8 + $0x8] sm:$0xff]
        %v1067 = vld [vmem:[%s8 + $0x10] sm:$0xff]
        %v1068 = vld [vmem:[%s8 + $0x18] sm:$0xff]
        %v1069 = vld [vmem:[%s9] sm:$0x1]
        %v1071 = vlaneseq
        %v1072 = vshrl.u32 %v1071, 7
        %v1073 = vsub.s32 0, %v1072
        %v1074 = vrot.slane %v1069, %v1073
        %1076 = vmatprep.subr.mxu0 0.0
        %1077 = vmatpush1.msra.mxu0 0.0
        %1078 = vmatprep.subr.mxu0 0.0
        %1079 = vmatpush1.msra.mxu0 0.0
        %1080 = vmatprep.subr.mxu0 0.0
        %1081 = vmatpush1.msra.mxu0 0.0
        %1082 = vmatprep.subr.mxu0 0.0
        %1083 = vmatpush1.msra.mxu0 0.0
        %1084 = vmatprep.subr.mxu0 0.0
        %1085 = vmatpush1.msra.mxu0 0.0
        %1086 = vmatprep.subr.mxu0 0.0
        %1087 = vmatpush1.msra.mxu0 0.0
        %1088 = vmatprep.subr.mxu0 0.0
        %1089 = vmatpush1.msra.mxu0 0.0
        %1090 = vmatprep.subr.mxu0 0.0
        %1091 = vmatpush1.msra.mxu0 0.0
        %1092 = vmatprep.subr.mxu0 0.0
        %1093 = vmatpush1.msra.mxu0 0.0
        %1094 = vmatprep.subr.mxu0 0.0
        %1095 = vmatpush1.msra.mxu0 0.0
        %1096 = vmatprep.subr.mxu0 0.0
        %1097 = vmatpush1.msra.mxu0 0.0
        %1098 = vmatprep.subr.mxu0 0.0
        %1099 = vmatpush1.msra.mxu0 0.0
        %1100 = vmatprep.subr.mxu0 0.0
        %1101 = vmatpush1.msra.mxu0 %v1068
        %1102 = vmatprep.subr.mxu0 0.0
        %1103 = vmatpush1.msra.mxu0 %v1067
        %1104 = vmatprep.subr.mxu0 0.0
        %1105 = vmatpush1.msra.mxu0 %v1066
        %1106 = vmatprep.subr.mxu0 0.0
        %1107 = vmatpush1.msra.mxu0 %v1065
        %1108 = vmatprep.subr.mxu0 0.0
        %1109 = vmatpush2.msra.mxu0 0.0
        %1110 = vmatprep.subr.mxu0 0.0
        %1111 = vmatpush2.msra.mxu0 0.0
        %1112 = vmatprep.subr.mxu0 0.0
        %1113 = vmatpush2.msra.mxu0 0.0
        %1114 = vmatprep.subr.mxu0 0.0
        %1115 = vmatpush2.msra.mxu0 0.0
        %1116 = vmatprep.subr.mxu0 0.0
        %1117 = vmatpush2.msra.mxu0 0.0
        %1118 = vmatprep.subr.mxu0 0.0
        %1119 = vmatpush2.msra.mxu0 0.0
        %1120 = vmatprep.subr.mxu0 0.0
        %1121 = vmatpush2.msra.mxu0 0.0
        %1122 = vmatprep.subr.mxu0 0.0
        %1123 = vmatpush2.msra.mxu0 0.0
        %1124 = vmatprep.subr.mxu0 0.0
        %1125 = vmatpush2.msra.mxu0 0.0
        %1126 = vmatprep.subr.mxu0 0.0
        %1127 = vmatpush2.msra.mxu0 0.0
        %1128 = vmatprep.subr.mxu0 0.0
        %1129 = vmatpush2.msra.mxu0 0.0
        %1130 = vmatprep.subr.mxu0 0.0
        %1131 = vmatpush2.msra.mxu0 0.0
        %1132 = vmatprep.subr.mxu0 0.0
        %1133 = vmatpush2.msra.mxu0 0.0
        %1134 = vmatprep.subr.mxu0 0.0
        %1135 = vmatpush2.msra.mxu0 0.0
        %1136 = vmatprep.subr.mxu0 0.0
        %1137 = vmatpush2.msra.mxu0 0.0
        %1138 = vmatprep.subr.mxu0 0.0
        %1139 = vmatpush2.msra.mxu0 0.0
        %1140 = vmatprep.mubr.f32.mxu0 0.0
        %1141 = vmatmul.mubr.f32.gmra.mxu0 %v873
        %v1142 = vpop.f32.mrf.mxu0
        %v1143 = vadd.f32 %v1074, %v1142
        %v1144 = vpop.f32.mrf.mxu0
        %1145 = vmatprep.mubr.f32.mxu0 0.0
        %1146 = vmatmul.mubr.f32.gmra.mxu0 %v876
        %v1147 = vpop.f32.mrf.mxu0
        %v1148 = vadd.f32 %v1074, %v1147
        %v1149 = vpop.f32.mrf.mxu0
        %1150 = vmatprep.mubr.f32.mxu0 0.0
        %1151 = vmatmul.mubr.f32.gmra.mxu0 %v879
        %v1152 = vpop.f32.mrf.mxu0
        %v1153 = vadd.f32 %v1074, %v1152
        %v1154 = vpop.f32.mrf.mxu0
        %1155 = vmatprep.mubr.f32.mxu0 0.0
        %1156 = vmatmul.mubr.f32.gmra.mxu0 %v882
        %v1157 = vpop.f32.mrf.mxu0
        %v1158 = vadd.f32 %v1074, %v1157
        %v1159 = vpop.f32.mrf.mxu0
        %1160 = vmatprep.mubr.f32.mxu0 0.0
        %1161 = vmatmul.mubr.f32.gmra.mxu0 %v885
        %v1162 = vpop.f32.mrf.mxu0
        %v1163 = vadd.f32 %v1074, %v1162
        %v1164 = vpop.f32.mrf.mxu0
        %1165 = vmatprep.mubr.f32.mxu0 0.0
        %1166 = vmatmul.mubr.f32.gmra.mxu0 %v888
        %v1167 = vpop.f32.mrf.mxu0
        %v1168 = vadd.f32 %v1074, %v1167
        %v1169 = vpop.f32.mrf.mxu0
        %1170 = vmatprep.mubr.f32.mxu0 0.0
        %1171 = vmatmul.mubr.f32.gmra.mxu0 %v891
        %v1172 = vpop.f32.mrf.mxu0
        %v1173 = vadd.f32 %v1074, %v1172
        %v1174 = vpop.f32.mrf.mxu0
        %1175 = vmatprep.mubr.f32.mxu0 0.0
        %1176 = vmatmul.mubr.f32.gmra.mxu0 %v894
        %v1177 = vpop.f32.mrf.mxu0
        %v1178 = vadd.f32 %v1074, %v1177
        %v1179 = vpop.f32.mrf.mxu0
        %1180 = vmatprep.mubr.f32.mxu0 0.0
        %1181 = vmatmul.mubr.f32.gmra.mxu0 %v897
        %v1182 = vpop.f32.mrf.mxu0
        %v1183 = vadd.f32 %v1074, %v1182
        %v1184 = vpop.f32.mrf.mxu0
        %1185 = vmatprep.mubr.f32.mxu0 0.0
        %1186 = vmatmul.mubr.f32.gmra.mxu0 %v900
        %v1187 = vpop.f32.mrf.mxu0
        %v1188 = vadd.f32 %v1074, %v1187
        %v1189 = vpop.f32.mrf.mxu0
        %1190 = vmatprep.mubr.f32.mxu0 0.0
        %1191 = vmatmul.mubr.f32.gmra.mxu0 %v903
        %v1192 = vpop.f32.mrf.mxu0
        %v1193 = vadd.f32 %v1074, %v1192
        %v1194 = vpop.f32.mrf.mxu0
        %1195 = vmatprep.mubr.f32.mxu0 0.0
        %1196 = vmatmul.mubr.f32.gmra.mxu0 %v906
        %v1197 = vpop.f32.mrf.mxu0
        %v1198 = vadd.f32 %v1074, %v1197
        %v1199 = vpop.f32.mrf.mxu0
        %1200 = vmatprep.mubr.f32.mxu0 0.0
        %1201 = vmatmul.mubr.f32.gmra.mxu0 %v909
        %v1202 = vpop.f32.mrf.mxu0
        %v1203 = vadd.f32 %v1074, %v1202
        %v1204 = vpop.f32.mrf.mxu0
        %1205 = vmatprep.mubr.f32.mxu0 0.0
        %1206 = vmatmul.mubr.f32.gmra.mxu0 %v912
        %v1207 = vpop.f32.mrf.mxu0
        %v1208 = vadd.f32 %v1074, %v1207
        %v1209 = vpop.f32.mrf.mxu0
        %1210 = vmatprep.mubr.f32.mxu0 0.0
        %1211 = vmatmul.mubr.f32.gmra.mxu0 %v915
        %v1212 = vpop.f32.mrf.mxu0
        %v1213 = vadd.f32 %v1074, %v1212
        %v1214 = vpop.f32.mrf.mxu0
        %1215 = vmatprep.mubr.f32.mxu0 0.0
        %1216 = vmatmul.mubr.f32.gmra.mxu0 %v918
        %v1217 = vpop.f32.mrf.mxu0
        %v1218 = vadd.f32 %v1074, %v1217
        %v1219 = vpop.f32.mrf.mxu0
        %1220 = vdwg.mxu0
        %v1221 = vmul.f32 %v987, 0.35355338
        %v1222 = vmul.f32 %v992, 0.35355338
        %v1223 = vmul.f32 %v997, 0.35355338
        %v1224 = vmul.f32 %v1002, 0.35355338
        %v1225 = vmul.f32 %v1007, 0.35355338
        %v1226 = vmul.f32 %v1012, 0.35355338
        %v1227 = vmul.f32 %v1017, 0.35355338
        %v1228 = vmul.f32 %v1022, 0.35355338
        %v1229 = vmul.f32 %v1027, 0.35355338
        %v1230 = vmul.f32 %v1032, 0.35355338
        %v1231 = vmul.f32 %v1037, 0.35355338
        %v1232 = vmul.f32 %v1042, 0.35355338
        %v1233 = vmul.f32 %v1047, 0.35355338
        %v1234 = vmul.f32 %v1052, 0.35355338
        %v1235 = vmul.f32 %v1057, 0.35355338
        %v1236 = vmul.f32 %v1062, 0.35355338
        %s1237 = smul.u32 %s27, 128
        %v1238 = vlaneseq
        %v1239 = vand.u32 %v1238, 127
        %v1240 = vstv %s1237
        %v1241 = vadd.s32 %v1240, %v1239
        %vm1242 = vcmp.lt.s32.totalorder %v1241, 250
        %v1243 = vld [vmem:[#allocation2] sm:$0x1f]
        %vm1244 = vcmask 64512
        %v1246 = vsel %vm1244, %v1243, 0
        %v1249 = vsel %vm1244, %v1221, 0
        %v1252 = vsel %vm1244, %v1222, 0
        %v1255 = vsel %vm1244, %v1223, 0
        %v1258 = vsel %vm1244, %v1224, 0
        %v1261 = vsel %vm1244, %v1225, 0
        %v1264 = vsel %vm1244, %v1226, 0
        %v1267 = vsel %vm1244, %v1227, 0
        %v1270 = vsel %vm1244, %v1228, 0
        %v1273 = vsel %vm1244, %v1229, 0
        %v1276 = vsel %vm1244, %v1230, 0
        %v1279 = vsel %vm1244, %v1231, 0
        %v1282 = vsel %vm1244, %v1232, 0
        %v1285 = vsel %vm1244, %v1233, 0
        %v1288 = vsel %vm1244, %v1234, 0
        %v1291 = vsel %vm1244, %v1235, 0
        %v1294 = vsel %vm1244, %v1236, 0
        %1296 = vmatprep.subr.mxu0 0.0
        %1297 = vmatpush1.xpose.msra.mxu0 %v1294
        %1298 = vmatprep.subr.mxu0 0.0
        %1299 = vmatpush1.xpose.msra.mxu0 %v1291
        %1300 = vmatprep.subr.mxu0 0.0
        %1301 = vmatpush1.xpose.msra.mxu0 %v1288
        %1302 = vmatprep.subr.mxu0 0.0
        %1303 = vmatpush1.xpose.msra.mxu0 %v1285
        %1304 = vmatprep.subr.mxu0 0.0
        %1305 = vmatpush1.xpose.msra.mxu0 %v1282
        %1306 = vmatprep.subr.mxu0 0.0
        %1307 = vmatpush1.xpose.msra.mxu0 %v1279
        %1308 = vmatprep.subr.mxu0 0.0
        %1309 = vmatpush1.xpose.msra.mxu0 %v1276
        %1310 = vmatprep.subr.mxu0 0.0
        %1311 = vmatpush1.xpose.msra.mxu0 %v1273
        %1312 = vmatprep.subr.mxu0 0.0
        %1313 = vmatpush1.xpose.msra.mxu0 %v1270
        %1314 = vmatprep.subr.mxu0 0.0
        %1315 = vmatpush1.xpose.msra.mxu0 %v1267
        %1316 = vmatprep.subr.mxu0 0.0
        %1317 = vmatpush1.xpose.msra.mxu0 %v1264
        %1318 = vmatprep.subr.mxu0 0.0
        %1319 = vmatpush1.xpose.msra.mxu0 %v1261
        %1320 = vmatprep.subr.mxu0 0.0
        %1321 = vmatpush1.xpose.msra.mxu0 %v1258
        %1322 = vmatprep.subr.mxu0 0.0
        %1323 = vmatpush1.xpose.msra.mxu0 %v1255
        %1324 = vmatprep.subr.mxu0 0.0
        %1325 = vmatpush1.xpose.msra.mxu0 %v1252
        %1326 = vmatprep.subr.mxu0 0.0
        %1327 = vmatpush1.xpose.msra.mxu0 %v1249
        %1328 = vmatprep.subr.mxu0 0.0
        %1329 = vmatpush2.xpose.msra.mxu0 0.0
        %1330 = vmatprep.subr.mxu0 0.0
        %1331 = vmatpush2.xpose.msra.mxu0 0.0
        %1332 = vmatprep.subr.mxu0 0.0
        %1333 = vmatpush2.xpose.msra.mxu0 0.0
        %1334 = vmatprep.subr.mxu0 0.0
        %1335 = vmatpush2.xpose.msra.mxu0 0.0
        %1336 = vmatprep.subr.mxu0 0.0
        %1337 = vmatpush2.xpose.msra.mxu0 0.0
        %1338 = vmatprep.subr.mxu0 0.0
        %1339 = vmatpush2.xpose.msra.mxu0 0.0
        %1340 = vmatprep.subr.mxu0 0.0
        %1341 = vmatpush2.xpose.msra.mxu0 0.0
        %1342 = vmatprep.subr.mxu0 0.0
        %1343 = vmatpush2.xpose.msra.mxu0 0.0
        %1344 = vmatprep.subr.mxu0 0.0
        %1345 = vmatpush2.xpose.msra.mxu0 0.0
        %1346 = vmatprep.subr.mxu0 0.0
        %1347 = vmatpush2.xpose.msra.mxu0 0.0
        %1348 = vmatprep.subr.mxu0 0.0
        %1349 = vmatpush2.xpose.msra.mxu0 0.0
        %1350 = vmatprep.subr.mxu0 0.0
        %1351 = vmatpush2.xpose.msra.mxu0 0.0
        %1352 = vmatprep.subr.mxu0 0.0
        %1353 = vmatpush2.xpose.msra.mxu0 0.0
        %1354 = vmatprep.subr.mxu0 0.0
        %1355 = vmatpush2.xpose.msra.mxu0 0.0
        %1356 = vmatprep.subr.mxu0 0.0
        %1357 = vmatpush2.xpose.msra.mxu0 0.0
        %1358 = vmatprep.subr.mxu0 0.0
        %1359 = vmatpush2.xpose.msra.mxu0 0.0
        %1360 = vmatprep.mubr.f32.mxu0 0.0
        %1361 = vmatmul.mubr.f32.gmra.mxu0 %v1246
        %v1362 = vpop.f32.mrf.mxu0
        %v1363 = vadd.f32 0.0, %v1362
        %v1364 = vpop.f32.mrf.mxu0
        %1365 = vdwg.mxu0
        %v1366 = vsel %vm1242, 1, 0
        %vm1367 = vcmp.eq.s32.totalorder %v1366, 1
        %v1368 = vsel %vm1367, %v1363, -1e+30
        %1369 = vst [vmem:[%s472] sm:$0x1f] %v1368
        %v1370 = vld [vmem:[#allocation4] sm:$0x1f]
        %vm1371 = vcmask 1044480
        %v1372 = vsel %vm1371, %v1368, -inf
        %1373 = vmax.xlane.f32.xlu0 %v1372
        %v1374 = vpop.xlane.xlu0 %1373
        %v1375 = vmax.f32 %v1370, %v1374
        %v1376 = vsub.f32 %v1370, %v1375
        %v1377 = vmul.f32 %v1376, 1.442695
        %v1378 = vpow.pop %v1377
        %1380 = vset.pattern.permute.xlu0 0
        %1381 = vperm.xlu0 %1380, %v1375
        %v1382 = vpop.permute.xlu0 %1381
        %v1384 = vsub.f32 %v1368, %v1382
        %v1385 = vmul.f32 %v1384, 1.442695
        %v1386 = vpow.pop %v1385
        %v1387 = vld [vmem:[#allocation5] sm:$0x1f]
        %v1388 = vmul.f32 %v1378, %v1387
        %v1389 = vsel %vm1371, %v1386, 0.0
        %1390 = vadd.xlane.f32.xlu0 %v1389
        %v1391 = vpop.xlane.xlu0 %1390
        %v1392 = vadd.f32 %v1388, %v1391
        %vm1393 = vcmask 4096
        %1394 = vst.msk [vmem:[#allocation5] sm:$0x1f] %vm1393, %v1392
        %1395 = vst.msk [vmem:[#allocation4] sm:$0x1f] %vm1393, %v1375
        %v1396 = vld [vmem:[#allocation3] sm:$0x1f]
        %1398 = vset.pattern.permute.xlu0 0
        %1399 = vperm.xlu0 %1398, %v1378
        %v1400 = vpop.permute.xlu0 %1399
        %v1402 = vmul.f32 %v1400, %v1396
        %1403 = vmatprep.subr.mxu0 0.0
        %1404 = vmatpush1.msra.mxu0 %v1218
        %1405 = vmatprep.subr.mxu0 0.0
        %1406 = vmatpush1.msra.mxu0 %v1213
        %1407 = vmatprep.subr.mxu0 0.0
        %1408 = vmatpush1.msra.mxu0 %v1208
        %1409 = vmatprep.subr.mxu0 0.0
        %1410 = vmatpush1.msra.mxu0 %v1203
        %1411 = vmatprep.subr.mxu0 0.0
        %1412 = vmatpush1.msra.mxu0 %v1198
        %1413 = vmatprep.subr.mxu0 0.0
        %1414 = vmatpush1.msra.mxu0 %v1193
        %1415 = vmatprep.subr.mxu0 0.0
        %1416 = vmatpush1.msra.mxu0 %v1188
        %1417 = vmatprep.subr.mxu0 0.0
        %1418 = vmatpush1.msra.mxu0 %v1183
        %1419 = vmatprep.subr.mxu0 0.0
        %1420 = vmatpush1.msra.mxu0 %v1178
        %1421 = vmatprep.subr.mxu0 0.0
        %1422 = vmatpush1.msra.mxu0 %v1173
        %1423 = vmatprep.subr.mxu0 0.0
        %1424 = vmatpush1.msra.mxu0 %v1168
        %1425 = vmatprep.subr.mxu0 0.0
        %1426 = vmatpush1.msra.mxu0 %v1163
        %1427 = vmatprep.subr.mxu0 0.0
        %1428 = vmatpush1.msra.mxu0 %v1158
        %1429 = vmatprep.subr.mxu0 0.0
        %1430 = vmatpush1.msra.mxu0 %v1153
        %1431 = vmatprep.subr.mxu0 0.0
        %1432 = vmatpush1.msra.mxu0 %v1148
        %1433 = vmatprep.subr.mxu0 0.0
        %1434 = vmatpush1.msra.mxu0 %v1143
        %1435 = vmatprep.subr.mxu0 0.0
        %1436 = vmatpush2.msra.mxu0 0.0
        %1437 = vmatprep.subr.mxu0 0.0
        %1438 = vmatpush2.msra.mxu0 0.0
        %1439 = vmatprep.subr.mxu0 0.0
        %1440 = vmatpush2.msra.mxu0 0.0
        %1441 = vmatprep.subr.mxu0 0.0
        %1442 = vmatpush2.msra.mxu0 0.0
        %1443 = vmatprep.subr.mxu0 0.0
        %1444 = vmatpush2.msra.mxu0 0.0
        %1445 = vmatprep.subr.mxu0 0.0
        %1446 = vmatpush2.msra.mxu0 0.0
        %1447 = vmatprep.subr.mxu0 0.0
        %1448 = vmatpush2.msra.mxu0 0.0
        %1449 = vmatprep.subr.mxu0 0.0
        %1450 = vmatpush2.msra.mxu0 0.0
        %1451 = vmatprep.subr.mxu0 0.0
        %1452 = vmatpush2.msra.mxu0 0.0
        %1453 = vmatprep.subr.mxu0 0.0
        %1454 = vmatpush2.msra.mxu0 0.0
        %1455 = vmatprep.subr.mxu0 0.0
        %1456 = vmatpush2.msra.mxu0 0.0
        %1457 = vmatprep.subr.mxu0 0.0
        %1458 = vmatpush2.msra.mxu0 0.0
        %1459 = vmatprep.subr.mxu0 0.0
        %1460 = vmatpush2.msra.mxu0 0.0
        %1461 = vmatprep.subr.mxu0 0.0
        %1462 = vmatpush2.msra.mxu0 0.0
        %1463 = vmatprep.subr.mxu0 0.0
        %1464 = vmatpush2.msra.mxu0 0.0
        %1465 = vmatprep.subr.mxu0 0.0
        %1466 = vmatpush2.msra.mxu0 0.0
        %1467 = vmatprep.mubr.f32.mxu0 0.0
        %1468 = vmatmul.mubr.f32.gmra.mxu0 %v1386
        %v1469 = vpop.f32.mrf.mxu0
        %v1470 = vadd.f32 0.0, %v1469
        %v1471 = vpop.f32.mrf.mxu0
        %1472 = vdwg.mxu0
        %v1473 = vadd.f32 %v1402, %v1470
        %vm1474 = vcmask 61440
        %1475 = vst.msk [vmem:[#allocation3] sm:$0x1f] %vm1474, %v1473
        %1476 = vrot.lane.b32.xlu0 %v1243, 120
        %v1477 = vpop.permute.xlu0 %1476
        %1478 = vrot.lane.b32.xlu0 %v1221, 120
        %v1479 = vpop.permute.xlu0 %1478
        %1480 = vrot.lane.b32.xlu0 %v1222, 120
        %v1481 = vpop.permute.xlu0 %1480
        %1482 = vrot.lane.b32.xlu0 %v1223, 120
        %v1483 = vpop.permute.xlu0 %1482
        %1484 = vrot.lane.b32.xlu0 %v1224, 120
        %v1485 = vpop.permute.xlu0 %1484
        %1486 = vrot.lane.b32.xlu0 %v1225, 120
        %v1487 = vpop.permute.xlu0 %1486
        %1488 = vrot.lane.b32.xlu0 %v1226, 120
        %v1489 = vpop.permute.xlu0 %1488
        %1490 = vrot.lane.b32.xlu0 %v1227, 120
        %v1491 = vpop.permute.xlu0 %1490
        %1492 = vrot.lane.b32.xlu0 %v1228, 120
        %v1493 = vpop.permute.xlu0 %1492
        %1494 = vrot.lane.b32.xlu0 %v1229, 120
        %v1495 = vpop.permute.xlu0 %1494
        %1496 = vrot.lane.b32.xlu0 %v1230, 120
        %v1497 = vpop.permute.xlu0 %1496
        %1498 = vrot.lane.b32.xlu0 %v1231, 120
        %v1499 = vpop.permute.xlu0 %1498
        %1500 = vrot.lane.b32.xlu0 %v1232, 120
        %v1501 = vpop.permute.xlu0 %1500
        %1502 = vrot.lane.b32.xlu0 %v1233, 120
        %v1503 = vpop.permute.xlu0 %1502
        %1504 = vrot.lane.b32.xlu0 %v1234, 120
        %v1505 = vpop.permute.xlu0 %1504
        %1506 = vrot.lane.b32.xlu0 %v1235, 120
        %v1507 = vpop.permute.xlu0 %1506
        %1508 = vrot.lane.b32.xlu0 %v1236, 120
        %v1509 = vpop.permute.xlu0 %1508
        %v1510 = vsel %vm1244, %v1477, 0
        %v1512 = vsel %vm1244, %v1479, 0
        %v1514 = vsel %vm1244, %v1481, 0
        %v1516 = vsel %vm1244, %v1483, 0
        %v1518 = vsel %vm1244, %v1485, 0
        %v1520 = vsel %vm1244, %v1487, 0
        %v1522 = vsel %vm1244, %v1489, 0
        %v1524 = vsel %vm1244, %v1491, 0
        %v1526 = vsel %vm1244, %v1493, 0
        %v1528 = vsel %vm1244, %v1495, 0
        %v1530 = vsel %vm1244, %v1497, 0
        %v1532 = vsel %vm1244, %v1499, 0
        %v1534 = vsel %vm1244, %v1501, 0
        %v1536 = vsel %vm1244, %v1503, 0
        %v1538 = vsel %vm1244, %v1505, 0
        %v1540 = vsel %vm1244, %v1507, 0
        %v1542 = vsel %vm1244, %v1509, 0
        %1544 = vmatprep.subr.mxu0 0.0
        %1545 = vmatpush1.xpose.msra.mxu0 %v1542
        %1546 = vmatprep.subr.mxu0 0.0
        %1547 = vmatpush1.xpose.msra.mxu0 %v1540
        %1548 = vmatprep.subr.mxu0 0.0
        %1549 = vmatpush1.xpose.msra.mxu0 %v1538
        %1550 = vmatprep.subr.mxu0 0.0
        %1551 = vmatpush1.xpose.msra.mxu0 %v1536
        %1552 = vmatprep.subr.mxu0 0.0
        %1553 = vmatpush1.xpose.msra.mxu0 %v1534
        %1554 = vmatprep.subr.mxu0 0.0
        %1555 = vmatpush1.xpose.msra.mxu0 %v1532
        %1556 = vmatprep.subr.mxu0 0.0
        %1557 = vmatpush1.xpose.msra.mxu0 %v1530
        %1558 = vmatprep.subr.mxu0 0.0
        %1559 = vmatpush1.xpose.msra.mxu0 %v1528
        %1560 = vmatprep.subr.mxu0 0.0
        %1561 = vmatpush1.xpose.msra.mxu0 %v1526
        %1562 = vmatprep.subr.mxu0 0.0
        %1563 = vmatpush1.xpose.msra.mxu0 %v1524
        %1564 = vmatprep.subr.mxu0 0.0
        %1565 = vmatpush1.xpose.msra.mxu0 %v1522
        %1566 = vmatprep.subr.mxu0 0.0
        %1567 = vmatpush1.xpose.msra.mxu0 %v1520
        %1568 = vmatprep.subr.mxu0 0.0
        %1569 = vmatpush1.xpose.msra.mxu0 %v1518
        %1570 = vmatprep.subr.mxu0 0.0
        %1571 = vmatpush1.xpose.msra.mxu0 %v1516
        %1572 = vmatprep.subr.mxu0 0.0
        %1573 = vmatpush1.xpose.msra.mxu0 %v1514
        %1574 = vmatprep.subr.mxu0 0.0
        %1575 = vmatpush1.xpose.msra.mxu0 %v1512
        %1576 = vmatprep.subr.mxu0 0.0
        %1577 = vmatpush2.xpose.msra.mxu0 0.0
        %1578 = vmatprep.subr.mxu0 0.0
        %1579 = vmatpush2.xpose.msra.mxu0 0.0
        %1580 = vmatprep.subr.mxu0 0.0
        %1581 = vmatpush2.xpose.msra.mxu0 0.0
        %1582 = vmatprep.subr.mxu0 0.0
        %1583 = vmatpush2.xpose.msra.mxu0 0.0
        %1584 = vmatprep.subr.mxu0 0.0
        %1585 = vmatpush2.xpose.msra.mxu0 0.0
        %1586 = vmatprep.subr.mxu0 0.0
        %1587 = vmatpush2.xpose.msra.mxu0 0.0
        %1588 = vmatprep.subr.mxu0 0.0
        %1589 = vmatpush2.xpose.msra.mxu0 0.0
        %1590 = vmatprep.subr.mxu0 0.0
        %1591 = vmatpush2.xpose.msra.mxu0 0.0
        %1592 = vmatprep.subr.mxu0 0.0
        %1593 = vmatpush2.xpose.msra.mxu0 0.0
        %1594 = vmatprep.subr.mxu0 0.0
        %1595 = vmatpush2.xpose.msra.mxu0 0.0
        %1596 = vmatprep.subr.mxu0 0.0
        %1597 = vmatpush2.xpose.msra.mxu0 0.0
        %1598 = vmatprep.subr.mxu0 0.0
        %1599 = vmatpush2.xpose.msra.mxu0 0.0
        %1600 = vmatprep.subr.mxu0 0.0
        %1601 = vmatpush2.xpose.msra.mxu0 0.0
        %1602 = vmatprep.subr.mxu0 0.0
        %1603 = vmatpush2.xpose.msra.mxu0 0.0
        %1604 = vmatprep.subr.mxu0 0.0
        %1605 = vmatpush2.xpose.msra.mxu0 0.0
        %1606 = vmatprep.subr.mxu0 0.0
        %1607 = vmatpush2.xpose.msra.mxu0 0.0
        %1608 = vmatprep.mubr.f32.mxu0 0.0
        %1609 = vmatmul.mubr.f32.gmra.mxu0 %v1510
        %v1610 = vpop.f32.mrf.mxu0
        %v1611 = vadd.f32 0.0, %v1610
        %v1612 = vpop.f32.mrf.mxu0
        %1613 = vdwg.mxu0
        %v1614 = vsel %vm1367, %v1611, -1e+30
        %s1615 = scalar_lea.vmem %s472, 8 [#allocation6]
        %1616 = vst [vmem:[%s1615] sm:$0x1f] %v1614
        %s1617 = scalar_lea.vmem [#allocation4], 8
        %v1618 = vld [vmem:[%s1617] sm:$0x1f]
        %v1619 = vsel %vm1371, %v1614, -inf
        %1620 = vmax.xlane.f32.xlu0 %v1619
        %v1621 = vpop.xlane.xlu0 %1620
        %v1622 = vmax.f32 %v1618, %v1621
        %v1623 = vsub.f32 %v1618, %v1622
        %v1624 = vmul.f32 %v1623, 1.442695
        %v1625 = vpow.pop %v1624
        %1627 = vset.pattern.permute.xlu0 0
        %1628 = vperm.xlu0 %1627, %v1622
        %v1629 = vpop.permute.xlu0 %1628
        %v1631 = vsub.f32 %v1614, %v1629
        %v1632 = vmul.f32 %v1631, 1.442695
        %v1633 = vpow.pop %v1632
        %s1634 = scalar_lea.vmem [#allocation5], 8
        %v1635 = vld [vmem:[%s1634] sm:$0x1f]
        %v1636 = vmul.f32 %v1625, %v1635
        %v1637 = vsel %vm1371, %v1633, 0.0
        %1638 = vadd.xlane.f32.xlu0 %v1637
        %v1639 = vpop.xlane.xlu0 %1638
        %v1640 = vadd.f32 %v1636, %v1639
        %1641 = vst.msk [vmem:[%s1634] sm:$0x1f] %vm1393, %v1640
        %1642 = vst.msk [vmem:[%s1617] sm:$0x1f] %vm1393, %v1622
        %s1643 = scalar_lea.vmem [#allocation3], 8
        %v1644 = vld [vmem:[%s1643] sm:$0x1f]
        %1646 = vset.pattern.permute.xlu0 0
        %1647 = vperm.xlu0 %1646, %v1625
        %v1648 = vpop.permute.xlu0 %1647
        %v1650 = vmul.f32 %v1648, %v1644
        %1667 = vrot.lane.b32.xlu0 %v1143, 120
        %v1668 = vpop.permute.xlu0 %1667
        %1669 = vrot.lane.b32.xlu0 %v1148, 120
        %v1670 = vpop.permute.xlu0 %1669
        %1671 = vrot.lane.b32.xlu0 %v1153, 120
        %v1672 = vpop.permute.xlu0 %1671
        %1673 = vrot.lane.b32.xlu0 %v1158, 120
        %v1674 = vpop.permute.xlu0 %1673
        %1675 = vrot.lane.b32.xlu0 %v1163, 120
        %v1676 = vpop.permute.xlu0 %1675
        %1677 = vrot.lane.b32.xlu0 %v1168, 120
        %v1678 = vpop.permute.xlu0 %1677
        %1679 = vrot.lane.b32.xlu0 %v1173, 120
        %v1680 = vpop.permute.xlu0 %1679
        %1681 = vrot.lane.b32.xlu0 %v1178, 120
        %v1682 = vpop.permute.xlu0 %1681
        %1683 = vrot.lane.b32.xlu0 %v1183, 120
        %v1684 = vpop.permute.xlu0 %1683
        %1685 = vrot.lane.b32.xlu0 %v1188, 120
        %v1686 = vpop.permute.xlu0 %1685
        %1687 = vrot.lane.b32.xlu0 %v1193, 120
        %v1688 = vpop.permute.xlu0 %1687
        %1689 = vrot.lane.b32.xlu0 %v1198, 120
        %v1690 = vpop.permute.xlu0 %1689
        %1691 = vrot.lane.b32.xlu0 %v1203, 120
        %v1692 = vpop.permute.xlu0 %1691
        %1693 = vrot.lane.b32.xlu0 %v1208, 120
        %v1694 = vpop.permute.xlu0 %1693
        %1695 = vrot.lane.b32.xlu0 %v1213, 120
        %v1696 = vpop.permute.xlu0 %1695
        %1697 = vrot.lane.b32.xlu0 %v1218, 120
        %v1698 = vpop.permute.xlu0 %1697
        %1715 = vmatprep.subr.mxu0 0.0
        %1716 = vmatpush1.msra.mxu0 %v1698
        %1717 = vmatprep.subr.mxu0 0.0
        %1718 = vmatpush1.msra.mxu0 %v1696
        %1719 = vmatprep.subr.mxu0 0.0
        %1720 = vmatpush1.msra.mxu0 %v1694
        %1721 = vmatprep.subr.mxu0 0.0
        %1722 = vmatpush1.msra.mxu0 %v1692
        %1723 = vmatprep.subr.mxu0 0.0
        %1724 = vmatpush1.msra.mxu0 %v1690
        %1725 = vmatprep.subr.mxu0 0.0
        %1726 = vmatpush1.msra.mxu0 %v1688
        %1727 = vmatprep.subr.mxu0 0.0
        %1728 = vmatpush1.msra.mxu0 %v1686
        %1729 = vmatprep.subr.mxu0 0.0
        %1730 = vmatpush1.msra.mxu0 %v1684
        %1731 = vmatprep.subr.mxu0 0.0
        %1732 = vmatpush1.msra.mxu0 %v1682
        %1733 = vmatprep.subr.mxu0 0.0
        %1734 = vmatpush1.msra.mxu0 %v1680
        %1735 = vmatprep.subr.mxu0 0.0
        %1736 = vmatpush1.msra.mxu0 %v1678
        %1737 = vmatprep.subr.mxu0 0.0
        %1738 = vmatpush1.msra.mxu0 %v1676
        %1739 = vmatprep.subr.mxu0 0.0
        %1740 = vmatpush1.msra.mxu0 %v1674
        %1741 = vmatprep.subr.mxu0 0.0
        %1742 = vmatpush1.msra.mxu0 %v1672
        %1743 = vmatprep.subr.mxu0 0.0
        %1744 = vmatpush1.msra.mxu0 %v1670
        %1745 = vmatprep.subr.mxu0 0.0
        %1746 = vmatpush1.msra.mxu0 %v1668
        %1747 = vmatprep.subr.mxu0 0.0
        %1748 = vmatpush2.msra.mxu0 0.0
        %1749 = vmatprep.subr.mxu0 0.0
        %1750 = vmatpush2.msra.mxu0 0.0
        %1751 = vmatprep.subr.mxu0 0.0
        %1752 = vmatpush2.msra.mxu0 0.0
        %1753 = vmatprep.subr.mxu0 0.0
        %1754 = vmatpush2.msra.mxu0 0.0
        %1755 = vmatprep.subr.mxu0 0.0
        %1756 = vmatpush2.msra.mxu0 0.0
        %1757 = vmatprep.subr.mxu0 0.0
        %1758 = vmatpush2.msra.mxu0 0.0
        %1759 = vmatprep.subr.mxu0 0.0
        %1760 = vmatpush2.msra.mxu0 0.0
        %1761 = vmatprep.subr.mxu0 0.0
        %1762 = vmatpush2.msra.mxu0 0.0
        %1763 = vmatprep.subr.mxu0 0.0
        %1764 = vmatpush2.msra.mxu0 0.0
        %1765 = vmatprep.subr.mxu0 0.0
        %1766 = vmatpush2.msra.mxu0 0.0
        %1767 = vmatprep.subr.mxu0 0.0
        %1768 = vmatpush2.msra.mxu0 0.0
        %1769 = vmatprep.subr.mxu0 0.0
        %1770 = vmatpush2.msra.mxu0 0.0
        %1771 = vmatprep.subr.mxu0 0.0
        %1772 = vmatpush2.msra.mxu0 0.0
        %1773 = vmatprep.subr.mxu0 0.0
        %1774 = vmatpush2.msra.mxu0 0.0
        %1775 = vmatprep.subr.mxu0 0.0
        %1776 = vmatpush2.msra.mxu0 0.0
        %1777 = vmatprep.subr.mxu0 0.0
        %1778 = vmatpush2.msra.mxu0 0.0
        %1779 = vmatprep.mubr.f32.mxu0 0.0
        %1780 = vmatmul.mubr.f32.gmra.mxu0 %v1633
        %v1781 = vpop.f32.mrf.mxu0
        %v1782 = vadd.f32 0.0, %v1781
        %v1783 = vpop.f32.mrf.mxu0
        %1784 = vdwg.mxu0
        %v1785 = vadd.f32 %v1650, %v1782
        %1786 = vst.msk [vmem:[%s1643] sm:$0x1f] %vm1474, %v1785
        %1787 = vrot.lane.b32.xlu0 %v1243, 112
        %v1788 = vpop.permute.xlu0 %1787
        %1789 = vrot.lane.b32.xlu0 %v1221, 112
        %v1790 = vpop.permute.xlu0 %1789
        %1791 = vrot.lane.b32.xlu0 %v1222, 112
        %v1792 = vpop.permute.xlu0 %1791
        %1793 = vrot.lane.b32.xlu0 %v1223, 112
        %v1794 = vpop.permute.xlu0 %1793
        %1795 = vrot.lane.b32.xlu0 %v1224, 112
        %v1796 = vpop.permute.xlu0 %1795
        %1797 = vrot.lane.b32.xlu0 %v1225, 112
        %v1798 = vpop.permute.xlu0 %1797
        %1799 = vrot.lane.b32.xlu0 %v1226, 112
        %v1800 = vpop.permute.xlu0 %1799
        %1801 = vrot.lane.b32.xlu0 %v1227, 112
        %v1802 = vpop.permute.xlu0 %1801
        %1803 = vrot.lane.b32.xlu0 %v1228, 112
        %v1804 = vpop.permute.xlu0 %1803
        %1805 = vrot.lane.b32.xlu0 %v1229, 112
        %v1806 = vpop.permute.xlu0 %1805
        %1807 = vrot.lane.b32.xlu0 %v1230, 112
        %v1808 = vpop.permute.xlu0 %1807
        %1809 = vrot.lane.b32.xlu0 %v1231, 112
        %v1810 = vpop.permute.xlu0 %1809
        %1811 = vrot.lane.b32.xlu0 %v1232, 112
        %v1812 = vpop.permute.xlu0 %1811
        %1813 = vrot.lane.b32.xlu0 %v1233, 112
        %v1814 = vpop.permute.xlu0 %1813
        %1815 = vrot.lane.b32.xlu0 %v1234, 112
        %v1816 = vpop.permute.xlu0 %1815
        %1817 = vrot.lane.b32.xlu0 %v1235, 112
        %v1818 = vpop.permute.xlu0 %1817
        %1819 = vrot.lane.b32.xlu0 %v1236, 112
        %v1820 = vpop.permute.xlu0 %1819
        %v1821 = vsel %vm1244, %v1788, 0
        %v1823 = vsel %vm1244, %v1790, 0
        %v1825 = vsel %vm1244, %v1792, 0
        %v1827 = vsel %vm1244, %v1794, 0
        %v1829 = vsel %vm1244, %v1796, 0
        %v1831 = vsel %vm1244, %v1798, 0
        %v1833 = vsel %vm1244, %v1800, 0
        %v1835 = vsel %vm1244, %v1802, 0
        %v1837 = vsel %vm1244, %v1804, 0
        %v1839 = vsel %vm1244, %v1806, 0
        %v1841 = vsel %vm1244, %v1808, 0
        %v1843 = vsel %vm1244, %v1810, 0
        %v1845 = vsel %vm1244, %v1812, 0
        %v1847 = vsel %vm1244, %v1814, 0
        %v1849 = vsel %vm1244, %v1816, 0
        %v1851 = vsel %vm1244, %v1818, 0
        %v1853 = vsel %vm1244, %v1820, 0
        %1855 = vmatprep.subr.mxu0 0.0
        %1856 = vmatpush1.xpose.msra.mxu0 %v1853
        %1857 = vmatprep.subr.mxu0 0.0
        %1858 = vmatpush1.xpose.msra.mxu0 %v1851
        %1859 = vmatprep.subr.mxu0 0.0
        %1860 = vmatpush1.xpose.msra.mxu0 %v1849
        %1861 = vmatprep.subr.mxu0 0.0
        %1862 = vmatpush1.xpose.msra.mxu0 %v1847
        %1863 = vmatprep.subr.mxu0 0.0
        %1864 = vmatpush1.xpose.msra.mxu0 %v1845
        %1865 = vmatprep.subr.mxu0 0.0
        %1866 = vmatpush1.xpose.msra.mxu0 %v1843
        %1867 = vmatprep.subr.mxu0 0.0
        %1868 = vmatpush1.xpose.msra.mxu0 %v1841
        %1869 = vmatprep.subr.mxu0 0.0
        %1870 = vmatpush1.xpose.msra.mxu0 %v1839
        %1871 = vmatprep.subr.mxu0 0.0
        %1872 = vmatpush1.xpose.msra.mxu0 %v1837
        %1873 = vmatprep.subr.mxu0 0.0
        %1874 = vmatpush1.xpose.msra.mxu0 %v1835
        %1875 = vmatprep.subr.mxu0 0.0
        %1876 = vmatpush1.xpose.msra.mxu0 %v1833
        %1877 = vmatprep.subr.mxu0 0.0
        %1878 = vmatpush1.xpose.msra.mxu0 %v1831
        %1879 = vmatprep.subr.mxu0 0.0
        %1880 = vmatpush1.xpose.msra.mxu0 %v1829
        %1881 = vmatprep.subr.mxu0 0.0
        %1882 = vmatpush1.xpose.msra.mxu0 %v1827
        %1883 = vmatprep.subr.mxu0 0.0
        %1884 = vmatpush1.xpose.msra.mxu0 %v1825
        %1885 = vmatprep.subr.mxu0 0.0
        %1886 = vmatpush1.xpose.msra.mxu0 %v1823
        %1887 = vmatprep.subr.mxu0 0.0
        %1888 = vmatpush2.xpose.msra.mxu0 0.0
        %1889 = vmatprep.subr.mxu0 0.0
        %1890 = vmatpush2.xpose.msra.mxu0 0.0
        %1891 = vmatprep.subr.mxu0 0.0
        %1892 = vmatpush2.xpose.msra.mxu0 0.0
        %1893 = vmatprep.subr.mxu0 0.0
        %1894 = vmatpush2.xpose.msra.mxu0 0.0
        %1895 = vmatprep.subr.mxu0 0.0
        %1896 = vmatpush2.xpose.msra.mxu0 0.0
        %1897 = vmatprep.subr.mxu0 0.0
        %1898 = vmatpush2.xpose.msra.mxu0 0.0
        %1899 = vmatprep.subr.mxu0 0.0
        %1900 = vmatpush2.xpose.msra.mxu0 0.0
        %1901 = vmatprep.subr.mxu0 0.0
        %1902 = vmatpush2.xpose.msra.mxu0 0.0
        %1903 = vmatprep.subr.mxu0 0.0
        %1904 = vmatpush2.xpose.msra.mxu0 0.0
        %1905 = vmatprep.subr.mxu0 0.0
        %1906 = vmatpush2.xpose.msra.mxu0 0.0
        %1907 = vmatprep.subr.mxu0 0.0
        %1908 = vmatpush2.xpose.msra.mxu0 0.0
        %1909 = vmatprep.subr.mxu0 0.0
        %1910 = vmatpush2.xpose.msra.mxu0 0.0
        %1911 = vmatprep.subr.mxu0 0.0
        %1912 = vmatpush2.xpose.msra.mxu0 0.0
        %1913 = vmatprep.subr.mxu0 0.0
        %1914 = vmatpush2.xpose.msra.mxu0 0.0
        %1915 = vmatprep.subr.mxu0 0.0
        %1916 = vmatpush2.xpose.msra.mxu0 0.0
        %1917 = vmatprep.subr.mxu0 0.0
        %1918 = vmatpush2.xpose.msra.mxu0 0.0
        %1919 = vmatprep.mubr.f32.mxu0 0.0
        %1920 = vmatmul.mubr.f32.gmra.mxu0 %v1821
        %v1921 = vpop.f32.mrf.mxu0
        %v1922 = vadd.f32 0.0, %v1921
        %v1923 = vpop.f32.mrf.mxu0
        %1924 = vdwg.mxu0
        %v1925 = vsel %vm1367, %v1922, -1e+30
        %s1926 = scalar_lea.vmem %s472, 16 [#allocation6]
        %1927 = vst [vmem:[%s1926] sm:$0x1f] %v1925
        %s1928 = scalar_lea.vmem [#allocation4], 16
        %v1929 = vld [vmem:[%s1928] sm:$0x1f]
        %v1930 = vsel %vm1371, %v1925, -inf
        %1931 = vmax.xlane.f32.xlu0 %v1930
        %v1932 = vpop.xlane.xlu0 %1931
        %v1933 = vmax.f32 %v1929, %v1932
        %v1934 = vsub.f32 %v1929, %v1933
        %v1935 = vmul.f32 %v1934, 1.442695
        %v1936 = vpow.pop %v1935
        %1938 = vset.pattern.permute.xlu0 0
        %1939 = vperm.xlu0 %1938, %v1933
        %v1940 = vpop.permute.xlu0 %1939
        %v1942 = vsub.f32 %v1925, %v1940
        %v1943 = vmul.f32 %v1942, 1.442695
        %v1944 = vpow.pop %v1943
        %s1945 = scalar_lea.vmem [#allocation5], 16
        %v1946 = vld [vmem:[%s1945] sm:$0x1f]
        %v1947 = vmul.f32 %v1936, %v1946
        %v1948 = vsel %vm1371, %v1944, 0.0
        %1949 = vadd.xlane.f32.xlu0 %v1948
        %v1950 = vpop.xlane.xlu0 %1949
        %v1951 = vadd.f32 %v1947, %v1950
        %1952 = vst.msk [vmem:[%s1945] sm:$0x1f] %vm1393, %v1951
        %1953 = vst.msk [vmem:[%s1928] sm:$0x1f] %vm1393, %v1933
        %s1954 = scalar_lea.vmem [#allocation3], 16
        %v1955 = vld [vmem:[%s1954] sm:$0x1f]
        %1957 = vset.pattern.permute.xlu0 0
        %1958 = vperm.xlu0 %1957, %v1936
        %v1959 = vpop.permute.xlu0 %1958
        %v1961 = vmul.f32 %v1959, %v1955
        %1962 = vrot.lane.b32.xlu0 %v1143, 112
        %v1963 = vpop.permute.xlu0 %1962
        %1964 = vrot.lane.b32.xlu0 %v1148, 112
        %v1965 = vpop.permute.xlu0 %1964
        %1966 = vrot.lane.b32.xlu0 %v1153, 112
        %v1967 = vpop.permute.xlu0 %1966
        %1968 = vrot.lane.b32.xlu0 %v1158, 112
        %v1969 = vpop.permute.xlu0 %1968
        %1970 = vrot.lane.b32.xlu0 %v1163, 112
        %v1971 = vpop.permute.xlu0 %1970
        %1972 = vrot.lane.b32.xlu0 %v1168, 112
        %v1973 = vpop.permute.xlu0 %1972
        %1974 = vrot.lane.b32.xlu0 %v1173, 112
        %v1975 = vpop.permute.xlu0 %1974
        %1976 = vrot.lane.b32.xlu0 %v1178, 112
        %v1977 = vpop.permute.xlu0 %1976
        %1978 = vrot.lane.b32.xlu0 %v1183, 112
        %v1979 = vpop.permute.xlu0 %1978
        %1980 = vrot.lane.b32.xlu0 %v1188, 112
        %v1981 = vpop.permute.xlu0 %1980
        %1982 = vrot.lane.b32.xlu0 %v1193, 112
        %v1983 = vpop.permute.xlu0 %1982
        %1984 = vrot.lane.b32.xlu0 %v1198, 112
        %v1985 = vpop.permute.xlu0 %1984
        %1986 = vrot.lane.b32.xlu0 %v1203, 112
        %v1987 = vpop.permute.xlu0 %1986
        %1988 = vrot.lane.b32.xlu0 %v1208, 112
        %v1989 = vpop.permute.xlu0 %1988
        %1990 = vrot.lane.b32.xlu0 %v1213, 112
        %v1991 = vpop.permute.xlu0 %1990
        %1992 = vrot.lane.b32.xlu0 %v1218, 112
        %v1993 = vpop.permute.xlu0 %1992
        %2010 = vmatprep.subr.mxu0 0.0
        %2011 = vmatpush1.msra.mxu0 %v1993
        %2012 = vmatprep.subr.mxu0 0.0
        %2013 = vmatpush1.msra.mxu0 %v1991
        %2014 = vmatprep.subr.mxu0 0.0
        %2015 = vmatpush1.msra.mxu0 %v1989
        %2016 = vmatprep.subr.mxu0 0.0
        %2017 = vmatpush1.msra.mxu0 %v1987
        %2018 = vmatprep.subr.mxu0 0.0
        %2019 = vmatpush1.msra.mxu0 %v1985
        %2020 = vmatprep.subr.mxu0 0.0
        %2021 = vmatpush1.msra.mxu0 %v1983
        %2022 = vmatprep.subr.mxu0 0.0
        %2023 = vmatpush1.msra.mxu0 %v1981
        %2024 = vmatprep.subr.mxu0 0.0
        %2025 = vmatpush1.msra.mxu0 %v1979
        %2026 = vmatprep.subr.mxu0 0.0
        %2027 = vmatpush1.msra.mxu0 %v1977
        %2028 = vmatprep.subr.mxu0 0.0
        %2029 = vmatpush1.msra.mxu0 %v1975
        %2030 = vmatprep.subr.mxu0 0.0
        %2031 = vmatpush1.msra.mxu0 %v1973
        %2032 = vmatprep.subr.mxu0 0.0
        %2033 = vmatpush1.msra.mxu0 %v1971
        %2034 = vmatprep.subr.mxu0 0.0
        %2035 = vmatpush1.msra.mxu0 %v1969
        %2036 = vmatprep.subr.mxu0 0.0
        %2037 = vmatpush1.msra.mxu0 %v1967
        %2038 = vmatprep.subr.mxu0 0.0
        %2039 = vmatpush1.msra.mxu0 %v1965
        %2040 = vmatprep.subr.mxu0 0.0
        %2041 = vmatpush1.msra.mxu0 %v1963
        %2042 = vmatprep.subr.mxu0 0.0
        %2043 = vmatpush2.msra.mxu0 0.0
        %2044 = vmatprep.subr.mxu0 0.0
        %2045 = vmatpush2.msra.mxu0 0.0
        %2046 = vmatprep.subr.mxu0 0.0
        %2047 = vmatpush2.msra.mxu0 0.0
        %2048 = vmatprep.subr.mxu0 0.0
        %2049 = vmatpush2.msra.mxu0 0.0
        %2050 = vmatprep.subr.mxu0 0.0
        %2051 = vmatpush2.msra.mxu0 0.0
        %2052 = vmatprep.subr.mxu0 0.0
        %2053 = vmatpush2.msra.mxu0 0.0
        %2054 = vmatprep.subr.mxu0 0.0
        %2055 = vmatpush2.msra.mxu0 0.0
        %2056 = vmatprep.subr.mxu0 0.0
        %2057 = vmatpush2.msra.mxu0 0.0
        %2058 = vmatprep.subr.mxu0 0.0
        %2059 = vmatpush2.msra.mxu0 0.0
        %2060 = vmatprep.subr.mxu0 0.0
        %2061 = vmatpush2.msra.mxu0 0.0
        %2062 = vmatprep.subr.mxu0 0.0
        %2063 = vmatpush2.msra.mxu0 0.0
        %2064 = vmatprep.subr.mxu0 0.0
        %2065 = vmatpush2.msra.mxu0 0.0
        %2066 = vmatprep.subr.mxu0 0.0
        %2067 = vmatpush2.msra.mxu0 0.0
        %2068 = vmatprep.subr.mxu0 0.0
        %2069 = vmatpush2.msra.mxu0 0.0
        %2070 = vmatprep.subr.mxu0 0.0
        %2071 = vmatpush2.msra.mxu0 0.0
        %2072 = vmatprep.subr.mxu0 0.0
        %2073 = vmatpush2.msra.mxu0 0.0
        %2074 = vmatprep.mubr.f32.mxu0 0.0
        %2075 = vmatmul.mubr.f32.gmra.mxu0 %v1944
        %v2076 = vpop.f32.mrf.mxu0
        %v2077 = vadd.f32 0.0, %v2076
        %v2078 = vpop.f32.mrf.mxu0
        %2079 = vdwg.mxu0
        %v2080 = vadd.f32 %v1961, %v2077
        %2081 = vst.msk [vmem:[%s1954] sm:$0x1f] %vm1474, %v2080
        %2082 = vrot.lane.b32.xlu0 %v1243, 104
        %v2083 = vpop.permute.xlu0 %2082
        %2084 = vrot.lane.b32.xlu0 %v1221, 104
        %v2085 = vpop.permute.xlu0 %2084
        %2086 = vrot.lane.b32.xlu0 %v1222, 104
        %v2087 = vpop.permute.xlu0 %2086
        %2088 = vrot.lane.b32.xlu0 %v1223, 104
        %v2089 = vpop.permute.xlu0 %2088
        %2090 = vrot.lane.b32.xlu0 %v1224, 104
        %v2091 = vpop.permute.xlu0 %2090
        %2092 = vrot.lane.b32.xlu0 %v1225, 104
        %v2093 = vpop.permute.xlu0 %2092
        %2094 = vrot.lane.b32.xlu0 %v1226, 104
        %v2095 = vpop.permute.xlu0 %2094
        %2096 = vrot.lane.b32.xlu0 %v1227, 104
        %v2097 = vpop.permute.xlu0 %2096
        %2098 = vrot.lane.b32.xlu0 %v1228, 104
        %v2099 = vpop.permute.xlu0 %2098
        %2100 = vrot.lane.b32.xlu0 %v1229, 104
        %v2101 = vpop.permute.xlu0 %2100
        %2102 = vrot.lane.b32.xlu0 %v1230, 104
        %v2103 = vpop.permute.xlu0 %2102
        %2104 = vrot.lane.b32.xlu0 %v1231, 104
        %v2105 = vpop.permute.xlu0 %2104
        %2106 = vrot.lane.b32.xlu0 %v1232, 104
        %v2107 = vpop.permute.xlu0 %2106
        %2108 = vrot.lane.b32.xlu0 %v1233, 104
        %v2109 = vpop.permute.xlu0 %2108
        %2110 = vrot.lane.b32.xlu0 %v1234, 104
        %v2111 = vpop.permute.xlu0 %2110
        %2112 = vrot.lane.b32.xlu0 %v1235, 104
        %v2113 = vpop.permute.xlu0 %2112
        %2114 = vrot.lane.b32.xlu0 %v1236, 104
        %v2115 = vpop.permute.xlu0 %2114
        %v2116 = vsel %vm1244, %v2083, 0
        %v2118 = vsel %vm1244, %v2085, 0
        %v2120 = vsel %vm1244, %v2087, 0
        %v2122 = vsel %vm1244, %v2089, 0
        %v2124 = vsel %vm1244, %v2091, 0
        %v2126 = vsel %vm1244, %v2093, 0
        %v2128 = vsel %vm1244, %v2095, 0
        %v2130 = vsel %vm1244, %v2097, 0
        %v2132 = vsel %vm1244, %v2099, 0
        %v2134 = vsel %vm1244, %v2101, 0
        %v2136 = vsel %vm1244, %v2103, 0
        %v2138 = vsel %vm1244, %v2105, 0
        %v2140 = vsel %vm1244, %v2107, 0
        %v2142 = vsel %vm1244, %v2109, 0
        %v2144 = vsel %vm1244, %v2111, 0
        %v2146 = vsel %vm1244, %v2113, 0
        %v2148 = vsel %vm1244, %v2115, 0
        %2150 = vmatprep.subr.mxu0 0.0
        %2151 = vmatpush1.xpose.msra.mxu0 %v2148
        %2152 = vmatprep.subr.mxu0 0.0
        %2153 = vmatpush1.xpose.msra.mxu0 %v2146
        %2154 = vmatprep.subr.mxu0 0.0
        %2155 = vmatpush1.xpose.msra.mxu0 %v2144
        %2156 = vmatprep.subr.mxu0 0.0
        %2157 = vmatpush1.xpose.msra.mxu0 %v2142
        %2158 = vmatprep.subr.mxu0 0.0
        %2159 = vmatpush1.xpose.msra.mxu0 %v2140
        %2160 = vmatprep.subr.mxu0 0.0
        %2161 = vmatpush1.xpose.msra.mxu0 %v2138
        %2162 = vmatprep.subr.mxu0 0.0
        %2163 = vmatpush1.xpose.msra.mxu0 %v2136
        %2164 = vmatprep.subr.mxu0 0.0
        %2165 = vmatpush1.xpose.msra.mxu0 %v2134
        %2166 = vmatprep.subr.mxu0 0.0
        %2167 = vmatpush1.xpose.msra.mxu0 %v2132
        %2168 = vmatprep.subr.mxu0 0.0
        %2169 = vmatpush1.xpose.msra.mxu0 %v2130
        %2170 = vmatprep.subr.mxu0 0.0
        %2171 = vmatpush1.xpose.msra.mxu0 %v2128
        %2172 = vmatprep.subr.mxu0 0.0
        %2173 = vmatpush1.xpose.msra.mxu0 %v2126
        %2174 = vmatprep.subr.mxu0 0.0
        %2175 = vmatpush1.xpose.msra.mxu0 %v2124
        %2176 = vmatprep.subr.mxu0 0.0
        %2177 = vmatpush1.xpose.msra.mxu0 %v2122
        %2178 = vmatprep.subr.mxu0 0.0
        %2179 = vmatpush1.xpose.msra.mxu0 %v2120
        %2180 = vmatprep.subr.mxu0 0.0
        %2181 = vmatpush1.xpose.msra.mxu0 %v2118
        %2182 = vmatprep.subr.mxu0 0.0
        %2183 = vmatpush2.xpose.msra.mxu0 0.0
        %2184 = vmatprep.subr.mxu0 0.0
        %2185 = vmatpush2.xpose.msra.mxu0 0.0
        %2186 = vmatprep.subr.mxu0 0.0
        %2187 = vmatpush2.xpose.msra.mxu0 0.0
        %2188 = vmatprep.subr.mxu0 0.0
        %2189 = vmatpush2.xpose.msra.mxu0 0.0
        %2190 = vmatprep.subr.mxu0 0.0
        %2191 = vmatpush2.xpose.msra.mxu0 0.0
        %2192 = vmatprep.subr.mxu0 0.0
        %2193 = vmatpush2.xpose.msra.mxu0 0.0
        %2194 = vmatprep.subr.mxu0 0.0
        %2195 = vmatpush2.xpose.msra.mxu0 0.0
        %2196 = vmatprep.subr.mxu0 0.0
        %2197 = vmatpush2.xpose.msra.mxu0 0.0
        %2198 = vmatprep.subr.mxu0 0.0
        %2199 = vmatpush2.xpose.msra.mxu0 0.0
        %2200 = vmatprep.subr.mxu0 0.0
        %2201 = vmatpush2.xpose.msra.mxu0 0.0
        %2202 = vmatprep.subr.mxu0 0.0
        %2203 = vmatpush2.xpose.msra.mxu0 0.0
        %2204 = vmatprep.subr.mxu0 0.0
        %2205 = vmatpush2.xpose.msra.mxu0 0.0
        %2206 = vmatprep.subr.mxu0 0.0
        %2207 = vmatpush2.xpose.msra.mxu0 0.0
        %2208 = vmatprep.subr.mxu0 0.0
        %2209 = vmatpush2.xpose.msra.mxu0 0.0
        %2210 = vmatprep.subr.mxu0 0.0
        %2211 = vmatpush2.xpose.msra.mxu0 0.0
        %2212 = vmatprep.subr.mxu0 0.0
        %2213 = vmatpush2.xpose.msra.mxu0 0.0
        %2214 = vmatprep.mubr.f32.mxu0 0.0
        %2215 = vmatmul.mubr.f32.gmra.mxu0 %v2116
        %v2216 = vpop.f32.mrf.mxu0
        %v2217 = vadd.f32 0.0, %v2216
        %v2218 = vpop.f32.mrf.mxu0
        %2219 = vdwg.mxu0
        %v2220 = vsel %vm1367, %v2217, -1e+30
        %s2221 = scalar_lea.vmem %s472, 24 [#allocation6]
        %2222 = vst [vmem:[%s2221] sm:$0x1f] %v2220
        %s2223 = scalar_lea.vmem [#allocation4], 24
        %v2224 = vld [vmem:[%s2223] sm:$0x1f]
        %v2225 = vsel %vm1371, %v2220, -inf
        %2226 = vmax.xlane.f32.xlu0 %v2225
        %v2227 = vpop.xlane.xlu0 %2226
        %v2228 = vmax.f32 %v2224, %v2227
        %v2229 = vsub.f32 %v2224, %v2228
        %v2230 = vmul.f32 %v2229, 1.442695
        %v2231 = vpow.pop %v2230
        %2233 = vset.pattern.permute.xlu0 0
        %2234 = vperm.xlu0 %2233, %v2228
        %v2235 = vpop.permute.xlu0 %2234
        %v2237 = vsub.f32 %v2220, %v2235
        %v2238 = vmul.f32 %v2237, 1.442695
        %v2239 = vpow.pop %v2238
        %s2240 = scalar_lea.vmem [#allocation5], 24
        %v2241 = vld [vmem:[%s2240] sm:$0x1f]
        %v2242 = vmul.f32 %v2231, %v2241
        %v2243 = vsel %vm1371, %v2239, 0.0
        %2244 = vadd.xlane.f32.xlu0 %v2243
        %v2245 = vpop.xlane.xlu0 %2244
        %v2246 = vadd.f32 %v2242, %v2245
        %2247 = vst.msk [vmem:[%s2240] sm:$0x1f] %vm1393, %v2246
        %2248 = vst.msk [vmem:[%s2223] sm:$0x1f] %vm1393, %v2228
        %s2249 = scalar_lea.vmem [#allocation3], 24
        %v2250 = vld [vmem:[%s2249] sm:$0x1f]
        %2252 = vset.pattern.permute.xlu0 0
        %2253 = vperm.xlu0 %2252, %v2231
        %v2254 = vpop.permute.xlu0 %2253
        %v2256 = vmul.f32 %v2254, %v2250
        %2257 = vrot.lane.b32.xlu0 %v1143, 104
        %v2258 = vpop.permute.xlu0 %2257
        %2259 = vrot.lane.b32.xlu0 %v1148, 104
        %v2260 = vpop.permute.xlu0 %2259
        %2261 = vrot.lane.b32.xlu0 %v1153, 104
        %v2262 = vpop.permute.xlu0 %2261
        %2263 = vrot.lane.b32.xlu0 %v1158, 104
        %v2264 = vpop.permute.xlu0 %2263
        %2265 = vrot.lane.b32.xlu0 %v1163, 104
        %v2266 = vpop.permute.xlu0 %2265
        %2267 = vrot.lane.b32.xlu0 %v1168, 104
        %v2268 = vpop.permute.xlu0 %2267
        %2269 = vrot.lane.b32.xlu0 %v1173, 104
        %v2270 = vpop.permute.xlu0 %2269
        %2271 = vrot.lane.b32.xlu0 %v1178, 104
        %v2272 = vpop.permute.xlu0 %2271
        %2273 = vrot.lane.b32.xlu0 %v1183, 104
        %v2274 = vpop.permute.xlu0 %2273
        %2275 = vrot.lane.b32.xlu0 %v1188, 104
        %v2276 = vpop.permute.xlu0 %2275
        %2277 = vrot.lane.b32.xlu0 %v1193, 104
        %v2278 = vpop.permute.xlu0 %2277
        %2279 = vrot.lane.b32.xlu0 %v1198, 104
        %v2280 = vpop.permute.xlu0 %2279
        %2281 = vrot.lane.b32.xlu0 %v1203, 104
        %v2282 = vpop.permute.xlu0 %2281
        %2283 = vrot.lane.b32.xlu0 %v1208, 104
        %v2284 = vpop.permute.xlu0 %2283
        %2285 = vrot.lane.b32.xlu0 %v1213, 104
        %v2286 = vpop.permute.xlu0 %2285
        %2287 = vrot.lane.b32.xlu0 %v1218, 104
        %v2288 = vpop.permute.xlu0 %2287
        %2305 = vmatprep.subr.mxu0 0.0
        %2306 = vmatpush1.msra.mxu0 %v2288
        %2307 = vmatprep.subr.mxu0 0.0
        %2308 = vmatpush1.msra.mxu0 %v2286
        %2309 = vmatprep.subr.mxu0 0.0
        %2310 = vmatpush1.msra.mxu0 %v2284
        %2311 = vmatprep.subr.mxu0 0.0
        %2312 = vmatpush1.msra.mxu0 %v2282
        %2313 = vmatprep.subr.mxu0 0.0
        %2314 = vmatpush1.msra.mxu0 %v2280
        %2315 = vmatprep.subr.mxu0 0.0
        %2316 = vmatpush1.msra.mxu0 %v2278
        %2317 = vmatprep.subr.mxu0 0.0
        %2318 = vmatpush1.msra.mxu0 %v2276
        %2319 = vmatprep.subr.mxu0 0.0
        %2320 = vmatpush1.msra.mxu0 %v2274
        %2321 = vmatprep.subr.mxu0 0.0
        %2322 = vmatpush1.msra.mxu0 %v2272
        %2323 = vmatprep.subr.mxu0 0.0
        %2324 = vmatpush1.msra.mxu0 %v2270
        %2325 = vmatprep.subr.mxu0 0.0
        %2326 = vmatpush1.msra.mxu0 %v2268
        %2327 = vmatprep.subr.mxu0 0.0
        %2328 = vmatpush1.msra.mxu0 %v2266
        %2329 = vmatprep.subr.mxu0 0.0
        %2330 = vmatpush1.msra.mxu0 %v2264
        %2331 = vmatprep.subr.mxu0 0.0
        %2332 = vmatpush1.msra.mxu0 %v2262
        %2333 = vmatprep.subr.mxu0 0.0
        %2334 = vmatpush1.msra.mxu0 %v2260
        %2335 = vmatprep.subr.mxu0 0.0
        %2336 = vmatpush1.msra.mxu0 %v2258
        %2337 = vmatprep.subr.mxu0 0.0
        %2338 = vmatpush2.msra.mxu0 0.0
        %2339 = vmatprep.subr.mxu0 0.0
        %2340 = vmatpush2.msra.mxu0 0.0
        %2341 = vmatprep.subr.mxu0 0.0
        %2342 = vmatpush2.msra.mxu0 0.0
        %2343 = vmatprep.subr.mxu0 0.0
        %2344 = vmatpush2.msra.mxu0 0.0
        %2345 = vmatprep.subr.mxu0 0.0
        %2346 = vmatpush2.msra.mxu0 0.0
        %2347 = vmatprep.subr.mxu0 0.0
        %2348 = vmatpush2.msra.mxu0 0.0
        %2349 = vmatprep.subr.mxu0 0.0
        %2350 = vmatpush2.msra.mxu0 0.0
        %2351 = vmatprep.subr.mxu0 0.0
        %2352 = vmatpush2.msra.mxu0 0.0
        %2353 = vmatprep.subr.mxu0 0.0
        %2354 = vmatpush2.msra.mxu0 0.0
        %2355 = vmatprep.subr.mxu0 0.0
        %2356 = vmatpush2.msra.mxu0 0.0
        %2357 = vmatprep.subr.mxu0 0.0
        %2358 = vmatpush2.msra.mxu0 0.0
        %2359 = vmatprep.subr.mxu0 0.0
        %2360 = vmatpush2.msra.mxu0 0.0
        %2361 = vmatprep.subr.mxu0 0.0
        %2362 = vmatpush2.msra.mxu0 0.0
        %2363 = vmatprep.subr.mxu0 0.0
        %2364 = vmatpush2.msra.mxu0 0.0
        %2365 = vmatprep.subr.mxu0 0.0
        %2366 = vmatpush2.msra.mxu0 0.0
        %2367 = vmatprep.subr.mxu0 0.0
        %2368 = vmatpush2.msra.mxu0 0.0
        %2369 = vmatprep.mubr.f32.mxu0 0.0
        %2370 = vmatmul.mubr.f32.gmra.mxu0 %v2239
        %v2371 = vpop.f32.mrf.mxu0
        %v2372 = vadd.f32 0.0, %v2371
        %v2373 = vpop.f32.mrf.mxu0
        %2374 = vdwg.mxu0
        %v2375 = vadd.f32 %v2256, %v2372
        %2376 = vst.msk [vmem:[%s2249] sm:$0x1f] %vm1474, %v2375
        %p2377 = scmp.eq.s32.totalorder %s27, 1
        // Predicated region
        $region73: #{encoder_layer_forward.2} parent=67 // pred_check
          %p2378 = pneg %p2377
        $region74: #{encoder_layer_forward.2} parent=67 // pred_check_branch
          %2380 = sbr.rel (%p2378) target = $region76
        $region75: #{encoder_layer_forward.2} parent=67 // pred_region
          %v2381 = vld [vmem:[#allocation3] sm:$0x1f]
          %v2382 = vld [vmem:[#allocation5] sm:$0x1f]
          %v2383 = vrcp.pop %v2382
          %2385 = vset.pattern.permute.xlu0 0
          %2386 = vperm.xlu0 %2385, %v2383
          %v2387 = vpop.permute.xlu0 %2386
          %v2389 = vmul.f32 %v2381, %v2387
          %v2390 = vld [vmem:[%s10] sm:$0xff]
          %v2391 = vld [vmem:[%s1643] sm:$0x1f]
          %v2392 = vld [vmem:[%s1634] sm:$0x1f]
          %v2393 = vrcp.pop %v2392
          %2395 = vset.pattern.permute.xlu0 0
          %2396 = vperm.xlu0 %2395, %v2393
          %v2397 = vpop.permute.xlu0 %2396
          %v2399 = vmul.f32 %v2391, %v2397
          %v2400 = vld [vmem:[%s10 + $0x8] sm:$0xff]
          %v2402 = vsel %vm1244, %v2399, 0
          %2404 = vmatprep.subr.mxu0 0.0
          %2405 = vmatpush1.msra.mxu0 0.0
          %2406 = vmatprep.subr.mxu0 0.0
          %2407 = vmatpush1.msra.mxu0 0.0
          %2408 = vmatprep.subr.mxu0 0.0
          %2409 = vmatpush1.msra.mxu0 0.0
          %2410 = vmatprep.subr.mxu0 0.0
          %2411 = vmatpush1.msra.mxu0 0.0
          %2412 = vmatprep.subr.mxu0 0.0
          %2413 = vmatpush1.msra.mxu0 0.0
          %2414 = vmatprep.subr.mxu0 0.0
          %2415 = vmatpush1.msra.mxu0 0.0
          %2416 = vmatprep.subr.mxu0 0.0
          %2417 = vmatpush1.msra.mxu0 0.0
          %2418 = vmatprep.subr.mxu0 0.0
          %2419 = vmatpush1.msra.mxu0 0.0
          %2420 = vmatprep.subr.mxu0 0.0
          %2421 = vmatpush1.msra.mxu0 0.0
          %2422 = vmatprep.subr.mxu0 0.0
          %2423 = vmatpush1.msra.mxu0 0.0
          %2424 = vmatprep.subr.mxu0 0.0
          %2425 = vmatpush1.msra.mxu0 0.0
          %2426 = vmatprep.subr.mxu0 0.0
          %2427 = vmatpush1.msra.mxu0 0.0
          %2428 = vmatprep.subr.mxu0 0.0
          %2429 = vmatpush1.msra.mxu0 0.0
          %2430 = vmatprep.subr.mxu0 0.0
          %2431 = vmatpush1.msra.mxu0 0.0
          %2432 = vmatprep.subr.mxu0 0.0
          %2433 = vmatpush1.msra.mxu0 0.0
          %2434 = vmatprep.subr.mxu0 0.0
          %2435 = vmatpush1.msra.mxu0 %v2400
          %2436 = vmatprep.subr.mxu0 0.0
          %2437 = vmatpush2.msra.mxu0 0.0
          %2438 = vmatprep.subr.mxu0 0.0
          %2439 = vmatpush2.msra.mxu0 0.0
          %2440 = vmatprep.subr.mxu0 0.0
          %2441 = vmatpush2.msra.mxu0 0.0
          %2442 = vmatprep.subr.mxu0 0.0
          %2443 = vmatpush2.msra.mxu0 0.0
          %2444 = vmatprep.subr.mxu0 0.0
          %2445 = vmatpush2.msra.mxu0 0.0
          %2446 = vmatprep.subr.mxu0 0.0
          %2447 = vmatpush2.msra.mxu0 0.0
          %2448 = vmatprep.subr.mxu0 0.0
          %2449 = vmatpush2.msra.mxu0 0.0
          %2450 = vmatprep.subr.mxu0 0.0
          %2451 = vmatpush2.msra.mxu0 0.0
          %2452 = vmatprep.subr.mxu0 0.0
          %2453 = vmatpush2.msra.mxu0 0.0
          %2454 = vmatprep.subr.mxu0 0.0
          %2455 = vmatpush2.msra.mxu0 0.0
          %2456 = vmatprep.subr.mxu0 0.0
          %2457 = vmatpush2.msra.mxu0 0.0
          %2458 = vmatprep.subr.mxu0 0.0
          %2459 = vmatpush2.msra.mxu0 0.0
          %2460 = vmatprep.subr.mxu0 0.0
          %2461 = vmatpush2.msra.mxu0 0.0
          %2462 = vmatprep.subr.mxu0 0.0
          %2463 = vmatpush2.msra.mxu0 0.0
          %2464 = vmatprep.subr.mxu0 0.0
          %2465 = vmatpush2.msra.mxu0 0.0
          %2466 = vmatprep.subr.mxu0 0.0
          %2467 = vmatpush2.msra.mxu0 0.0
          %2468 = vmatprep.mubr.f32.mxu0 0.0
          %2469 = vmatmul.mubr.f32.gmra.mxu0 %v2402
          %v2470 = vpop.f32.mrf.mxu0
          %v2471 = vadd.f32 0.0, %v2470
          %v2472 = vpop.f32.mrf.mxu0
          %2473 = vdwg.mxu0
          %v2475 = vsel %vm1244, %v2389, 0
          %2477 = vmatprep.subr.mxu0 0.0
          %2478 = vmatpush1.msra.mxu0 0.0
          %2479 = vmatprep.subr.mxu0 0.0
          %2480 = vmatpush1.msra.mxu0 0.0
          %2481 = vmatprep.subr.mxu0 0.0
          %2482 = vmatpush1.msra.mxu0 0.0
          %2483 = vmatprep.subr.mxu0 0.0
          %2484 = vmatpush1.msra.mxu0 0.0
          %2485 = vmatprep.subr.mxu0 0.0
          %2486 = vmatpush1.msra.mxu0 0.0
          %2487 = vmatprep.subr.mxu0 0.0
          %2488 = vmatpush1.msra.mxu0 0.0
          %2489 = vmatprep.subr.mxu0 0.0
          %2490 = vmatpush1.msra.mxu0 0.0
          %2491 = vmatprep.subr.mxu0 0.0
          %2492 = vmatpush1.msra.mxu0 0.0
          %2493 = vmatprep.subr.mxu0 0.0
          %2494 = vmatpush1.msra.mxu0 0.0
          %2495 = vmatprep.subr.mxu0 0.0
          %2496 = vmatpush1.msra.mxu0 0.0
          %2497 = vmatprep.subr.mxu0 0.0
          %2498 = vmatpush1.msra.mxu0 0.0
          %2499 = vmatprep.subr.mxu0 0.0
          %2500 = vmatpush1.msra.mxu0 0.0
          %2501 = vmatprep.subr.mxu0 0.0
          %2502 = vmatpush1.msra.mxu0 0.0
          %2503 = vmatprep.subr.mxu0 0.0
          %2504 = vmatpush1.msra.mxu0 0.0
          %2505 = vmatprep.subr.mxu0 0.0
          %2506 = vmatpush1.msra.mxu0 0.0
          %2507 = vmatprep.subr.mxu0 0.0
          %2508 = vmatpush1.msra.mxu0 %v2390
          %2509 = vmatprep.subr.mxu0 0.0
          %2510 = vmatpush2.msra.mxu0 0.0
          %2511 = vmatprep.subr.mxu0 0.0
          %2512 = vmatpush2.msra.mxu0 0.0
          %2513 = vmatprep.subr.mxu0 0.0
          %2514 = vmatpush2.msra.mxu0 0.0
          %2515 = vmatprep.subr.mxu0 0.0
          %2516 = vmatpush2.msra.mxu0 0.0
          %2517 = vmatprep.subr.mxu0 0.0
          %2518 = vmatpush2.msra.mxu0 0.0
          %2519 = vmatprep.subr.mxu0 0.0
          %2520 = vmatpush2.msra.mxu0 0.0
          %2521 = vmatprep.subr.mxu0 0.0
          %2522 = vmatpush2.msra.mxu0 0.0
          %2523 = vmatprep.subr.mxu0 0.0
          %2524 = vmatpush2.msra.mxu0 0.0
          %2525 = vmatprep.subr.mxu0 0.0
          %2526 = vmatpush2.msra.mxu0 0.0
          %2527 = vmatprep.subr.mxu0 0.0
          %2528 = vmatpush2.msra.mxu0 0.0
          %2529 = vmatprep.subr.mxu0 0.0
          %2530 = vmatpush2.msra.mxu0 0.0
          %2531 = vmatprep.subr.mxu0 0.0
          %2532 = vmatpush2.msra.mxu0 0.0
          %2533 = vmatprep.subr.mxu0 0.0
          %2534 = vmatpush2.msra.mxu0 0.0
          %2535 = vmatprep.subr.mxu0 0.0
          %2536 = vmatpush2.msra.mxu0 0.0
          %2537 = vmatprep.subr.mxu0 0.0
          %2538 = vmatpush2.msra.mxu0 0.0
          %2539 = vmatprep.subr.mxu0 0.0
          %2540 = vmatpush2.msra.mxu0 0.0
          %2541 = vmatprep.mubr.f32.mxu0 0.0
          %2542 = vmatmul.mubr.f32.gmra.mxu0 %v2475
          %v2543 = vpop.f32.mrf.mxu0
          %v2544 = vadd.f32 %v2471, %v2543
          %v2545 = vpop.f32.mrf.mxu0
          %2546 = vdwg.mxu0
          %v2547 = vld [vmem:[%s1954] sm:$0x1f]
          %v2548 = vld [vmem:[%s1945] sm:$0x1f]
          %v2549 = vrcp.pop %v2548
          %2551 = vset.pattern.permute.xlu0 0
          %2552 = vperm.xlu0 %2551, %v2549
          %v2553 = vpop.permute.xlu0 %2552
          %v2555 = vmul.f32 %v2547, %v2553
          %v2556 = vld [vmem:[%s10 + $0x10] sm:$0xff]
          %v2558 = vsel %vm1244, %v2555, 0
          %2560 = vmatprep.subr.mxu0 0.0
          %2561 = vmatpush1.msra.mxu0 0.0
          %2562 = vmatprep.subr.mxu0 0.0
          %2563 = vmatpush1.msra.mxu0 0.0
          %2564 = vmatprep.subr.mxu0 0.0
          %2565 = vmatpush1.msra.mxu0 0.0
          %2566 = vmatprep.subr.mxu0 0.0
          %2567 = vmatpush1.msra.mxu0 0.0
          %2568 = vmatprep.subr.mxu0 0.0
          %2569 = vmatpush1.msra.mxu0 0.0
          %2570 = vmatprep.subr.mxu0 0.0
          %2571 = vmatpush1.msra.mxu0 0.0
          %2572 = vmatprep.subr.mxu0 0.0
          %2573 = vmatpush1.msra.mxu0 0.0
          %2574 = vmatprep.subr.mxu0 0.0
          %2575 = vmatpush1.msra.mxu0 0.0
          %2576 = vmatprep.subr.mxu0 0.0
          %2577 = vmatpush1.msra.mxu0 0.0
          %2578 = vmatprep.subr.mxu0 0.0
          %2579 = vmatpush1.msra.mxu0 0.0
          %2580 = vmatprep.subr.mxu0 0.0
          %2581 = vmatpush1.msra.mxu0 0.0
          %2582 = vmatprep.subr.mxu0 0.0
          %2583 = vmatpush1.msra.mxu0 0.0
          %2584 = vmatprep.subr.mxu0 0.0
          %2585 = vmatpush1.msra.mxu0 0.0
          %2586 = vmatprep.subr.mxu0 0.0
          %2587 = vmatpush1.msra.mxu0 0.0
          %2588 = vmatprep.subr.mxu0 0.0
          %2589 = vmatpush1.msra.mxu0 0.0
          %2590 = vmatprep.subr.mxu0 0.0
          %2591 = vmatpush1.msra.mxu0 %v2556
          %2592 = vmatprep.subr.mxu0 0.0
          %2593 = vmatpush2.msra.mxu0 0.0
          %2594 = vmatprep.subr.mxu0 0.0
          %2595 = vmatpush2.msra.mxu0 0.0
          %2596 = vmatprep.subr.mxu0 0.0
          %2597 = vmatpush2.msra.mxu0 0.0
          %2598 = vmatprep.subr.mxu0 0.0
          %2599 = vmatpush2.msra.mxu0 0.0
          %2600 = vmatprep.subr.mxu0 0.0
          %2601 = vmatpush2.msra.mxu0 0.0
          %2602 = vmatprep.subr.mxu0 0.0
          %2603 = vmatpush2.msra.mxu0 0.0
          %2604 = vmatprep.subr.mxu0 0.0
          %2605 = vmatpush2.msra.mxu0 0.0
          %2606 = vmatprep.subr.mxu0 0.0
          %2607 = vmatpush2.msra.mxu0 0.0
          %2608 = vmatprep.subr.mxu0 0.0
          %2609 = vmatpush2.msra.mxu0 0.0
          %2610 = vmatprep.subr.mxu0 0.0
          %2611 = vmatpush2.msra.mxu0 0.0
          %2612 = vmatprep.subr.mxu0 0.0
          %2613 = vmatpush2.msra.mxu0 0.0
          %2614 = vmatprep.subr.mxu0 0.0
          %2615 = vmatpush2.msra.mxu0 0.0
          %2616 = vmatprep.subr.mxu0 0.0
          %2617 = vmatpush2.msra.mxu0 0.0
          %2618 = vmatprep.subr.mxu0 0.0
          %2619 = vmatpush2.msra.mxu0 0.0
          %2620 = vmatprep.subr.mxu0 0.0
          %2621 = vmatpush2.msra.mxu0 0.0
          %2622 = vmatprep.subr.mxu0 0.0
          %2623 = vmatpush2.msra.mxu0 0.0
          %2624 = vmatprep.mubr.f32.mxu0 0.0
          %2625 = vmatmul.mubr.f32.gmra.mxu0 %v2558
          %v2626 = vpop.f32.mrf.mxu0
          %v2627 = vadd.f32 0.0, %v2626
          %v2628 = vpop.f32.mrf.mxu0
          %2629 = vdwg.mxu0
          %v2630 = vadd.f32 %v2544, %v2627
          %v2631 = vld [vmem:[%s2249] sm:$0x1f]
          %v2632 = vld [vmem:[%s2240] sm:$0x1f]
          %v2633 = vrcp.pop %v2632
          %2635 = vset.pattern.permute.xlu0 0
          %2636 = vperm.xlu0 %2635, %v2633
          %v2637 = vpop.permute.xlu0 %2636
          %v2639 = vmul.f32 %v2631, %v2637
          %v2640 = vld [vmem:[%s10 + $0x18] sm:$0xff]
          %v2642 = vsel %vm1244, %v2639, 0
          %2644 = vmatprep.subr.mxu0 0.0
          %2645 = vmatpush1.msra.mxu0 0.0
          %2646 = vmatprep.subr.mxu0 0.0
          %2647 = vmatpush1.msra.mxu0 0.0
          %2648 = vmatprep.subr.mxu0 0.0
          %2649 = vmatpush1.msra.mxu0 0.0
          %2650 = vmatprep.subr.mxu0 0.0
          %2651 = vmatpush1.msra.mxu0 0.0
          %2652 = vmatprep.subr.mxu0 0.0
          %2653 = vmatpush1.msra.mxu0 0.0
          %2654 = vmatprep.subr.mxu0 0.0
          %2655 = vmatpush1.msra.mxu0 0.0
          %2656 = vmatprep.subr.mxu0 0.0
          %2657 = vmatpush1.msra.mxu0 0.0
          %2658 = vmatprep.subr.mxu0 0.0
          %2659 = vmatpush1.msra.mxu0 0.0
          %2660 = vmatprep.subr.mxu0 0.0
          %2661 = vmatpush1.msra.mxu0 0.0
          %2662 = vmatprep.subr.mxu0 0.0
          %2663 = vmatpush1.msra.mxu0 0.0
          %2664 = vmatprep.subr.mxu0 0.0
          %2665 = vmatpush1.msra.mxu0 0.0
          %2666 = vmatprep.subr.mxu0 0.0
          %2667 = vmatpush1.msra.mxu0 0.0
          %2668 = vmatprep.subr.mxu0 0.0
          %2669 = vmatpush1.msra.mxu0 0.0
          %2670 = vmatprep.subr.mxu0 0.0
          %2671 = vmatpush1.msra.mxu0 0.0
          %2672 = vmatprep.subr.mxu0 0.0
          %2673 = vmatpush1.msra.mxu0 0.0
          %2674 = vmatprep.subr.mxu0 0.0
          %2675 = vmatpush1.msra.mxu0 %v2640
          %2676 = vmatprep.subr.mxu0 0.0
          %2677 = vmatpush2.msra.mxu0 0.0
          %2678 = vmatprep.subr.mxu0 0.0
          %2679 = vmatpush2.msra.mxu0 0.0
          %2680 = vmatprep.subr.mxu0 0.0
          %2681 = vmatpush2.msra.mxu0 0.0
          %2682 = vmatprep.subr.mxu0 0.0
          %2683 = vmatpush2.msra.mxu0 0.0
          %2684 = vmatprep.subr.mxu0 0.0
          %2685 = vmatpush2.msra.mxu0 0.0
          %2686 = vmatprep.subr.mxu0 0.0
          %2687 = vmatpush2.msra.mxu0 0.0
          %2688 = vmatprep.subr.mxu0 0.0
          %2689 = vmatpush2.msra.mxu0 0.0
          %2690 = vmatprep.subr.mxu0 0.0
          %2691 = vmatpush2.msra.mxu0 0.0
          %2692 = vmatprep.subr.mxu0 0.0
          %2693 = vmatpush2.msra.mxu0 0.0
          %2694 = vmatprep.subr.mxu0 0.0
          %2695 = vmatpush2.msra.mxu0 0.0
          %2696 = vmatprep.subr.mxu0 0.0
          %2697 = vmatpush2.msra.mxu0 0.0
          %2698 = vmatprep.subr.mxu0 0.0
          %2699 = vmatpush2.msra.mxu0 0.0
          %2700 = vmatprep.subr.mxu0 0.0
          %2701 = vmatpush2.msra.mxu0 0.0
          %2702 = vmatprep.subr.mxu0 0.0
          %2703 = vmatpush2.msra.mxu0 0.0
          %2704 = vmatprep.subr.mxu0 0.0
          %2705 = vmatpush2.msra.mxu0 0.0
          %2706 = vmatprep.subr.mxu0 0.0
          %2707 = vmatpush2.msra.mxu0 0.0
          %2708 = vmatprep.mubr.f32.mxu0 0.0
          %2709 = vmatmul.mubr.f32.gmra.mxu0 %v2642
          %v2710 = vpop.f32.mrf.mxu0
          %v2711 = vadd.f32 0.0, %v2710
          %v2712 = vpop.f32.mrf.mxu0
          %2713 = vdwg.mxu0
          %v2714 = vadd.f32 %v2630, %v2711
          %v2715 = vld [vmem:[%s1] sm:$0x1f]
          %v2716 = vadd.f32 %v2715, %v2714
          %v2717 = vld [vmem:[%s11] sm:$0x1]
          %v2719 = vlaneseq
          %v2720 = vshrl.u32 %v2719, 7
          %v2721 = vsub.s32 0, %v2720
          %v2722 = vrot.slane %v2717, %v2721
          %v2724 = vadd.f32 %v2716, %v2722
          %vm2725 = vcmask 258048
          %2726 = vst.msk [vmem:[%s12] sm:$0x1f] %vm2725, %v2724
          %v2727 = vld [vmem:[#allocation4] sm:$0x1f]
          %v2728 = vld [vmem:[#allocation4 + $0x8] sm:$0x1f]
          %v2729 = vld [vmem:[#allocation4 + $0x10] sm:$0x1f]
          %v2730 = vld [vmem:[#allocation4 + $0x18] sm:$0x1f]
          %2731 = vst.msk [vmem:[%s14] sm:$0x1f] %vm1393, %v2727
          %2732 = vst.msk [vmem:[%s14 + $0x8] sm:$0x1f] %vm1393, %v2728
          %2733 = vst.msk [vmem:[%s14 + $0x10] sm:$0x1f] %vm1393, %v2729
          %2734 = vst.msk [vmem:[%s14 + $0x18] sm:$0x1f] %vm1393, %v2730
          %v2735 = vld [vmem:[#allocation5] sm:$0x1f]
          %v2736 = vld [vmem:[#allocation5 + $0x8] sm:$0x1f]
          %v2737 = vld [vmem:[#allocation5 + $0x10] sm:$0x1f]
          %v2738 = vld [vmem:[#allocation5 + $0x18] sm:$0x1f]
          %2739 = vst.msk [vmem:[%s15] sm:$0x1f] %vm1393, %v2735
          %2740 = vst.msk [vmem:[%s15 + $0x8] sm:$0x1f] %vm1393, %v2736
          %2741 = vst.msk [vmem:[%s15 + $0x10] sm:$0x1f] %vm1393, %v2737
          %2742 = vst.msk [vmem:[%s15 + $0x18] sm:$0x1f] %vm1393, %v2738
        $region76: #{encoder_layer_forward.2} parent=67 // pred_fallthru
          _
        %s2743 = sand.u32 %s313, 1
        %s2744 = sand.u32 %s313, 1
        %s2745 = smul.addr %s2744, 32
        %s2746 = scalar_lea.vmem [#allocation6], %s2745
        // Predicated region
        $region77: #{encoder_layer_forward.2} parent=67 // pred_check
          %p2747 = pneg %p297
        $region78: #{encoder_layer_forward.2} parent=67 // pred_check_branch
          %2749 = sbr.rel (%p2747) target = $region80
        $region79: #{encoder_layer_forward.2} parent=67 // pred_region
          _
        $region80: #{encoder_layer_forward.2} parent=67 // pred_fallthru
          _
        // Predicated region
        $region81: #{encoder_layer_forward.2} parent=67 // pred_check
          %p2750 = pneg %p323
        $region82: #{encoder_layer_forward.2} parent=67 // pred_check_branch
          %2752 = sbr.rel (%p2750) target = $region84
        $region83: #{encoder_layer_forward.2} parent=67 // pred_region
          %s2753 = smul.addr %s27, 8
          %s2754 = scalar_lea.vmem %s13, %s2753
          // Predicated region
          $region85: #{encoder_layer_forward.2} parent=83 // pred_check
            _
          $region86: #{encoder_layer_forward.2} parent=83 // pred_check_branch
            %2756 = sbr.rel (0) target = $region88
          $region87: #{encoder_layer_forward.2} parent=83 // pred_region
            // Predicated region
            $region89: #{encoder_layer_forward.2} parent=87 // pred_check
              _
            $region90: #{encoder_layer_forward.2} parent=87 // pred_check_branch
              %2758 = sbr.rel (0) target = $region92
            $region91: #{encoder_layer_forward.2} parent=87 // pred_region
              // Predicated region
              $region104: #{encoder_layer_forward.2} parent=91 // pred_check
                _
              $region105: #{encoder_layer_forward.2} parent=91 // pred_check_branch
                %2780 = sbr.rel (0) target = $region107
              $region106: #{encoder_layer_forward.2} parent=91 // pred_region
                loop: start=0, step=1, limit=1
                $region108: #{encoder_layer_forward.2} parent=106 // loop_pre_header
                  _
                $region109: #{encoder_layer_forward.2} parent=106 // loop_header
                  %s2782 = sphi 0, %s2786
                  %p2783 = scmp.ge.s32.totalorder %s2782, 1
                  %s2787 = sphi %s2746, %s2746
                  %s2788 = sphi %s2754, %s2754
                $region110: #{encoder_layer_forward.2} parent=106 // loop_header_branch
                  %2785 = sbr.rel (%p2783) target = $region114
                $region111: #{encoder_layer_forward.2} parent=106 // loop_body
                  %v2789 = vld [vmem:[%s2787] sm:$0xff]
                  %2790 = vst [vmem:[%s2788] sm:$0xff] %v2789
                  %v2791 = vld [vmem:[%s2787 + $0x8] sm:$0xff]
                  %2792 = vst [vmem:[%s2788 + $0x10] sm:$0xff] %v2791
                  %v2793 = vld [vmem:[%s2787 + $0x10] sm:$0xff]
                  %2794 = vst [vmem:[%s2788 + $0x20] sm:$0xff] %v2793
                  %v2795 = vld [vmem:[%s2787 + $0x18] sm:$0xff]
                  %2796 = vst [vmem:[%s2788 + $0x30] sm:$0xff] %v2795
                $region112: #{encoder_layer_forward.2} parent=106 // loop_footer
                  %s2786 = sadd.s32 1, %s2782
                $region113: #{encoder_layer_forward.2} parent=106 // loop_footer_branch
                  %2781 = sbr.rel target = $region109
                $region114: #{encoder_layer_forward.2} parent=106 // loop_exit
                  _
              $region107: #{encoder_layer_forward.2} parent=91 // pred_fallthru
                _
              // Predicated region
              $region115: #{encoder_layer_forward.2} parent=91 // pred_check
                _
              $region116: #{encoder_layer_forward.2} parent=91 // pred_check_branch
                %2798 = sbr.rel target = $region118
              $region117: #{encoder_layer_forward.2} parent=91 // pred_region
                _
              $region118: #{encoder_layer_forward.2} parent=91 // pred_fallthru
                _
            $region92: #{encoder_layer_forward.2} parent=87 // pred_fallthru
              _
            // Predicated region
            $region93: #{encoder_layer_forward.2} parent=87 // pred_check
              _
            $region94: #{encoder_layer_forward.2} parent=87 // pred_check_branch
              %2760 = sbr.rel target = $region96
            $region95: #{encoder_layer_forward.2} parent=87 // pred_region
              %s2762 = ssub.s32 256, 1
              loop: start=0, step=1, limit=1
              $region97: #{encoder_layer_forward.2} parent=95 // loop_pre_header
                _
              $region98: #{encoder_layer_forward.2} parent=95 // loop_header
                %s2764 = sphi 0, %s2768
                %p2765 = scmp.ge.s32.totalorder %s2764, 1
                %s2769 = sphi %s2746, %s2746
                %s2770 = sphi %s2754, %s2754
              $region99: #{encoder_layer_forward.2} parent=95 // loop_header_branch
                %2767 = sbr.rel (%p2765) target = $region103
              $region100: #{encoder_layer_forward.2} parent=95 // loop_body
                %v2771 = vld [vmem:[%s2769] sm:%s2762]
                %2772 = vst [vmem:[%s2770] sm:%s2762] %v2771
                %v2773 = vld [vmem:[%s2769 + $0x8] sm:%s2762]
                %2774 = vst [vmem:[%s2770 + $0x10] sm:%s2762] %v2773
                %v2775 = vld [vmem:[%s2769 + $0x10] sm:%s2762]
                %2776 = vst [vmem:[%s2770 + $0x20] sm:%s2762] %v2775
                %v2777 = vld [vmem:[%s2769 + $0x18] sm:%s2762]
                %2778 = vst [vmem:[%s2770 + $0x30] sm:%s2762] %v2777
              $region101: #{encoder_layer_forward.2} parent=95 // loop_footer
                %s2768 = sadd.s32 1, %s2764
              $region102: #{encoder_layer_forward.2} parent=95 // loop_footer_branch
                %2763 = sbr.rel target = $region98
              $region103: #{encoder_layer_forward.2} parent=95 // loop_exit
                _
            $region96: #{encoder_layer_forward.2} parent=87 // pred_fallthru
              _
          $region88: #{encoder_layer_forward.2} parent=83 // pred_fallthru
            _
          %2799 = vnop
        $region84: #{encoder_layer_forward.2} parent=67 // pred_fallthru
          _
        // Predicated region
        $region119: #{encoder_layer_forward.2} parent=67 // pred_check
          %p2800 = pneg %p344
        $region120: #{encoder_layer_forward.2} parent=67 // pred_check_branch
          %2802 = sbr.rel (%p2800) target = $region122
        $region121: #{encoder_layer_forward.2} parent=67 // pred_region
          _
        $region122: #{encoder_layer_forward.2} parent=67 // pred_fallthru
          _
        // Predicated region
        $region123: #{encoder_layer_forward.2} parent=67 // pred_check
          %p2803 = pneg %p365
        $region124: #{encoder_layer_forward.2} parent=67 // pred_check_branch
          %2805 = sbr.rel (%p2803) target = $region126
        $region125: #{encoder_layer_forward.2} parent=67 // pred_region
          _
        $region126: #{encoder_layer_forward.2} parent=67 // pred_fallthru
          _
        // Predicated region
        $region127: #{encoder_layer_forward.2} parent=67 // pred_check
          %p2806 = pneg %p297
        $region128: #{encoder_layer_forward.2} parent=67 // pred_check_branch
          %2808 = sbr.rel (%p2806) target = $region130
        $region129: #{encoder_layer_forward.2} parent=67 // pred_region
          _
        $region130: #{encoder_layer_forward.2} parent=67 // pred_fallthru
          _
        // Predicated region
        $region131: #{encoder_layer_forward.2} parent=67 // pred_check
          %p2809 = pneg %p344
        $region132: #{encoder_layer_forward.2} parent=67 // pred_check_branch
          %2811 = sbr.rel (%p2809) target = $region134
        $region133: #{encoder_layer_forward.2} parent=67 // pred_region
          _
        $region134: #{encoder_layer_forward.2} parent=67 // pred_fallthru
          _
        // Predicated region
        $region135: #{encoder_layer_forward.2} parent=67 // pred_check
          %p2812 = pneg %p365
        $region136: #{encoder_layer_forward.2} parent=67 // pred_check_branch
          %2814 = sbr.rel (%p2812) target = $region138
        $region137: #{encoder_layer_forward.2} parent=67 // pred_region
          _
        $region138: #{encoder_layer_forward.2} parent=67 // pred_fallthru
          _
      $region68: #{encoder_layer_forward.2} parent=5 // pred_fallthru
        _
      %p2815 = scmp.le.s32.totalorder 2, %s22
      // Predicated region
      $region139: #{encoder_layer_forward.2} parent=5 // pred_check
        %p2816 = pneg %p2815
      $region140: #{encoder_layer_forward.2} parent=5 // pred_check_branch
        %2818 = sbr.rel (%p2816) target = $region142
      $region141: #{encoder_layer_forward.2} parent=5 // pred_region
        %s2819 = ssub.s32 %s22, 2
        // Predicated region
        $region143: #{encoder_layer_forward.2} parent=141 // pred_check
          %p2820 = pneg %p329
        $region144: #{encoder_layer_forward.2} parent=141 // pred_check_branch
          %2822 = sbr.rel (%p2820) target = $region146
        $region145: #{encoder_layer_forward.2} parent=141 // pred_region
          %s2823 = sand.u32 %s314, 1
          %s2824 = sand.u32 %s314, 1
          %s2825 = smul.addr %s2824, 32
          %s2826 = scalar_lea.vmem [#allocation6], %s2825
        $region146: #{encoder_layer_forward.2} parent=141 // pred_fallthru
          _
      $region142: #{encoder_layer_forward.2} parent=5 // pred_fallthru
        _
    $region6: #{encoder_layer_forward.2} parent=1 // loop_footer
      %s26 = sadd.s32 1, %s22
    $region7: #{encoder_layer_forward.2} parent=1 // loop_footer_branch
      %21 = sbr.rel target = $region3
    $region8: #{encoder_layer_forward.2} parent=1 // loop_exit
      _

</llo_original>
